<compile_context>
chip_gen: v6e
topology: v6e:2x2x1
jax: 0.10.0
libtpu: 0.0.40
codegen_flags: <defaults>
</compile_context>

<pallas_src>
import functools

import jax
import jax.numpy as jnp
from jax.experimental import pallas as pl
from jax.experimental.pallas import tpu as pltpu

LEAK = 0.1


def _round_up(n, m):
    return ((n + m - 1) // m) * m


def _vmem_limit_bytes():
    phys = 128 * 1024 * 1024
    try:
        info = pltpu.get_tpu_info()
        phys = int(getattr(info, "vmem_capacity_bytes", phys))
    except Exception:
        pass
    # ~3/4 of physical, capped: 48 MiB on v7x (64 MiB phys), ~96-100 MiB on v5e/v6e.
    return min(int(phys * 3 // 4), 100 * 1024 * 1024)


def _pick_tile_rows(H, W, C, pad, vmem_limit):
    """Largest row-tile T (dividing H) whose (C, T*W) f32 block fits the budget."""
    max_lanes = max(vmem_limit // 12 // (C * 4), 128)
    if H * W <= max_lanes:
        return H
    best = None
    for d in range(1, H):
        if H % d:
            continue
        if d * W > max_lanes:
            break
        if (d * W) % 128:           # keep lane-dense, unmasked stores
            continue
        if d % max(pad, 1):
            continue
        best = d
    if best is None:
        # TODO(synk): no suitable row-tile divides H (e.g. prime H with tiny W);
        # fall back to whole-image blocks, which may exceed VMEM for huge maps.
        return H
    return best


def _pick_halo_rows(T, W, pad):
    """Smallest divisor of T with >= pad rows whose lane width satisfies BlockSpec rules."""
    for d in range(1, T + 1):
        if T % d:
            continue
        if d < max(pad, 1):
            continue
        if (d * W) % 128 == 0 or d == T:
            return d
    return T


# -----------------------------------------------------------------------------
# Fused kernel: tap-generator MLP + depthwise conv + LeakyReLU + sigmoid gate
#               + residual.  Grid = (B, n_row_tiles), both axes parallel.
# -----------------------------------------------------------------------------
def rda_main_kernel(x_ref, prev_ref, next_ref, deg_ref, w1t_ref, w2p_ref,
                    wconv_ref, bias_ref, out_ref, ext_ref, *, H, W, C, K, T, HR):
    pad = (K - 1) // 2
    TW = T * W
    pW = pad * W
    row0 = pl.program_id(1) * T                      # first global row of this tile

    x = x_ref[0].astype(jnp.float32)                 # (C, TW), loaded once per step

    # ---- fused tap-generator MLP (MXU; otherwise idle). taps land on sublanes. ----
    deg_col = deg_ref[0]                             # (64, 1) f32
    deg_b = jnp.broadcast_to(deg_col, (64, 128))     # MXU-native N; columns identical
    h = jnp.dot(w1t_ref[...], deg_b, preferred_element_type=jnp.float32)     # (64, 128)
    h = jnp.maximum(h, LEAK * h)
    taps = jnp.dot(w2p_ref[...], h, preferred_element_type=jnp.float32)      # (K*K*C, 128)
    taps = taps[:, 0:1]                              # (K*K*C, 1); row t*C + c = tap t, chan c

    # ---- extended tile: [prev pad rows | tile | next pad rows], OOB rows zeroed ----
    if pad > 0:
        prev = prev_ref[0, :, (HR - pad) * W:].astype(jnp.float32)   # last pad rows
        nxt = next_ref[0, :, :pW].astype(jnp.float32)                # first pad rows
        prev = jnp.where(row0 == 0, 0.0, prev)                       # above image top
        nxt = jnp.where(row0 + T >= H, 0.0, nxt)                     # below image bottom
        ext_ref[:, :pW] = prev
        ext_ref[:, pW:pW + TW] = x
        ext_ref[:, pW + TW:pW + TW + pW] = nxt
        x_ext = ext_ref[...]                          # (C, Lpad); tail lanes are masked
        Lroll = ext_ref.shape[1]
    else:
        x_ext = x
        Lroll = TW

    # ---- column-boundary masks (row boundaries are handled by the zeroed halo) ----
    col_ok = {}
    if K > 1:
        col = jax.lax.broadcasted_iota(jnp.int32, (1, TW), 1) % W
        for dw in range(K):
            d_w = dw - pad
            if d_w < 0:
                col_ok[d_w] = col >= -d_w
            elif d_w > 0:
                col_ok[d_w] = col < W - d_w

    # ---- depthwise KxK conv: centre tap initialises the accumulator ----
    center = pad * K + pad
    acc = x * taps[center * C:(center + 1) * C]       # (C, TW), per-channel tap bcast
    for dh in range(K):
        for dw in range(K):
            if dh == pad and dw == pad:
                continue
            s = dh * W + dw - pad                     # flat source offset in x_ext
            shift = (-s) % Lroll
            shifted = x_ext if shift == 0 else pltpu.roll(x_ext, shift, axis=1)
            shifted = shifted[:, :TW]
            d_w = dw - pad
            if d_w in col_ok:
                shifted = jnp.where(col_ok[d_w], shifted, 0.0)
            t = dh * K + dw
            acc = acc + shifted * taps[t * C:(t + 1) * C]

    acc = jnp.maximum(acc, LEAK * acc)                # LeakyReLU(0.1)

    # ---- 1x1 conv gate: VPU multiply + sublane reduce, SMEM bias, EUP sigmoid ----
    m = jnp.sum(x * wconv_ref[...], axis=0, keepdims=True) + bias_ref[0, 0]   # (1, TW)
    m = jax.nn.sigmoid(m)

    out_ref[0] = (acc * m + x).astype(out_ref.dtype)  # lane-dense store


# -----------------------------------------------------------------------------
# Wrapper: only free reshapes / tiny weight rearrangements at the boundary.
# -----------------------------------------------------------------------------
def rda_conv_forward(x_nchw, deg, w1, w2, wconv, bconv, kernel_size=3, tile_rows=None):
    B, C, H, W = x_nchw.shape
    K = int(kernel_size)
    assert K % 2 == 1, "padding=(K-1)//2 keeps spatial size only for odd kernel_size"
    assert C == 64, "RDA_conv requires channels_in == 64 (degradation rep is Bx64)."
    assert deg.shape == (B, 64)
    pad = (K - 1) // 2

    vmem_limit = _vmem_limit_bytes()

    if tile_rows is None:
        T = _pick_tile_rows(H, W, C, pad, vmem_limit)
    else:
        T = int(tile_rows)
    assert H % T == 0, "tile rows must divide H"
    assert T == H or (T * W) % 128 == 0, "row tiles must be lane-dense (T*W % 128 == 0)"
    assert T >= pad
    n_tiles = H // T

    HR = _pick_halo_rows(T, W, pad)                 # halo block row count (>= pad)
    assert HR >= max(pad, 1)
    hpt = T // HR                                   # halo blocks per row-tile
    last_hb = H // HR - 1

    # --- prepare inputs (contiguous reshapes are free; weight permutes are tiny) ---
    x_flat = x_nchw.reshape(B, C, H * W)
    deg3 = deg.reshape(B, 64, 1).astype(jnp.float32)
    w1t = jnp.asarray(w1, jnp.float32).T                                   # (64, 64)
    # w2p[t*C + c, j] = w2[j, c*K*K + t]  -> taps come out channel-on-sublanes
    w2p = (jnp.asarray(w2, jnp.float32)
           .reshape(64, C, K * K).transpose(2, 1, 0).reshape(K * K * C, 64))
    wconv_col = wconv.reshape(C, 1).astype(jnp.float32)
    bias = bconv.reshape(1, 1).astype(jnp.float32)

    def x_map(b, t):
        return (b, 0, t)

    def prev_map(b, t):
        return (b, 0, jnp.maximum(t * hpt - 1, 0))

    def next_map(b, t):
        return (b, 0, jnp.minimum((t + 1) * hpt, last_hb))

    ext_lanes = _round_up(T * W + 2 * pad * W, 128)   # roll-friendly extended width

    out_flat = pl.pallas_call(
        functools.partial(rda_main_kernel, H=H, W=W, C=C, K=K, T=T, HR=HR),
        grid=(B, n_tiles),
        in_specs=[
            pl.BlockSpec((1, C, T * W), x_map),                 # main row tile
            pl.BlockSpec((1, C, HR * W), prev_map),             # halo rows above
            pl.BlockSpec((1, C, HR * W), next_map),             # halo rows below
            pl.BlockSpec((1, 64, 1), lambda b, t: (b, 0, 0)),   # degradation rep column
            pl.BlockSpec((64, 64), lambda b, t: (0, 0)),        # w1^T (resident)
            pl.BlockSpec((K * K * C, 64), lambda b, t: (0, 0)), # rearranged w2 (resident)
            pl.BlockSpec((C, 1), lambda b, t: (0, 0)),          # 1x1 conv weight
            pl.BlockSpec(memory_space=pltpu.MemorySpace.SMEM),  # scalar bias
        ],
        out_specs=pl.BlockSpec((1, C, T * W), x_map),
        out_shape=jax.ShapeDtypeStruct((B, C, H * W), x_nchw.dtype),
        scratch_shapes=[pltpu.VMEM((C, ext_lanes), jnp.float32)],
        compiler_params=pltpu.CompilerParams(
            dimension_semantics=("parallel", "parallel"),
            vmem_limit_bytes=vmem_limit,
        ),
    )(x_flat, x_flat, x_flat, deg3, w1t, w2p, wconv_col, bias)

    return out_flat.reshape(B, C, H, W)


# -----------------------------------------------------------------------------
# Pure-JAX reference (mirrors the PyTorch forward) for correctness checking.
# -----------------------------------------------------------------------------
def ref_forward(x_nchw, deg, w1, w2, wconv, bconv, K):
    B, C, H, W = x_nchw.shape
    pad = (K - 1) // 2
    h = deg @ w1
    h = jnp.where(h > 0, h, LEAK * h)
    ker = (h @ w2).reshape(B * C, 1, K, K)
    xg = x_nchw.reshape(1, B * C, H, W)
    out = jax.lax.conv_general_dilated(
        xg, ker, window_strides=(1, 1), padding=[(pad, pad), (pad, pad)],
        dimension_numbers=('NCHW', 'OIHW', 'NCHW'),
        feature_group_count=B * C)
    out = jnp.where(out > 0, out, LEAK * out).reshape(B, C, H, W)
    m = jnp.einsum('bchw,c->bhw', x_nchw, wconv.reshape(C)) + bconv[0]
    m = jax.nn.sigmoid(m)[:, None, :, :]
    return out * m + x_nchw


if __name__ == "__main__":
    B, C, H, W = 2, 64, 16, 16          # channels_in must be 64 (degradation rep is Bx64)
    K = 3                               # kernel_size

    key = jax.random.PRNGKey(0)
    k_x, k_d, k_w1, k_w2, k_wc, k_bc = jax.random.split(key, 6)

    x = jax.random.normal(k_x, (B, C, H, W), jnp.float32)
    deg = jax.random.normal(k_d, (B, 64), jnp.float32)

    # Deterministic synthetic parameters (shapes per the module's __init__).
    w1 = jax.random.normal(k_w1, (64, 64), jnp.float32) * 0.1            # Linear(64,64).weight.T
    w2 = jax.random.normal(k_w2, (64, 64 * K * K), jnp.float32) * 0.1    # Linear(64,64*k*k).weight.T
    wconv = jax.random.normal(k_wc, (1, C, 1, 1), jnp.float32) * 0.1     # 1x1 conv weight
    bconv = jax.random.normal(k_bc, (1,), jnp.float32) * 0.1             # 1x1 conv bias

    ref = jax.block_until_ready(ref_forward(x, deg, w1, w2, wconv, bconv, K))

    # Auto tile selection (whole image per grid step at this size).
    out = jax.block_until_ready(rda_conv_forward(x, deg, w1, w2, wconv, bconv, K))
    assert out.shape == (B, C, H, W)
    assert jnp.allclose(out, ref, rtol=1e-2, atol=1e-2), float(jnp.max(jnp.abs(out - ref)))

    # Forced spatial tiling (exercises the multi-tile halo path used for large maps / v7x).
    out_t = jax.block_until_ready(
        rda_conv_forward(x, deg, w1, w2, wconv, bconv, K, tile_rows=8))
    assert jnp.allclose(out_t, ref, rtol=1e-2, atol=1e-2), float(jnp.max(jnp.abs(out_t - ref)))

    print("KERNEL_OK")
</pallas_src>

<mosaic_0001>
module attributes {stable_mosaic.version = 11 : i64} {
  func.func @rda_main_kernel(%arg0: i32, %arg1: i32, %arg2: memref<1x64x256xf32, #tpu.memory_space<vmem>>, %arg3: memref<1x64x128xf32, #tpu.memory_space<vmem>>, %arg4: memref<1x64x128xf32, #tpu.memory_space<vmem>>, %arg5: memref<1x64x1xf32, #tpu.memory_space<vmem>>, %arg6: memref<64x64xf32, #tpu.memory_space<vmem>>, %arg7: memref<576x64xf32, #tpu.memory_space<vmem>>, %arg8: memref<64x1xf32, #tpu.memory_space<vmem>>, %arg9: memref<1x1xf32, #tpu.memory_space<smem>>, %arg10: memref<1x64x256xf32, #tpu.memory_space<vmem>>, %arg11: memref<64x384xf32, #tpu.memory_space<vmem>>) attributes {dimension_semantics = [#tpu.dimension_semantics<parallel>, #tpu.dimension_semantics<parallel>], iteration_bounds = array<i64: 2, 1>, scalar_prefetch = 0 : i64, scratch_operands = 1 : i64, tpu.core_type = #tpu.core_type<tc>, window_params = [{transform_indices = @transform_0, window_bounds = array<i64: 1, 64, 256>}, {transform_indices = @transform_1, window_bounds = array<i64: 1, 64, 128>}, {transform_indices = @transform_2, window_bounds = array<i64: 1, 64, 128>}, {transform_indices = @transform_3, window_bounds = array<i64: 1, 64, 1>}, {pipeline_mode = #tpu.pipeline_mode<synchronous>, transform_indices = @transform_4, window_bounds = array<i64: 64, 64>}, {pipeline_mode = #tpu.pipeline_mode<synchronous>, transform_indices = @transform_5, window_bounds = array<i64: 576, 64>}, {pipeline_mode = #tpu.pipeline_mode<synchronous>, transform_indices = @transform_6, window_bounds = array<i64: 64, 1>}, {transform_indices = @transform_7, window_bounds = array<i64: 1, 1>}, {transform_indices = @transform_8, window_bounds = array<i64: 1, 64, 256>}]} {
    %c16_i32 = arith.constant 16 : i32
    %0 = arith.muli %arg1, %c16_i32 : i32
    %c0 = arith.constant 0 : index
    %c0_0 = arith.constant 0 : index
    %c0_1 = arith.constant 0 : index
    %1 = vector.load %arg2[%c0, %c0_0, %c0_1] : memref<1x64x256xf32, #tpu.memory_space<vmem>>, vector<1x64x256xf32>
    %2 = vector.shape_cast %1 : vector<1x64x256xf32> to vector<64x256xf32>
    %c0_2 = arith.constant 0 : index
    %c0_3 = arith.constant 0 : index
    %c0_4 = arith.constant 0 : index
    %3 = vector.load %arg5[%c0_2, %c0_3, %c0_4] : memref<1x64x1xf32, #tpu.memory_space<vmem>>, vector<1x64x1xf32>
    %4 = vector.shape_cast %3 : vector<1x64x1xf32> to vector<64x1xf32>
    %5 = vector.shape_cast %4 : vector<64x1xf32> to vector<64x1xf32>
    %6 = vector.broadcast %5 : vector<64x1xf32> to vector<64x128xf32>
    %c0_5 = arith.constant 0 : index
    %c0_6 = arith.constant 0 : index
    %7 = vector.load %arg6[%c0_5, %c0_6] : memref<64x64xf32, #tpu.memory_space<vmem>>, vector<64x64xf32>
    %cst = arith.constant dense<0.000000e+00> : vector<64x128xf32>
    %8 = tpu.matmul %7, %6, %cst {dimension_numbers = #tpu.dot_dimension_numbers<[1], [0], [0], [1], [0, 0, 1, 1], [], []>} : vector<64x64xf32>, vector<64x128xf32>, vector<64x128xf32> -> vector<64x128xf32>
    %cst_7 = arith.constant 1.000000e-01 : f32
    %9 = vector.broadcast %cst_7 : f32 to vector<64x128xf32>
    %10 = arith.mulf %9, %8 : vector<64x128xf32>
    %11 = arith.maximumf %8, %10 : vector<64x128xf32>
    %c0_8 = arith.constant 0 : index
    %c0_9 = arith.constant 0 : index
    %12 = vector.load %arg7[%c0_8, %c0_9] : memref<576x64xf32, #tpu.memory_space<vmem>>, vector<576x64xf32>
    %cst_10 = arith.constant dense<0.000000e+00> : vector<576x128xf32>
    %13 = tpu.matmul %12, %11, %cst_10 {dimension_numbers = #tpu.dot_dimension_numbers<[1], [0], [0], [1], [0, 0, 1, 1], [], []>} : vector<576x64xf32>, vector<64x128xf32>, vector<576x128xf32> -> vector<576x128xf32>
    %14 = vector.extract_strided_slice %13 {offsets = [0, 0], sizes = [576, 1], strides = [1, 1]} : vector<576x128xf32> to vector<576x1xf32>
    %c0_11 = arith.constant 0 : index
    %c0_12 = arith.constant 0 : index
    %c112 = arith.constant 112 : index
    %15 = vector.load %arg3[%c0_11, %c0_12, %c112] : memref<1x64x128xf32, #tpu.memory_space<vmem>>, vector<1x64x16xf32>
    %16 = vector.shape_cast %15 : vector<1x64x16xf32> to vector<64x16xf32>
    %c0_13 = arith.constant 0 : index
    %c0_14 = arith.constant 0 : index
    %c0_15 = arith.constant 0 : index
    %17 = vector.load %arg4[%c0_13, %c0_14, %c0_15] : memref<1x64x128xf32, #tpu.memory_space<vmem>>, vector<1x64x16xf32>
    %18 = vector.shape_cast %17 : vector<1x64x16xf32> to vector<64x16xf32>
    %c0_i32 = arith.constant 0 : i32
    %19 = arith.cmpi eq, %0, %c0_i32 : i32
    %cst_16 = arith.constant 0.000000e+00 : f32
    %20 = vector.broadcast %cst_16 : f32 to vector<64x16xf32>
    %21 = arith.select %19, %20, %16 : vector<64x16xf32>
    %c16_i32_17 = arith.constant 16 : i32
    %22 = arith.addi %0, %c16_i32_17 : i32
    %c16_i32_18 = arith.constant 16 : i32
    %23 = arith.cmpi sge, %22, %c16_i32_18 : i32
    %cst_19 = arith.constant 0.000000e+00 : f32
    %24 = vector.broadcast %cst_19 : f32 to vector<64x16xf32>
    %25 = arith.select %23, %24, %18 : vector<64x16xf32>
    %c0_20 = arith.constant 0 : index
    %c0_21 = arith.constant 0 : index
    %26 = vector.load %arg11[%c0_20, %c0_21] : memref<64x384xf32, #tpu.memory_space<vmem>>, vector<64x16xf32>
    tpu.vector_store %arg11[%c0_20, %c0_21], %21 {strides = array<i32>} : memref<64x384xf32, #tpu.memory_space<vmem>>, vector<64x16xf32>,
    %c0_22 = arith.constant 0 : index
    %c16 = arith.constant 16 : index
    %27 = vector.load %arg11[%c0_22, %c16] : memref<64x384xf32, #tpu.memory_space<vmem>>, vector<64x256xf32>
    tpu.vector_store %arg11[%c0_22, %c16], %2 {strides = array<i32>} : memref<64x384xf32, #tpu.memory_space<vmem>>, vector<64x256xf32>,
    %c0_23 = arith.constant 0 : index
    %c272 = arith.constant 272 : index
    %28 = vector.load %arg11[%c0_23, %c272] : memref<64x384xf32, #tpu.memory_space<vmem>>, vector<64x16xf32>
    tpu.vector_store %arg11[%c0_23, %c272], %25 {strides = array<i32>} : memref<64x384xf32, #tpu.memory_space<vmem>>, vector<64x16xf32>,
    %c0_24 = arith.constant 0 : index
    %c0_25 = arith.constant 0 : index
    %29 = vector.load %arg11[%c0_24, %c0_25] : memref<64x384xf32, #tpu.memory_space<vmem>>, vector<64x384xf32>
    %30 = tpu.iota {dimensions = array<i32: 1>} : vector<1x256xi32>
    %c16_i32_26 = arith.constant 16 : i32
    %c0_i32_27 = arith.constant 0 : i32
    %31 = arith.cmpi eq, %c16_i32_26, %c0_i32_27 : i32
    %c1_i32 = arith.constant 1 : i32
    %32 = arith.select %31, %c1_i32, %c16_i32_26 : i32
    %33 = vector.broadcast %32 : i32 to vector<1x256xi32>
    %34 = arith.remsi %30, %33 : vector<1x256xi32>
    %c0_i32_28 = arith.constant 0 : i32
    %35 = vector.broadcast %c0_i32_28 : i32 to vector<1x256xi32>
    %36 = arith.cmpi ne, %34, %35 : vector<1x256xi32>
    %c0_i32_29 = arith.constant 0 : i32
    %37 = vector.broadcast %c0_i32_29 : i32 to vector<1x256xi32>
    %38 = arith.cmpi slt, %34, %37 : vector<1x256xi32>
    %c0_i32_30 = arith.constant 0 : i32
    %39 = arith.cmpi slt, %32, %c0_i32_30 : i32
    %40 = vector.broadcast %39 : i1 to vector<1x256xi1>
    %41 = vector.broadcast %40 : vector<1x256xi1> to vector<1x256xi1>
    %42 = arith.xori %38, %41 : vector<1x256xi1>
    %43 = arith.andi %42, %36 : vector<1x256xi1>
    %44 = vector.broadcast %32 : i32 to vector<1x256xi32>
    %45 = arith.addi %34, %44 : vector<1x256xi32>
    %46 = arith.select %43, %45, %34 : vector<1x256xi1>, vector<1x256xi32>
    %c1_i32_31 = arith.constant 1 : i32
    %47 = vector.broadcast %c1_i32_31 : i32 to vector<1x256xi32>
    %48 = arith.cmpi sge, %46, %47 : vector<1x256xi32>
    %c15_i32 = arith.constant 15 : i32
    %49 = vector.broadcast %c15_i32 : i32 to vector<1x256xi32>
    %50 = arith.cmpi slt, %46, %49 : vector<1x256xi32>
    %51 = vector.extract_strided_slice %14 {offsets = [256, 0], sizes = [64, 1], strides = [1, 1]} : vector<576x1xf32> to vector<64x1xf32>
    %52 = vector.broadcast %51 : vector<64x1xf32> to vector<64x256xf32>
    %53 = arith.mulf %2, %52 : vector<64x256xf32>
    %c1_i32_32 = arith.constant 1 : i32
    %54 = tpu.dynamic_rotate %29 by %c1_i32_32 dim 1 : vector<64x384xf32>, i32 -> vector<64x384xf32>
    %55 = vector.extract_strided_slice %54 {offsets = [0, 0], sizes = [64, 256], strides = [1, 1]} : vector<64x384xf32> to vector<64x256xf32>
    %cst_33 = arith.constant 0.000000e+00 : f32
    %56 = vector.shape_cast %48 : vector<1x256xi1> to vector<1x256xi1>
    %57 = vector.broadcast %56 : vector<1x256xi1> to vector<64x256xi1>
    %58 = vector.broadcast %cst_33 : f32 to vector<64x256xf32>
    %59 = arith.select %57, %55, %58 : vector<64x256xi1>, vector<64x256xf32>
    %60 = vector.extract_strided_slice %14 {offsets = [0, 0], sizes = [64, 1], strides = [1, 1]} : vector<576x1xf32> to vector<64x1xf32>
    %61 = vector.broadcast %60 : vector<64x1xf32> to vector<64x256xf32>
    %62 = arith.mulf %59, %61 : vector<64x256xf32>
    %63 = arith.addf %53, %62 : vector<64x256xf32>
    %64 = vector.extract_strided_slice %29 {offsets = [0, 0], sizes = [64, 256], strides = [1, 1]} : vector<64x384xf32> to vector<64x256xf32>
    %65 = vector.extract_strided_slice %14 {offsets = [64, 0], sizes = [64, 1], strides = [1, 1]} : vector<576x1xf32> to vector<64x1xf32>
    %66 = vector.broadcast %65 : vector<64x1xf32> to vector<64x256xf32>
    %67 = arith.mulf %64, %66 : vector<64x256xf32>
    %68 = arith.addf %63, %67 : vector<64x256xf32>
    %c383_i32 = arith.constant 383 : i32
    %69 = tpu.dynamic_rotate %29 by %c383_i32 dim 1 : vector<64x384xf32>, i32 -> vector<64x384xf32>
    %70 = vector.extract_strided_slice %69 {offsets = [0, 0], sizes = [64, 256], strides = [1, 1]} : vector<64x384xf32> to vector<64x256xf32>
    %cst_34 = arith.constant 0.000000e+00 : f32
    %71 = vector.shape_cast %50 : vector<1x256xi1> to vector<1x256xi1>
    %72 = vector.broadcast %71 : vector<1x256xi1> to vector<64x256xi1>
    %73 = vector.broadcast %cst_34 : f32 to vector<64x256xf32>
    %74 = arith.select %72, %70, %73 : vector<64x256xi1>, vector<64x256xf32>
    %75 = vector.extract_strided_slice %14 {offsets = [128, 0], sizes = [64, 1], strides = [1, 1]} : vector<576x1xf32> to vector<64x1xf32>
    %76 = vector.broadcast %75 : vector<64x1xf32> to vector<64x256xf32>
    %77 = arith.mulf %74, %76 : vector<64x256xf32>
    %78 = arith.addf %68, %77 : vector<64x256xf32>
    %c369_i32 = arith.constant 369 : i32
    %79 = tpu.dynamic_rotate %29 by %c369_i32 dim 1 : vector<64x384xf32>, i32 -> vector<64x384xf32>
    %80 = vector.extract_strided_slice %79 {offsets = [0, 0], sizes = [64, 256], strides = [1, 1]} : vector<64x384xf32> to vector<64x256xf32>
    %cst_35 = arith.constant 0.000000e+00 : f32
    %81 = vector.shape_cast %48 : vector<1x256xi1> to vector<1x256xi1>
    %82 = vector.broadcast %81 : vector<1x256xi1> to vector<64x256xi1>
    %83 = vector.broadcast %cst_35 : f32 to vector<64x256xf32>
    %84 = arith.select %82, %80, %83 : vector<64x256xi1>, vector<64x256xf32>
    %85 = vector.extract_strided_slice %14 {offsets = [192, 0], sizes = [64, 1], strides = [1, 1]} : vector<576x1xf32> to vector<64x1xf32>
    %86 = vector.broadcast %85 : vector<64x1xf32> to vector<64x256xf32>
    %87 = arith.mulf %84, %86 : vector<64x256xf32>
    %88 = arith.addf %78, %87 : vector<64x256xf32>
    %c367_i32 = arith.constant 367 : i32
    %89 = tpu.dynamic_rotate %29 by %c367_i32 dim 1 : vector<64x384xf32>, i32 -> vector<64x384xf32>
    %90 = vector.extract_strided_slice %89 {offsets = [0, 0], sizes = [64, 256], strides = [1, 1]} : vector<64x384xf32> to vector<64x256xf32>
    %cst_36 = arith.constant 0.000000e+00 : f32
    %91 = vector.shape_cast %50 : vector<1x256xi1> to vector<1x256xi1>
    %92 = vector.broadcast %91 : vector<1x256xi1> to vector<64x256xi1>
    %93 = vector.broadcast %cst_36 : f32 to vector<64x256xf32>
    %94 = arith.select %92, %90, %93 : vector<64x256xi1>, vector<64x256xf32>
    %95 = vector.extract_strided_slice %14 {offsets = [320, 0], sizes = [64, 1], strides = [1, 1]} : vector<576x1xf32> to vector<64x1xf32>
    %96 = vector.broadcast %95 : vector<64x1xf32> to vector<64x256xf32>
    %97 = arith.mulf %94, %96 : vector<64x256xf32>
    %98 = arith.addf %88, %97 : vector<64x256xf32>
    %c353_i32 = arith.constant 353 : i32
    %99 = tpu.dynamic_rotate %29 by %c353_i32 dim 1 : vector<64x384xf32>, i32 -> vector<64x384xf32>
    %100 = vector.extract_strided_slice %99 {offsets = [0, 0], sizes = [64, 256], strides = [1, 1]} : vector<64x384xf32> to vector<64x256xf32>
    %cst_37 = arith.constant 0.000000e+00 : f32
    %101 = vector.shape_cast %48 : vector<1x256xi1> to vector<1x256xi1>
    %102 = vector.broadcast %101 : vector<1x256xi1> to vector<64x256xi1>
    %103 = vector.broadcast %cst_37 : f32 to vector<64x256xf32>
    %104 = arith.select %102, %100, %103 : vector<64x256xi1>, vector<64x256xf32>
    %105 = vector.extract_strided_slice %14 {offsets = [384, 0], sizes = [64, 1], strides = [1, 1]} : vector<576x1xf32> to vector<64x1xf32>
    %106 = vector.broadcast %105 : vector<64x1xf32> to vector<64x256xf32>
    %107 = arith.mulf %104, %106 : vector<64x256xf32>
    %108 = arith.addf %98, %107 : vector<64x256xf32>
    %c352_i32 = arith.constant 352 : i32
    %109 = tpu.dynamic_rotate %29 by %c352_i32 dim 1 : vector<64x384xf32>, i32 -> vector<64x384xf32>
    %110 = vector.extract_strided_slice %109 {offsets = [0, 0], sizes = [64, 256], strides = [1, 1]} : vector<64x384xf32> to vector<64x256xf32>
    %111 = vector.extract_strided_slice %14 {offsets = [448, 0], sizes = [64, 1], strides = [1, 1]} : vector<576x1xf32> to vector<64x1xf32>
    %112 = vector.broadcast %111 : vector<64x1xf32> to vector<64x256xf32>
    %113 = arith.mulf %110, %112 : vector<64x256xf32>
    %114 = arith.addf %108, %113 : vector<64x256xf32>
    %c351_i32 = arith.constant 351 : i32
    %115 = tpu.dynamic_rotate %29 by %c351_i32 dim 1 : vector<64x384xf32>, i32 -> vector<64x384xf32>
    %116 = vector.extract_strided_slice %115 {offsets = [0, 0], sizes = [64, 256], strides = [1, 1]} : vector<64x384xf32> to vector<64x256xf32>
    %cst_38 = arith.constant 0.000000e+00 : f32
    %117 = vector.shape_cast %50 : vector<1x256xi1> to vector<1x256xi1>
    %118 = vector.broadcast %117 : vector<1x256xi1> to vector<64x256xi1>
    %119 = vector.broadcast %cst_38 : f32 to vector<64x256xf32>
    %120 = arith.select %118, %116, %119 : vector<64x256xi1>, vector<64x256xf32>
    %121 = vector.extract_strided_slice %14 {offsets = [512, 0], sizes = [64, 1], strides = [1, 1]} : vector<576x1xf32> to vector<64x1xf32>
    %122 = vector.broadcast %121 : vector<64x1xf32> to vector<64x256xf32>
    %123 = arith.mulf %120, %122 : vector<64x256xf32>
    %124 = arith.addf %114, %123 : vector<64x256xf32>
    %cst_39 = arith.constant 1.000000e-01 : f32
    %125 = vector.broadcast %cst_39 : f32 to vector<64x256xf32>
    %126 = arith.mulf %125, %124 : vector<64x256xf32>
    %127 = arith.maximumf %124, %126 : vector<64x256xf32>
    %c0_40 = arith.constant 0 : index
    %c0_41 = arith.constant 0 : index
    %128 = vector.load %arg8[%c0_40, %c0_41] : memref<64x1xf32, #tpu.memory_space<vmem>>, vector<64x1xf32>
    %129 = vector.broadcast %128 : vector<64x1xf32> to vector<64x256xf32>
    %130 = arith.mulf %2, %129 : vector<64x256xf32>
    %cst_42 = arith.constant dense<0.000000e+00> : vector<256xf32>
    %131 = vector.multi_reduction <add>, %130, %cst_42 [0] : vector<64x256xf32> to vector<256xf32>
    %132 = vector.shape_cast %131 : vector<256xf32> to vector<1x256xf32>
    %c0_43 = arith.constant 0 : index
    %c0_44 = arith.constant 0 : index
    %133 = memref.load %arg9[%c0_43, %c0_44] : memref<1x1xf32, #tpu.memory_space<smem>>
    %134 = vector.broadcast %133 : f32 to vector<1x256xf32>
    %135 = arith.addf %132, %134 : vector<1x256xf32>
    %136 = arith.negf %135 : vector<1x256xf32>
    %137 = math.exp %136 : vector<1x256xf32>
    %cst_45 = arith.constant 1.000000e+00 : f32
    %138 = vector.broadcast %cst_45 : f32 to vector<1x256xf32>
    %139 = arith.addf %138, %137 : vector<1x256xf32>
    %140 = arith.divf %138, %139 : vector<1x256xf32>
    %141 = vector.broadcast %140 : vector<1x256xf32> to vector<64x256xf32>
    %142 = arith.mulf %127, %141 : vector<64x256xf32>
    %143 = arith.addf %142, %2 : vector<64x256xf32>
    %c0_46 = arith.constant 0 : index
    %c0_47 = arith.constant 0 : index
    %c0_48 = arith.constant 0 : index
    %144 = vector.load %arg10[%c0_46, %c0_47, %c0_48] : memref<1x64x256xf32, #tpu.memory_space<vmem>>, vector<1x64x256xf32>
    %145 = vector.shape_cast %144 : vector<1x64x256xf32> to vector<64x256xf32>
    %146 = vector.shape_cast %143 : vector<64x256xf32> to vector<1x64x256xf32>
    tpu.vector_store %arg10[%c0_46, %c0_47, %c0_48], %146 {strides = array<i32>} : memref<1x64x256xf32, #tpu.memory_space<vmem>>, vector<1x64x256xf32>,
    return
  }
  func.func @transform_0(%arg0: i32, %arg1: i32) -> (i32, i32, i32) {
    %c0_i32 = arith.constant 0 : i32
    %c0_i32_0 = arith.constant 0 : i32
    return %arg0, %c0_i32, %arg1 : i32, i32, i32
  }
  func.func @transform_1(%arg0: i32, %arg1: i32) -> (i32, i32, i32) {
    %c2_i32 = arith.constant 2 : i32
    %0 = arith.muli %arg1, %c2_i32 : i32
    %c1_i32 = arith.constant 1 : i32
    %1 = arith.subi %0, %c1_i32 : i32
    %c0_i32 = arith.constant 0 : i32
    %2 = arith.maxsi %1, %c0_i32 : i32
    %c0_i32_0 = arith.constant 0 : i32
    %c0_i32_1 = arith.constant 0 : i32
    return %arg0, %c0_i32_0, %2 : i32, i32, i32
  }
  func.func @transform_2(%arg0: i32, %arg1: i32) -> (i32, i32, i32) {
    %c1_i32 = arith.constant 1 : i32
    %0 = arith.addi %arg1, %c1_i32 : i32
    %c2_i32 = arith.constant 2 : i32
    %1 = arith.muli %0, %c2_i32 : i32
    %c1_i32_0 = arith.constant 1 : i32
    %2 = arith.minsi %1, %c1_i32_0 : i32
    %c0_i32 = arith.constant 0 : i32
    %c0_i32_1 = arith.constant 0 : i32
    return %arg0, %c0_i32, %2 : i32, i32, i32
  }
  func.func @transform_3(%arg0: i32, %arg1: i32) -> (i32, i32, i32) {
    %c0_i32 = arith.constant 0 : i32
    %c0_i32_0 = arith.constant 0 : i32
    %c0_i32_1 = arith.constant 0 : i32
    return %arg0, %c0_i32, %c0_i32_0 : i32, i32, i32
  }
  func.func @transform_4(%arg0: i32, %arg1: i32) -> (i32, i32) {
    %c0_i32 = arith.constant 0 : i32
    %c0_i32_0 = arith.constant 0 : i32
    %c0_i32_1 = arith.constant 0 : i32
    return %c0_i32, %c0_i32_0 : i32, i32
  }
  func.func @transform_5(%arg0: i32, %arg1: i32) -> (i32, i32) {
    %c0_i32 = arith.constant 0 : i32
    %c0_i32_0 = arith.constant 0 : i32
    %c0_i32_1 = arith.constant 0 : i32
    return %c0_i32, %c0_i32_0 : i32, i32
  }
  func.func @transform_6(%arg0: i32, %arg1: i32) -> (i32, i32) {
    %c0_i32 = arith.constant 0 : i32
    %c0_i32_0 = arith.constant 0 : i32
    %c0_i32_1 = arith.constant 0 : i32
    return %c0_i32, %c0_i32_0 : i32, i32
  }
  func.func @transform_7(%arg0: i32, %arg1: i32) -> (i32, i32) {
    %c0_i32 = arith.constant 0 : i32
    %c0_i32_0 = arith.constant 0 : i32
    %c0_i32_1 = arith.constant 0 : i32
    return %c0_i32, %c0_i32_0 : i32, i32
  }
  func.func @transform_8(%arg0: i32, %arg1: i32) -> (i32, i32, i32) {
    %c0_i32 = arith.constant 0 : i32
    %c0_i32_0 = arith.constant 0 : i32
    return %arg0, %c0_i32, %arg1 : i32, i32, i32
  }
}

</mosaic_0001>

<llo_original>
// kernel: tpu_custom_call.1
$region0: #{tpu_custom_call.1}
  #allocation0 [shape = 'u32[]', space=smem, size = 0x4, offset = 0x4, fixed_abs, tag = 'smem constant byte address 0x4 - core index']
  #allocation1 [shape = 'u32[144,128]{1,0:T(1,128)}', space=vmem, size = 0x12000, scoped, tag = 'internal scratch']
  #allocation2 [shape = 'f32[64,384]{1,0:T(8,128)}', space=vmem, size = 0x18000, scoped, tag = 'scratch operand']
  #allocation3 [shape = 'f32[1,1]{1,0:T(1,128)S(6)}', space=smem, size = 0x200, scoped, tag = 'scoped memory for tpu_custom_call.1']
  %s0 = inlined_call_operand.vmem [shape: f32[2,64,256], index: 0, kind: input, shape index: {}]
  %s1 = inlined_call_operand.vmem [shape: f32[2,64,256], index: 1, kind: input, shape index: {}]
  %s2 = inlined_call_operand.vmem [shape: f32[2,64,256], index: 2, kind: input, shape index: {}]
  %s3 = inlined_call_operand.vmem [shape: f32[2,64,1], index: 3, kind: input, shape index: {}]
  %s4 = inlined_call_operand.vmem [shape: f32[64,64], index: 4, kind: input, shape index: {}]
  %s5 = inlined_call_operand.vmem [shape: f32[576,64], index: 5, kind: input, shape index: {}]
  %s6 = inlined_call_operand.vmem [shape: f32[64,1], index: 6, kind: input, shape index: {}]
  %s7 = inlined_call_operand.<no memory space> [shape: f32[1,1], index: 7, kind: input, shape index: {}]
  %s8 = inlined_call_operand.hbm [shape: f32[2,64,256], index: 8, kind: output, shape index: {}]
  %s9 = sld [smem:[#allocation0]]
  $region141: #{tpu_custom_call.1} parent=0
    _
  %s11 = ssub.s32 1, %s9
  %s12 = scalar_select 0, %s11, %s9
  %13 = sst [smem:[#allocation3]] %s7
  $region1: #{tpu_custom_call.1} parent=0
    #allocation4 [shape = 'u8[65536]{0}', space=vmem, size = 0x10000, scoped, tag = 'input window, operand 1']
    #allocation5 [shape = 'u8[65536]{0}', space=vmem, size = 0x10000, scoped, tag = 'input window, operand 2']
    #allocation6 [shape = 'u8[131072]{0}', space=vmem, size = 0x20000, scoped, tag = 'output window, operand 0']
    #allocation7 [shape = 's32[2]{0}', space=sflag, size = 0x8, scoped, tag = 'scoped memory for tpu_custom_call.1']
    %14 = vsyncpa [#allocation7], 0
    %s15 = scalar_lea.sflag [#allocation7], 1
    %16 = vsyncpa %s15, 0
    loop: start=0, step=1, limit=4
    $region2: #{tpu_custom_call.1} parent=1 // loop_pre_header
      _
    $region3: #{tpu_custom_call.1} parent=1 // loop_header
      %s18 = sphi 0, %s22
      %p19 = scmp.ge.s32.totalorder %s18, 4
      %s25 = sphi 0, %s37
      %s26 = sphi 0, %s33
      %s27 = sphi 0, %s25
      %s28 = sphi 0, %s26
      %s29 = sphi 0, %s27
      %s30 = sphi 0, %s28
      %s42 = sphi 0, %s44
      %s45 = sphi 0, %s42
      %s46 = sphi 0, %s45
      %s62 = sphi 0, %s46
      %s78 = sphi 0, %s80
      %s81 = sphi 0, %s78
      %s82 = sphi 0, %s81
      %s98 = sphi 0, %s82
      %s114 = sphi 0, %s116
      %s117 = sphi 0, %s114
      %s118 = sphi 0, %s117
      %s134 = sphi 0, %s118
      %s140 = sphi 0, %s142
      %s143 = sphi 0, %s140
      %s144 = sphi 0, %s143
      %s160 = sphi 0, %s144
      %s164 = sphi 0, %s164
      %s166 = sphi 0, %s164
      %s167 = sphi 0, %s166
      %s181 = sphi 0, %s167
      %s185 = sphi 0, %s185
      %s187 = sphi 0, %s185
      %s188 = sphi 0, %s187
      %s202 = sphi 0, %s188
      %s206 = sphi 0, %s206
      %s208 = sphi 0, %s206
      %s209 = sphi 0, %s208
      %s223 = sphi 0, %s209
      %s227 = sphi 0, %s227
      %s229 = sphi 0, %s227
      %s230 = sphi 0, %s229
      %s244 = sphi 0, %s230
      %s252 = sphi 0, %s254
      %s255 = sphi 0, %s252
      %s256 = sphi 0, %s255
      %s272 = sphi 0, %s256
    $region4: #{tpu_custom_call.1} parent=1 // loop_header_branch
      %21 = sbr.rel (%p19) target = $region8
    $region5: #{tpu_custom_call.1} parent=1 // loop_body
      %s23 = ssub.s32 %s18, 1
      %s24 = ssub.s32 %s18, 2
      %s31 = sadd.s32 1, %s26
      %p32 = scmp.ge.s32.totalorder %s31, 1
      %s33 = scalar_select %p32, 0, %s31
      %s34 = sadd.s32 1, %s25
      %s35 = scalar_select %p32, %s34, %s25
      %p36 = scmp.ge.s32.totalorder %s35, 2
      %s37 = scalar_select %p36, 0, %s35
      %s38 = ssub.s32 %s25, %s37
      %s39 = ssub.s32 %s26, %s33
      %s40 = sor.u32 %s38, %s39
      %p41 = scmp.eq.s32.totalorder %s40, 0
      %s43 = sadd.s32 %s42, 1
      %s44 = scalar_select %p41, %s42, %s43
      %p47 = pneg %p41
      %p48 = scmp.eq.s32.totalorder %s18, 1
      %p49 = por %p47, %p48
      %p50 = scmp.ne.s32.totalorder %s42, %s45
      %p51 = scmp.eq.s32.totalorder %s18, 0
      %p52 = por %p50, %p51
      %p53 = scmp.ne.s32.totalorder %s42, %s45
      %p54 = scmp.eq.s32.totalorder %s23, 1
      %p55 = por %p53, %p54
      %p56 = scmp.ne.s32.totalorder %s45, %s46
      %p57 = scmp.eq.s32.totalorder %s23, 0
      %p58 = por %p56, %p57
      %p59 = scmp.ne.s32.totalorder %s45, %s46
      %p60 = scmp.eq.s32.totalorder %s24, 1
      %p61 = por %p59, %p60
      %p63 = scmp.ne.s32.totalorder %s46, %s62
      %p64 = scmp.eq.s32.totalorder %s24, 0
      %p65 = por %p63, %p64
      %s66 = smul.u32 %s26, 2
      %s67 = ssub.s32 %s66, 1
      %p68 = scmp.gt.s32.totalorder %s67, 0
      %s69 = scalar_select %p68, %s67, 0
      %s70 = smul.u32 %s33, 2
      %s71 = ssub.s32 %s70, 1
      %p72 = scmp.gt.s32.totalorder %s71, 0
      %s73 = scalar_select %p72, %s71, 0
      %s74 = ssub.s32 %s25, %s37
      %s75 = ssub.s32 %s69, %s73
      %s76 = sor.u32 %s74, %s75
      %p77 = scmp.eq.s32.totalorder %s76, 0
      %s79 = sadd.s32 %s78, 1
      %s80 = scalar_select %p77, %s78, %s79
      %p83 = pneg %p77
      %p84 = scmp.eq.s32.totalorder %s18, 1
      %p85 = por %p83, %p84
      %p86 = scmp.ne.s32.totalorder %s78, %s81
      %p87 = scmp.eq.s32.totalorder %s18, 0
      %p88 = por %p86, %p87
      %p89 = scmp.ne.s32.totalorder %s78, %s81
      %p90 = scmp.eq.s32.totalorder %s23, 1
      %p91 = por %p89, %p90
      %p92 = scmp.ne.s32.totalorder %s81, %s82
      %p93 = scmp.eq.s32.totalorder %s23, 0
      %p94 = por %p92, %p93
      %p95 = scmp.ne.s32.totalorder %s81, %s82
      %p96 = scmp.eq.s32.totalorder %s24, 1
      %p97 = por %p95, %p96
      %p99 = scmp.ne.s32.totalorder %s82, %s98
      %p100 = scmp.eq.s32.totalorder %s24, 0
      %p101 = por %p99, %p100
      %s102 = sadd.s32 %s26, 1
      %s103 = smul.u32 %s102, 2
      %p104 = scmp.lt.s32.totalorder %s103, 1
      %s105 = scalar_select %p104, %s103, 1
      %s106 = sadd.s32 %s33, 1
      %s107 = smul.u32 %s106, 2
      %p108 = scmp.lt.s32.totalorder %s107, 1
      %s109 = scalar_select %p108, %s107, 1
      %s110 = ssub.s32 %s25, %s37
      %s111 = ssub.s32 %s105, %s109
      %s112 = sor.u32 %s110, %s111
      %p113 = scmp.eq.s32.totalorder %s112, 0
      %s115 = sadd.s32 %s114, 1
      %s116 = scalar_select %p113, %s114, %s115
      %p119 = pneg %p113
      %p120 = scmp.eq.s32.totalorder %s18, 1
      %p121 = por %p119, %p120
      %p122 = scmp.ne.s32.totalorder %s114, %s117
      %p123 = scmp.eq.s32.totalorder %s18, 0
      %p124 = por %p122, %p123
      %p125 = scmp.ne.s32.totalorder %s114, %s117
      %p126 = scmp.eq.s32.totalorder %s23, 1
      %p127 = por %p125, %p126
      %p128 = scmp.ne.s32.totalorder %s117, %s118
      %p129 = scmp.eq.s32.totalorder %s23, 0
      %p130 = por %p128, %p129
      %p131 = scmp.ne.s32.totalorder %s117, %s118
      %p132 = scmp.eq.s32.totalorder %s24, 1
      %p133 = por %p131, %p132
      %p135 = scmp.ne.s32.totalorder %s118, %s134
      %p136 = scmp.eq.s32.totalorder %s24, 0
      %p137 = por %p135, %p136
      %s138 = ssub.s32 %s25, %s37
      %p139 = scmp.eq.s32.totalorder %s138, 0
      %s141 = sadd.s32 %s140, 1
      %s142 = scalar_select %p139, %s140, %s141
      %p145 = pneg %p139
      %p146 = scmp.eq.s32.totalorder %s18, 1
      %p147 = por %p145, %p146
      %p148 = scmp.ne.s32.totalorder %s140, %s143
      %p149 = scmp.eq.s32.totalorder %s18, 0
      %p150 = por %p148, %p149
      %p151 = scmp.ne.s32.totalorder %s140, %s143
      %p152 = scmp.eq.s32.totalorder %s23, 1
      %p153 = por %p151, %p152
      %p154 = scmp.ne.s32.totalorder %s143, %s144
      %p155 = scmp.eq.s32.totalorder %s23, 0
      %p156 = por %p154, %p155
      %p157 = scmp.ne.s32.totalorder %s143, %s144
      %p158 = scmp.eq.s32.totalorder %s24, 1
      %p159 = por %p157, %p158
      %p161 = scmp.ne.s32.totalorder %s144, %s160
      %p162 = scmp.eq.s32.totalorder %s24, 0
      %p163 = por %p161, %p162
      %s165 = sadd.s32 %s164, 1
      %p168 = scmp.eq.s32.totalorder %s18, 1
      %p169 = scmp.ne.s32.totalorder %s164, %s166
      %p170 = scmp.eq.s32.totalorder %s18, 0
      %p171 = por %p169, %p170
      %p172 = scmp.ne.s32.totalorder %s164, %s166
      %p173 = scmp.eq.s32.totalorder %s23, 1
      %p174 = por %p172, %p173
      %p175 = scmp.ne.s32.totalorder %s166, %s167
      %p176 = scmp.eq.s32.totalorder %s23, 0
      %p177 = por %p175, %p176
      %p178 = scmp.ne.s32.totalorder %s166, %s167
      %p179 = scmp.eq.s32.totalorder %s24, 1
      %p180 = por %p178, %p179
      %p182 = scmp.ne.s32.totalorder %s167, %s181
      %p183 = scmp.eq.s32.totalorder %s24, 0
      %p184 = por %p182, %p183
      %s186 = sadd.s32 %s185, 1
      %p189 = scmp.eq.s32.totalorder %s18, 1
      %p190 = scmp.ne.s32.totalorder %s185, %s187
      %p191 = scmp.eq.s32.totalorder %s18, 0
      %p192 = por %p190, %p191
      %p193 = scmp.ne.s32.totalorder %s185, %s187
      %p194 = scmp.eq.s32.totalorder %s23, 1
      %p195 = por %p193, %p194
      %p196 = scmp.ne.s32.totalorder %s187, %s188
      %p197 = scmp.eq.s32.totalorder %s23, 0
      %p198 = por %p196, %p197
      %p199 = scmp.ne.s32.totalorder %s187, %s188
      %p200 = scmp.eq.s32.totalorder %s24, 1
      %p201 = por %p199, %p200
      %p203 = scmp.ne.s32.totalorder %s188, %s202
      %p204 = scmp.eq.s32.totalorder %s24, 0
      %p205 = por %p203, %p204
      %s207 = sadd.s32 %s206, 1
      %p210 = scmp.eq.s32.totalorder %s18, 1
      %p211 = scmp.ne.s32.totalorder %s206, %s208
      %p212 = scmp.eq.s32.totalorder %s18, 0
      %p213 = por %p211, %p212
      %p214 = scmp.ne.s32.totalorder %s206, %s208
      %p215 = scmp.eq.s32.totalorder %s23, 1
      %p216 = por %p214, %p215
      %p217 = scmp.ne.s32.totalorder %s208, %s209
      %p218 = scmp.eq.s32.totalorder %s23, 0
      %p219 = por %p217, %p218
      %p220 = scmp.ne.s32.totalorder %s208, %s209
      %p221 = scmp.eq.s32.totalorder %s24, 1
      %p222 = por %p220, %p221
      %p224 = scmp.ne.s32.totalorder %s209, %s223
      %p225 = scmp.eq.s32.totalorder %s24, 0
      %p226 = por %p224, %p225
      %s228 = sadd.s32 %s227, 1
      %p231 = scmp.eq.s32.totalorder %s18, 1
      %p232 = scmp.ne.s32.totalorder %s227, %s229
      %p233 = scmp.eq.s32.totalorder %s18, 0
      %p234 = por %p232, %p233
      %p235 = scmp.ne.s32.totalorder %s227, %s229
      %p236 = scmp.eq.s32.totalorder %s23, 1
      %p237 = por %p235, %p236
      %p238 = scmp.ne.s32.totalorder %s229, %s230
      %p239 = scmp.eq.s32.totalorder %s23, 0
      %p240 = por %p238, %p239
      %p241 = scmp.ne.s32.totalorder %s229, %s230
      %p242 = scmp.eq.s32.totalorder %s24, 1
      %p243 = por %p241, %p242
      %p245 = scmp.ne.s32.totalorder %s230, %s244
      %p246 = scmp.eq.s32.totalorder %s24, 0
      %p247 = por %p245, %p246
      %s248 = ssub.s32 %s25, %s37
      %s249 = ssub.s32 %s26, %s33
      %s250 = sor.u32 %s248, %s249
      %p251 = scmp.eq.s32.totalorder %s250, 0
      %s253 = sadd.s32 %s252, 1
      %s254 = scalar_select %p251, %s252, %s253
      %p257 = pneg %p251
      %p258 = scmp.eq.s32.totalorder %s18, 1
      %p259 = por %p257, %p258
      %p260 = scmp.ne.s32.totalorder %s252, %s255
      %p261 = scmp.eq.s32.totalorder %s18, 0
      %p262 = por %p260, %p261
      %p263 = scmp.ne.s32.totalorder %s252, %s255
      %p264 = scmp.eq.s32.totalorder %s23, 1
      %p265 = por %p263, %p264
      %p266 = scmp.ne.s32.totalorder %s255, %s256
      %p267 = scmp.eq.s32.totalorder %s23, 0
      %p268 = por %p266, %p267
      %p269 = scmp.ne.s32.totalorder %s255, %s256
      %p270 = scmp.eq.s32.totalorder %s24, 1
      %p271 = por %p269, %p270
      %p273 = scmp.ne.s32.totalorder %s256, %s272
      %p274 = scmp.eq.s32.totalorder %s24, 0
      %p275 = por %p273, %p274
      %p276 = scmp.le.s32.totalorder 1, %s18
      %p277 = scmp.lt.s32.totalorder %s18, 3
      %p278 = pnand %p276, %p277
      %p279 = pneg %p278
      // Predicated region
      $region9: #{tpu_custom_call.1} parent=5 // pred_check
        _
      $region10: #{tpu_custom_call.1} parent=5 // pred_check_branch
        %281 = sbr.rel (%p278) target = $region12
      $region11: #{tpu_custom_call.1} parent=5 // pred_region
        %s282 = ssub.s32 %s18, 1
        // Predicated region
        $region13: #{tpu_custom_call.1} parent=11 // pred_check
          %p283 = pneg %p177
        $region14: #{tpu_custom_call.1} parent=11 // pred_check_branch
          %285 = sbr.rel (%p283) target = $region16
        $region15: #{tpu_custom_call.1} parent=11 // pred_region
          _
        $region16: #{tpu_custom_call.1} parent=11 // pred_fallthru
          _
        // Predicated region
        $region17: #{tpu_custom_call.1} parent=11 // pred_check
          %p286 = pneg %p198
        $region18: #{tpu_custom_call.1} parent=11 // pred_check_branch
          %288 = sbr.rel (%p286) target = $region20
        $region19: #{tpu_custom_call.1} parent=11 // pred_region
          _
        $region20: #{tpu_custom_call.1} parent=11 // pred_fallthru
          _
        // Predicated region
        $region21: #{tpu_custom_call.1} parent=11 // pred_check
          %p289 = pneg %p219
        $region22: #{tpu_custom_call.1} parent=11 // pred_check_branch
          %291 = sbr.rel (%p289) target = $region24
        $region23: #{tpu_custom_call.1} parent=11 // pred_region
          _
        $region24: #{tpu_custom_call.1} parent=11 // pred_fallthru
          _
        // Predicated region
        $region25: #{tpu_custom_call.1} parent=11 // pred_check
          %p292 = pneg %p240
        $region26: #{tpu_custom_call.1} parent=11 // pred_check_branch
          %294 = sbr.rel (%p292) target = $region28
        $region27: #{tpu_custom_call.1} parent=11 // pred_region
          _
        $region28: #{tpu_custom_call.1} parent=11 // pred_fallthru
          _
      $region12: #{tpu_custom_call.1} parent=5 // pred_fallthru
        _
      %p295 = scmp.lt.s32.totalorder %s18, 2
      // Predicated region
      $region29: #{tpu_custom_call.1} parent=5 // pred_check
        %p296 = pneg %p295
      $region30: #{tpu_custom_call.1} parent=5 // pred_check_branch
        %298 = sbr.rel (%p296) target = $region32
      $region31: #{tpu_custom_call.1} parent=5 // pred_region
        // Predicated region
        $region33: #{tpu_custom_call.1} parent=31 // pred_check
          %p299 = pneg %p52
        $region34: #{tpu_custom_call.1} parent=31 // pred_check_branch
          %301 = sbr.rel (%p299) target = $region36
        $region35: #{tpu_custom_call.1} parent=31 // pred_region
          %s302 = smul.u32 2, %s26
          %p303 = scmp.lt.s32.totalorder %s25, 1
          %s304 = scalar_select %p303, %s25, 1
          %p305 = scmp.lt.s32.totalorder %s302, 1
          %s306 = scalar_select %p305, %s302, 1
          %s307 = smul.addr %s304, 16
          %s308 = sadd.s32 %s306, %s307
          %s309 = smul.addr %s308, 8
          %s310 = scalar_lea.vmem %s0, %s309
          %s311 = smul.u32 2, %s26
        $region36: #{tpu_custom_call.1} parent=31 // pred_fallthru
          _
        // Predicated region
        $region37: #{tpu_custom_call.1} parent=31 // pred_check
          %p312 = pneg %p88
        $region38: #{tpu_custom_call.1} parent=31 // pred_check_branch
          %314 = sbr.rel (%p312) target = $region40
        $region39: #{tpu_custom_call.1} parent=31 // pred_region
          %s315 = sand.u32 %s78, 1
          %s316 = sand.u32 %s78, 1
          %s317 = smul.addr %s316, 64
          %s318 = scalar_lea.vmem [#allocation4], %s317
          %s319 = smul.u32 %s26, 2
          %s320 = ssub.s32 %s319, 1
          %p321 = scmp.gt.s32.totalorder %s320, 0
          %s322 = scalar_select %p321, %s320, 0
          %s323 = smul.addr %s25, 16
          %s324 = sadd.s32 %s322, %s323
          %s325 = smul.addr %s324, 8
          %s326 = scalar_lea.vmem %s1, %s325
          // Predicated region
          $region41: #{tpu_custom_call.1} parent=39 // pred_check
            _
          $region42: #{tpu_custom_call.1} parent=39 // pred_check_branch
            %328 = sbr.rel (0) target = $region44
          $region43: #{tpu_custom_call.1} parent=39 // pred_region
            // Predicated region
            $region45: #{tpu_custom_call.1} parent=43 // pred_check
              _
            $region46: #{tpu_custom_call.1} parent=43 // pred_check_branch
              %330 = sbr.rel (0) target = $region48
            $region47: #{tpu_custom_call.1} parent=43 // pred_region
              // Predicated region
              $region60: #{tpu_custom_call.1} parent=47 // pred_check
                _
              $region61: #{tpu_custom_call.1} parent=47 // pred_check_branch
                %360 = sbr.rel (0) target = $region63
              $region62: #{tpu_custom_call.1} parent=47 // pred_region
                loop: start=0, step=1, limit=1
                $region64: #{tpu_custom_call.1} parent=62 // loop_pre_header
                  _
                $region65: #{tpu_custom_call.1} parent=62 // loop_header
                  %s362 = sphi 0, %s366
                  %p363 = scmp.ge.s32.totalorder %s362, 1
                  %s367 = sphi %s326, %s326
                  %s368 = sphi %s318, %s318
                $region66: #{tpu_custom_call.1} parent=62 // loop_header_branch
                  %365 = sbr.rel (%p363) target = $region70
                $region67: #{tpu_custom_call.1} parent=62 // loop_body
                  %v369 = vld [vmem:[%s367] sm:$0xff]
                  %370 = vst [vmem:[%s368] sm:$0xff] %v369
                  %v371 = vld [vmem:[%s367 + $0x10] sm:$0xff]
                  %372 = vst [vmem:[%s368 + $0x8] sm:$0xff] %v371
                  %v373 = vld [vmem:[%s367 + $0x20] sm:$0xff]
                  %374 = vst [vmem:[%s368 + $0x10] sm:$0xff] %v373
                  %v375 = vld [vmem:[%s367 + $0x30] sm:$0xff]
                  %376 = vst [vmem:[%s368 + $0x18] sm:$0xff] %v375
                  %v377 = vld [vmem:[%s367 + $0x40] sm:$0xff]
                  %378 = vst [vmem:[%s368 + $0x20] sm:$0xff] %v377
                  %v379 = vld [vmem:[%s367 + $0x50] sm:$0xff]
                  %380 = vst [vmem:[%s368 + $0x28] sm:$0xff] %v379
                  %v381 = vld [vmem:[%s367 + $0x60] sm:$0xff]
                  %382 = vst [vmem:[%s368 + $0x30] sm:$0xff] %v381
                  %v383 = vld [vmem:[%s367 + $0x70] sm:$0xff]
                  %384 = vst [vmem:[%s368 + $0x38] sm:$0xff] %v383
                $region68: #{tpu_custom_call.1} parent=62 // loop_footer
                  %s366 = sadd.s32 1, %s362
                $region69: #{tpu_custom_call.1} parent=62 // loop_footer_branch
                  %361 = sbr.rel target = $region65
                $region70: #{tpu_custom_call.1} parent=62 // loop_exit
                  _
              $region63: #{tpu_custom_call.1} parent=47 // pred_fallthru
                _
              // Predicated region
              $region71: #{tpu_custom_call.1} parent=47 // pred_check
                _
              $region72: #{tpu_custom_call.1} parent=47 // pred_check_branch
                %386 = sbr.rel target = $region74
              $region73: #{tpu_custom_call.1} parent=47 // pred_region
                _
              $region74: #{tpu_custom_call.1} parent=47 // pred_fallthru
                _
            $region48: #{tpu_custom_call.1} parent=43 // pred_fallthru
              _
            // Predicated region
            $region49: #{tpu_custom_call.1} parent=43 // pred_check
              _
            $region50: #{tpu_custom_call.1} parent=43 // pred_check_branch
              %332 = sbr.rel target = $region52
            $region51: #{tpu_custom_call.1} parent=43 // pred_region
              %s334 = ssub.s32 256, 1
              loop: start=0, step=1, limit=1
              $region53: #{tpu_custom_call.1} parent=51 // loop_pre_header
                _
              $region54: #{tpu_custom_call.1} parent=51 // loop_header
                %s336 = sphi 0, %s340
                %p337 = scmp.ge.s32.totalorder %s336, 1
                %s341 = sphi %s326, %s326
                %s342 = sphi %s318, %s318
              $region55: #{tpu_custom_call.1} parent=51 // loop_header_branch
                %339 = sbr.rel (%p337) target = $region59
              $region56: #{tpu_custom_call.1} parent=51 // loop_body
                %v343 = vld [vmem:[%s341] sm:%s334]
                %344 = vst [vmem:[%s342] sm:%s334] %v343
                %v345 = vld [vmem:[%s341 + $0x10] sm:%s334]
                %346 = vst [vmem:[%s342 + $0x8] sm:%s334] %v345
                %v347 = vld [vmem:[%s341 + $0x20] sm:%s334]
                %348 = vst [vmem:[%s342 + $0x10] sm:%s334] %v347
                %v349 = vld [vmem:[%s341 + $0x30] sm:%s334]
                %350 = vst [vmem:[%s342 + $0x18] sm:%s334] %v349
                %v351 = vld [vmem:[%s341 + $0x40] sm:%s334]
                %352 = vst [vmem:[%s342 + $0x20] sm:%s334] %v351
                %v353 = vld [vmem:[%s341 + $0x50] sm:%s334]
                %354 = vst [vmem:[%s342 + $0x28] sm:%s334] %v353
                %v355 = vld [vmem:[%s341 + $0x60] sm:%s334]
                %356 = vst [vmem:[%s342 + $0x30] sm:%s334] %v355
                %v357 = vld [vmem:[%s341 + $0x70] sm:%s334]
                %358 = vst [vmem:[%s342 + $0x38] sm:%s334] %v357
              $region57: #{tpu_custom_call.1} parent=51 // loop_footer
                %s340 = sadd.s32 1, %s336
              $region58: #{tpu_custom_call.1} parent=51 // loop_footer_branch
                %335 = sbr.rel target = $region54
              $region59: #{tpu_custom_call.1} parent=51 // loop_exit
                _
            $region52: #{tpu_custom_call.1} parent=43 // pred_fallthru
              _
          $region44: #{tpu_custom_call.1} parent=39 // pred_fallthru
            _
          %387 = vnop
        $region40: #{tpu_custom_call.1} parent=31 // pred_fallthru
          _
        // Predicated region
        $region75: #{tpu_custom_call.1} parent=31 // pred_check
          %p388 = pneg %p124
        $region76: #{tpu_custom_call.1} parent=31 // pred_check_branch
          %390 = sbr.rel (%p388) target = $region78
        $region77: #{tpu_custom_call.1} parent=31 // pred_region
          %s391 = sand.u32 %s114, 1
          %s392 = sand.u32 %s114, 1
          %s393 = smul.addr %s392, 64
          %s394 = scalar_lea.vmem [#allocation5], %s393
          %s395 = sadd.s32 %s26, 1
          %s396 = smul.u32 %s395, 2
          %p397 = scmp.lt.s32.totalorder %s396, 1
          %s398 = scalar_select %p397, %s396, 1
          %s399 = smul.addr %s25, 16
          %s400 = sadd.s32 %s398, %s399
          %s401 = smul.addr %s400, 8
          %s402 = scalar_lea.vmem %s2, %s401
          // Predicated region
          $region79: #{tpu_custom_call.1} parent=77 // pred_check
            _
          $region80: #{tpu_custom_call.1} parent=77 // pred_check_branch
            %404 = sbr.rel (0) target = $region82
          $region81: #{tpu_custom_call.1} parent=77 // pred_region
            // Predicated region
            $region83: #{tpu_custom_call.1} parent=81 // pred_check
              _
            $region84: #{tpu_custom_call.1} parent=81 // pred_check_branch
              %406 = sbr.rel (0) target = $region86
            $region85: #{tpu_custom_call.1} parent=81 // pred_region
              // Predicated region
              $region98: #{tpu_custom_call.1} parent=85 // pred_check
                _
              $region99: #{tpu_custom_call.1} parent=85 // pred_check_branch
                %436 = sbr.rel (0) target = $region101
              $region100: #{tpu_custom_call.1} parent=85 // pred_region
                loop: start=0, step=1, limit=1
                $region102: #{tpu_custom_call.1} parent=100 // loop_pre_header
                  _
                $region103: #{tpu_custom_call.1} parent=100 // loop_header
                  %s438 = sphi 0, %s442
                  %p439 = scmp.ge.s32.totalorder %s438, 1
                  %s443 = sphi %s402, %s402
                  %s444 = sphi %s394, %s394
                $region104: #{tpu_custom_call.1} parent=100 // loop_header_branch
                  %441 = sbr.rel (%p439) target = $region108
                $region105: #{tpu_custom_call.1} parent=100 // loop_body
                  %v445 = vld [vmem:[%s443] sm:$0xff]
                  %446 = vst [vmem:[%s444] sm:$0xff] %v445
                  %v447 = vld [vmem:[%s443 + $0x10] sm:$0xff]
                  %448 = vst [vmem:[%s444 + $0x8] sm:$0xff] %v447
                  %v449 = vld [vmem:[%s443 + $0x20] sm:$0xff]
                  %450 = vst [vmem:[%s444 + $0x10] sm:$0xff] %v449
                  %v451 = vld [vmem:[%s443 + $0x30] sm:$0xff]
                  %452 = vst [vmem:[%s444 + $0x18] sm:$0xff] %v451
                  %v453 = vld [vmem:[%s443 + $0x40] sm:$0xff]
                  %454 = vst [vmem:[%s444 + $0x20] sm:$0xff] %v453
                  %v455 = vld [vmem:[%s443 + $0x50] sm:$0xff]
                  %456 = vst [vmem:[%s444 + $0x28] sm:$0xff] %v455
                  %v457 = vld [vmem:[%s443 + $0x60] sm:$0xff]
                  %458 = vst [vmem:[%s444 + $0x30] sm:$0xff] %v457
                  %v459 = vld [vmem:[%s443 + $0x70] sm:$0xff]
                  %460 = vst [vmem:[%s444 + $0x38] sm:$0xff] %v459
                $region106: #{tpu_custom_call.1} parent=100 // loop_footer
                  %s442 = sadd.s32 1, %s438
                $region107: #{tpu_custom_call.1} parent=100 // loop_footer_branch
                  %437 = sbr.rel target = $region103
                $region108: #{tpu_custom_call.1} parent=100 // loop_exit
                  _
              $region101: #{tpu_custom_call.1} parent=85 // pred_fallthru
                _
              // Predicated region
              $region109: #{tpu_custom_call.1} parent=85 // pred_check
                _
              $region110: #{tpu_custom_call.1} parent=85 // pred_check_branch
                %462 = sbr.rel target = $region112
              $region111: #{tpu_custom_call.1} parent=85 // pred_region
                _
              $region112: #{tpu_custom_call.1} parent=85 // pred_fallthru
                _
            $region86: #{tpu_custom_call.1} parent=81 // pred_fallthru
              _
            // Predicated region
            $region87: #{tpu_custom_call.1} parent=81 // pred_check
              _
            $region88: #{tpu_custom_call.1} parent=81 // pred_check_branch
              %408 = sbr.rel target = $region90
            $region89: #{tpu_custom_call.1} parent=81 // pred_region
              %s410 = ssub.s32 256, 1
              loop: start=0, step=1, limit=1
              $region91: #{tpu_custom_call.1} parent=89 // loop_pre_header
                _
              $region92: #{tpu_custom_call.1} parent=89 // loop_header
                %s412 = sphi 0, %s416
                %p413 = scmp.ge.s32.totalorder %s412, 1
                %s417 = sphi %s402, %s402
                %s418 = sphi %s394, %s394
              $region93: #{tpu_custom_call.1} parent=89 // loop_header_branch
                %415 = sbr.rel (%p413) target = $region97
              $region94: #{tpu_custom_call.1} parent=89 // loop_body
                %v419 = vld [vmem:[%s417] sm:%s410]
                %420 = vst [vmem:[%s418] sm:%s410] %v419
                %v421 = vld [vmem:[%s417 + $0x10] sm:%s410]
                %422 = vst [vmem:[%s418 + $0x8] sm:%s410] %v421
                %v423 = vld [vmem:[%s417 + $0x20] sm:%s410]
                %424 = vst [vmem:[%s418 + $0x10] sm:%s410] %v423
                %v425 = vld [vmem:[%s417 + $0x30] sm:%s410]
                %426 = vst [vmem:[%s418 + $0x18] sm:%s410] %v425
                %v427 = vld [vmem:[%s417 + $0x40] sm:%s410]
                %428 = vst [vmem:[%s418 + $0x20] sm:%s410] %v427
                %v429 = vld [vmem:[%s417 + $0x50] sm:%s410]
                %430 = vst [vmem:[%s418 + $0x28] sm:%s410] %v429
                %v431 = vld [vmem:[%s417 + $0x60] sm:%s410]
                %432 = vst [vmem:[%s418 + $0x30] sm:%s410] %v431
                %v433 = vld [vmem:[%s417 + $0x70] sm:%s410]
                %434 = vst [vmem:[%s418 + $0x38] sm:%s410] %v433
              $region95: #{tpu_custom_call.1} parent=89 // loop_footer
                %s416 = sadd.s32 1, %s412
              $region96: #{tpu_custom_call.1} parent=89 // loop_footer_branch
                %411 = sbr.rel target = $region92
              $region97: #{tpu_custom_call.1} parent=89 // loop_exit
                _
            $region90: #{tpu_custom_call.1} parent=81 // pred_fallthru
              _
          $region82: #{tpu_custom_call.1} parent=77 // pred_fallthru
            _
          %463 = vnop
        $region78: #{tpu_custom_call.1} parent=31 // pred_fallthru
          _
        // Predicated region
        $region113: #{tpu_custom_call.1} parent=31 // pred_check
          %p464 = pneg %p150
        $region114: #{tpu_custom_call.1} parent=31 // pred_check_branch
          %466 = sbr.rel (%p464) target = $region116
        $region115: #{tpu_custom_call.1} parent=31 // pred_region
          %p467 = scmp.lt.s32.totalorder %s25, 1
          %s468 = scalar_select %p467, %s25, 1
          %s469 = smul.addr %s468, 8
          %s470 = smul.addr %s469, 8
          %s471 = scalar_lea.vmem %s3, %s470
        $region116: #{tpu_custom_call.1} parent=31 // pred_fallthru
          _
      $region32: #{tpu_custom_call.1} parent=5 // pred_fallthru
        _
      %p472 = scmp.le.s32.totalorder 1, %s18
      %p473 = scmp.lt.s32.totalorder %s18, 3
      %p474 = pnand %p472, %p473
      %p475 = pneg %p474
      // Predicated region
      $region117: #{tpu_custom_call.1} parent=5 // pred_check
        _
      $region118: #{tpu_custom_call.1} parent=5 // pred_check_branch
        %477 = sbr.rel (%p474) target = $region120
      $region119: #{tpu_custom_call.1} parent=5 // pred_region
        %s478 = ssub.s32 %s18, 1
        %s479 = sand.u32 %s81, 1
        %s480 = sand.u32 %s81, 1
        %s481 = smul.addr %s480, 64
        %s482 = scalar_lea.vmem [#allocation4], %s481
        // Predicated region
        $region121: #{tpu_custom_call.1} parent=119 // pred_check
          %p483 = pneg %p94
        $region122: #{tpu_custom_call.1} parent=119 // pred_check_branch
          %485 = sbr.rel (%p483) target = $region124
        $region123: #{tpu_custom_call.1} parent=119 // pred_region
          _
        $region124: #{tpu_custom_call.1} parent=119 // pred_fallthru
          _
        %s486 = sand.u32 %s117, 1
        %s487 = sand.u32 %s117, 1
        %s488 = smul.addr %s487, 64
        %s489 = scalar_lea.vmem [#allocation5], %s488
        // Predicated region
        $region125: #{tpu_custom_call.1} parent=119 // pred_check
          %p490 = pneg %p130
        $region126: #{tpu_custom_call.1} parent=119 // pred_check_branch
          %492 = sbr.rel (%p490) target = $region128
        $region127: #{tpu_custom_call.1} parent=119 // pred_region
          _
        $region128: #{tpu_custom_call.1} parent=119 // pred_fallthru
          _
        %s493 = smul.u32 2, %s28
        %p494 = scmp.lt.s32.totalorder %s27, 1
        %s495 = scalar_select %p494, %s27, 1
        %p496 = scmp.lt.s32.totalorder %s493, 1
        %s497 = scalar_select %p496, %s493, 1
        %s498 = smul.addr %s495, 16
        %s499 = sadd.s32 %s497, %s498
        %s500 = smul.addr %s499, 8
        %s501 = scalar_lea.vmem %s0, %s500
        %p502 = pneg %p58
        %p503 = pneg %p55
        %s504 = sand.u32 %s81, 1
        %s505 = sand.u32 %s81, 1
        %s506 = smul.addr %s505, 64
        %s507 = scalar_lea.vmem [#allocation4], %s506
        %p508 = pneg %p94
        %p509 = pneg %p91
        %s510 = sand.u32 %s117, 1
        %s511 = sand.u32 %s117, 1
        %s512 = smul.addr %s511, 64
        %s513 = scalar_lea.vmem [#allocation5], %s512
        %p514 = pneg %p130
        %p515 = pneg %p127
        %p516 = scmp.lt.s32.totalorder %s27, 1
        %s517 = scalar_select %p516, %s27, 1
        %s518 = smul.addr %s517, 8
        %s519 = smul.addr %s518, 8
        %s520 = scalar_lea.vmem %s3, %s519
        %p521 = pneg %p156
        %p522 = pneg %p153
        %p523 = pneg %p177
        %p524 = pneg %p174
        %p525 = pneg %p198
        %p526 = pneg %p195
        %p527 = pneg %p219
        %p528 = pneg %p216
        %p529 = pneg %p240
        %p530 = pneg %p237
        %p531 = pneg %p268
        %p532 = pneg %p265
        %s533 = sand.u32 %s255, 1
        %s534 = scalar_lea.sflag [#allocation7], %s533
        %s535 = sand.u32 %s255, 1
        %s536 = smul.addr %s535, 128
        %s537 = scalar_lea.vmem [#allocation6], %s536
        %s538 = smul.u32 2, %s28
        %p539 = scmp.lt.s32.totalorder %s27, 1
        %s540 = scalar_select %p539, %s27, 1
        %p541 = scmp.lt.s32.totalorder %s538, 1
        %s542 = scalar_select %p541, %s538, 1
        %s543 = smul.addr %s540, 16
        %s544 = sadd.s32 %s542, %s543
        %s545 = smul.addr %s544, 8
        %s546 = scalar_lea.vmem %s0, %s545
        %s547 = smul.u32 2, %s28
        %s548 = smul.u32 %s28, 2
        %s549 = ssub.s32 %s548, 1
        %p550 = scmp.gt.s32.totalorder %s549, 0
        %s551 = scalar_select %p550, %s549, 0
        %s552 = sadd.s32 %s28, 1
        %s553 = smul.u32 %s552, 2
        %p554 = scmp.lt.s32.totalorder %s553, 1
        %s555 = scalar_select %p554, %s553, 1
        %p556 = scmp.lt.s32.totalorder %s27, 1
        %s557 = scalar_select %p556, %s27, 1
        %s558 = smul.addr %s557, 8
        %s559 = smul.addr %s558, 8
        %s560 = scalar_lea.vmem %s3, %s559
        %s561 = smul.u32 2, %s28
        %s562 = smul.u32 %s28, 16
        %v563 = vld [vmem:[%s546] sm:$0xff]
        %v564 = vld [vmem:[%s546 + $0x8] sm:$0xff]
        %v565 = vld [vmem:[%s546 + $0x10] sm:$0xff]
        %v566 = vld [vmem:[%s546 + $0x18] sm:$0xff]
        %v567 = vld [vmem:[%s546 + $0x20] sm:$0xff]
        %v568 = vld [vmem:[%s546 + $0x28] sm:$0xff]
        %v569 = vld [vmem:[%s546 + $0x30] sm:$0xff]
        %v570 = vld [vmem:[%s546 + $0x38] sm:$0xff]
        %v571 = vld [vmem:[%s546 + $0x40] sm:$0xff]
        %v572 = vld [vmem:[%s546 + $0x48] sm:$0xff]
        %v573 = vld [vmem:[%s546 + $0x50] sm:$0xff]
        %v574 = vld [vmem:[%s546 + $0x58] sm:$0xff]
        %v575 = vld [vmem:[%s546 + $0x60] sm:$0xff]
        %v576 = vld [vmem:[%s546 + $0x68] sm:$0xff]
        %v577 = vld [vmem:[%s546 + $0x70] sm:$0xff]
        %v578 = vld [vmem:[%s546 + $0x78] sm:$0xff]
        %v579 = vld [vmem:[%s560] sm:$0xff]
        %v580 = vld [vmem:[%s560 + $0x8] sm:$0xff]
        %v581 = vld [vmem:[%s560 + $0x10] sm:$0xff]
        %v582 = vld [vmem:[%s560 + $0x18] sm:$0xff]
        %v583 = vld [vmem:[%s560 + $0x20] sm:$0xff]
        %v584 = vld [vmem:[%s560 + $0x28] sm:$0xff]
        %v585 = vld [vmem:[%s560 + $0x30] sm:$0xff]
        %v586 = vld [vmem:[%s560 + $0x38] sm:$0xff]
        %588 = vset.pattern.permute.xlu0 0
        %589 = vperm.xlu0 %588, %v579
        %v590 = vpop.permute.xlu0 %589
        %593 = vset.pattern.permute.xlu0 0
        %594 = vperm.xlu0 %593, %v580
        %v595 = vpop.permute.xlu0 %594
        %598 = vset.pattern.permute.xlu0 0
        %599 = vperm.xlu0 %598, %v581
        %v600 = vpop.permute.xlu0 %599
        %603 = vset.pattern.permute.xlu0 0
        %604 = vperm.xlu0 %603, %v582
        %v605 = vpop.permute.xlu0 %604
        %608 = vset.pattern.permute.xlu0 0
        %609 = vperm.xlu0 %608, %v583
        %v610 = vpop.permute.xlu0 %609
        %613 = vset.pattern.permute.xlu0 0
        %614 = vperm.xlu0 %613, %v584
        %v615 = vpop.permute.xlu0 %614
        %618 = vset.pattern.permute.xlu0 0
        %619 = vperm.xlu0 %618, %v585
        %v620 = vpop.permute.xlu0 %619
        %623 = vset.pattern.permute.xlu0 0
        %624 = vperm.xlu0 %623, %v586
        %v625 = vpop.permute.xlu0 %624
        %v627 = vld [vmem:[%s4] sm:$0xff]
        %v628 = vld [vmem:[%s4 + $0x8] sm:$0xff]
        %v629 = vld [vmem:[%s4 + $0x10] sm:$0xff]
        %v630 = vld [vmem:[%s4 + $0x18] sm:$0xff]
        %v631 = vld [vmem:[%s4 + $0x20] sm:$0xff]
        %v632 = vld [vmem:[%s4 + $0x28] sm:$0xff]
        %v633 = vld [vmem:[%s4 + $0x30] sm:$0xff]
        %v634 = vld [vmem:[%s4 + $0x38] sm:$0xff]
        %vm635 = vcmask 523264
        %v637 = vsel %vm635, %v627, 0
        %v640 = vsel %vm635, %v628, 0
        %v643 = vsel %vm635, %v629, 0
        %v646 = vsel %vm635, %v630, 0
        %v649 = vsel %vm635, %v631, 0
        %v652 = vsel %vm635, %v632, 0
        %v655 = vsel %vm635, %v633, 0
        %v658 = vsel %vm635, %v634, 0
        %660 = vmatprep.subr.mxu0 0.0
        %661 = vmatpush1.msra.mxu0 0.0
        %662 = vmatprep.subr.mxu0 0.0
        %663 = vmatpush1.msra.mxu0 0.0
        %664 = vmatprep.subr.mxu0 0.0
        %665 = vmatpush1.msra.mxu0 0.0
        %666 = vmatprep.subr.mxu0 0.0
        %667 = vmatpush1.msra.mxu0 0.0
        %668 = vmatprep.subr.mxu0 0.0
        %669 = vmatpush1.msra.mxu0 0.0
        %670 = vmatprep.subr.mxu0 0.0
        %671 = vmatpush1.msra.mxu0 0.0
        %672 = vmatprep.subr.mxu0 0.0
        %673 = vmatpush1.msra.mxu0 0.0
        %674 = vmatprep.subr.mxu0 0.0
        %675 = vmatpush1.msra.mxu0 0.0
        %676 = vmatprep.subr.mxu0 0.0
        %677 = vmatpush1.msra.mxu0 %v625
        %678 = vmatprep.subr.mxu0 0.0
        %679 = vmatpush1.msra.mxu0 %v620
        %680 = vmatprep.subr.mxu0 0.0
        %681 = vmatpush1.msra.mxu0 %v615
        %682 = vmatprep.subr.mxu0 0.0
        %683 = vmatpush1.msra.mxu0 %v610
        %684 = vmatprep.subr.mxu0 0.0
        %685 = vmatpush1.msra.mxu0 %v605
        %686 = vmatprep.subr.mxu0 0.0
        %687 = vmatpush1.msra.mxu0 %v600
        %688 = vmatprep.subr.mxu0 0.0
        %689 = vmatpush1.msra.mxu0 %v595
        %690 = vmatprep.subr.mxu0 0.0
        %691 = vmatpush1.msra.mxu0 %v590
        %692 = vmatprep.subr.mxu0 0.0
        %693 = vmatpush2.msra.mxu0 0.0
        %694 = vmatprep.subr.mxu0 0.0
        %695 = vmatpush2.msra.mxu0 0.0
        %696 = vmatprep.subr.mxu0 0.0
        %697 = vmatpush2.msra.mxu0 0.0
        %698 = vmatprep.subr.mxu0 0.0
        %699 = vmatpush2.msra.mxu0 0.0
        %700 = vmatprep.subr.mxu0 0.0
        %701 = vmatpush2.msra.mxu0 0.0
        %702 = vmatprep.subr.mxu0 0.0
        %703 = vmatpush2.msra.mxu0 0.0
        %704 = vmatprep.subr.mxu0 0.0
        %705 = vmatpush2.msra.mxu0 0.0
        %706 = vmatprep.subr.mxu0 0.0
        %707 = vmatpush2.msra.mxu0 0.0
        %708 = vmatprep.subr.mxu0 0.0
        %709 = vmatpush2.msra.mxu0 0.0
        %710 = vmatprep.subr.mxu0 0.0
        %711 = vmatpush2.msra.mxu0 0.0
        %712 = vmatprep.subr.mxu0 0.0
        %713 = vmatpush2.msra.mxu0 0.0
        %714 = vmatprep.subr.mxu0 0.0
        %715 = vmatpush2.msra.mxu0 0.0
        %716 = vmatprep.subr.mxu0 0.0
        %717 = vmatpush2.msra.mxu0 0.0
        %718 = vmatprep.subr.mxu0 0.0
        %719 = vmatpush2.msra.mxu0 0.0
        %720 = vmatprep.subr.mxu0 0.0
        %721 = vmatpush2.msra.mxu0 0.0
        %722 = vmatprep.subr.mxu0 0.0
        %723 = vmatpush2.msra.mxu0 0.0
        %724 = vmatprep.mubr.f32.mxu0 0.0
        %725 = vmatmul.mubr.f32.gmra.mxu0 %v637
        %v726 = vpop.f32.mrf.mxu0
        %v727 = vadd.f32 0.0, %v726
        %v728 = vpop.f32.mrf.mxu0
        %729 = vmatprep.mubr.f32.mxu0 0.0
        %730 = vmatmul.mubr.f32.gmra.mxu0 %v640
        %v731 = vpop.f32.mrf.mxu0
        %v732 = vadd.f32 0.0, %v731
        %v733 = vpop.f32.mrf.mxu0
        %734 = vmatprep.mubr.f32.mxu0 0.0
        %735 = vmatmul.mubr.f32.gmra.mxu0 %v643
        %v736 = vpop.f32.mrf.mxu0
        %v737 = vadd.f32 0.0, %v736
        %v738 = vpop.f32.mrf.mxu0
        %739 = vmatprep.mubr.f32.mxu0 0.0
        %740 = vmatmul.mubr.f32.gmra.mxu0 %v646
        %v741 = vpop.f32.mrf.mxu0
        %v742 = vadd.f32 0.0, %v741
        %v743 = vpop.f32.mrf.mxu0
        %744 = vmatprep.mubr.f32.mxu0 0.0
        %745 = vmatmul.mubr.f32.gmra.mxu0 %v649
        %v746 = vpop.f32.mrf.mxu0
        %v747 = vadd.f32 0.0, %v746
        %v748 = vpop.f32.mrf.mxu0
        %749 = vmatprep.mubr.f32.mxu0 0.0
        %750 = vmatmul.mubr.f32.gmra.mxu0 %v652
        %v751 = vpop.f32.mrf.mxu0
        %v752 = vadd.f32 0.0, %v751
        %v753 = vpop.f32.mrf.mxu0
        %754 = vmatprep.mubr.f32.mxu0 0.0
        %755 = vmatmul.mubr.f32.gmra.mxu0 %v655
        %v756 = vpop.f32.mrf.mxu0
        %v757 = vadd.f32 0.0, %v756
        %v758 = vpop.f32.mrf.mxu0
        %759 = vmatprep.mubr.f32.mxu0 0.0
        %760 = vmatmul.mubr.f32.gmra.mxu0 %v658
        %v761 = vpop.f32.mrf.mxu0
        %v762 = vadd.f32 0.0, %v761
        %v763 = vpop.f32.mrf.mxu0
        %764 = vdwg.mxu0
        %v765 = vmul.f32 %v727, 0.1
        %v766 = vmul.f32 %v732, 0.1
        %v767 = vmul.f32 %v737, 0.1
        %v768 = vmul.f32 %v742, 0.1
        %v769 = vmul.f32 %v747, 0.1
        %v770 = vmul.f32 %v752, 0.1
        %v771 = vmul.f32 %v757, 0.1
        %v772 = vmul.f32 %v762, 0.1
        %v773 = vmax.f32 %v727, %v765
        %v774 = vmax.f32 %v732, %v766
        %v775 = vmax.f32 %v737, %v767
        %v776 = vmax.f32 %v742, %v768
        %v777 = vmax.f32 %v747, %v769
        %v778 = vmax.f32 %v752, %v770
        %v779 = vmax.f32 %v757, %v771
        %v780 = vmax.f32 %v762, %v772
        %v781 = vld [vmem:[%s5] sm:$0xff]
        %v782 = vld [vmem:[%s5 + $0x8] sm:$0xff]
        %v783 = vld [vmem:[%s5 + $0x10] sm:$0xff]
        %v784 = vld [vmem:[%s5 + $0x18] sm:$0xff]
        %v785 = vld [vmem:[%s5 + $0x20] sm:$0xff]
        %v786 = vld [vmem:[%s5 + $0x28] sm:$0xff]
        %v787 = vld [vmem:[%s5 + $0x30] sm:$0xff]
        %v788 = vld [vmem:[%s5 + $0x38] sm:$0xff]
        %v789 = vld [vmem:[%s5 + $0x40] sm:$0xff]
        %v790 = vld [vmem:[%s5 + $0x48] sm:$0xff]
        %v791 = vld [vmem:[%s5 + $0x50] sm:$0xff]
        %v792 = vld [vmem:[%s5 + $0x58] sm:$0xff]
        %v793 = vld [vmem:[%s5 + $0x60] sm:$0xff]
        %v794 = vld [vmem:[%s5 + $0x68] sm:$0xff]
        %v795 = vld [vmem:[%s5 + $0x70] sm:$0xff]
        %v796 = vld [vmem:[%s5 + $0x78] sm:$0xff]
        %v797 = vld [vmem:[%s5 + $0x80] sm:$0xff]
        %v798 = vld [vmem:[%s5 + $0x88] sm:$0xff]
        %v799 = vld [vmem:[%s5 + $0x90] sm:$0xff]
        %v800 = vld [vmem:[%s5 + $0x98] sm:$0xff]
        %v801 = vld [vmem:[%s5 + $0xa0] sm:$0xff]
        %v802 = vld [vmem:[%s5 + $0xa8] sm:$0xff]
        %v803 = vld [vmem:[%s5 + $0xb0] sm:$0xff]
        %v804 = vld [vmem:[%s5 + $0xb8] sm:$0xff]
        %v805 = vld [vmem:[%s5 + $0xc0] sm:$0xff]
        %v806 = vld [vmem:[%s5 + $0xc8] sm:$0xff]
        %v807 = vld [vmem:[%s5 + $0xd0] sm:$0xff]
        %v808 = vld [vmem:[%s5 + $0xd8] sm:$0xff]
        %v809 = vld [vmem:[%s5 + $0xe0] sm:$0xff]
        %v810 = vld [vmem:[%s5 + $0xe8] sm:$0xff]
        %v811 = vld [vmem:[%s5 + $0xf0] sm:$0xff]
        %v812 = vld [vmem:[%s5 + $0xf8] sm:$0xff]
        %v813 = vld [vmem:[%s5 + $0x100] sm:$0xff]
        %v814 = vld [vmem:[%s5 + $0x108] sm:$0xff]
        %v815 = vld [vmem:[%s5 + $0x110] sm:$0xff]
        %v816 = vld [vmem:[%s5 + $0x118] sm:$0xff]
        %v817 = vld [vmem:[%s5 + $0x120] sm:$0xff]
        %v818 = vld [vmem:[%s5 + $0x128] sm:$0xff]
        %v819 = vld [vmem:[%s5 + $0x130] sm:$0xff]
        %v820 = vld [vmem:[%s5 + $0x138] sm:$0xff]
        %v821 = vld [vmem:[%s5 + $0x140] sm:$0xff]
        %v822 = vld [vmem:[%s5 + $0x148] sm:$0xff]
        %v823 = vld [vmem:[%s5 + $0x150] sm:$0xff]
        %v824 = vld [vmem:[%s5 + $0x158] sm:$0xff]
        %v825 = vld [vmem:[%s5 + $0x160] sm:$0xff]
        %v826 = vld [vmem:[%s5 + $0x168] sm:$0xff]
        %v827 = vld [vmem:[%s5 + $0x170] sm:$0xff]
        %v828 = vld [vmem:[%s5 + $0x178] sm:$0xff]
        %v829 = vld [vmem:[%s5 + $0x180] sm:$0xff]
        %v830 = vld [vmem:[%s5 + $0x188] sm:$0xff]
        %v831 = vld [vmem:[%s5 + $0x190] sm:$0xff]
        %v832 = vld [vmem:[%s5 + $0x198] sm:$0xff]
        %v833 = vld [vmem:[%s5 + $0x1a0] sm:$0xff]
        %v834 = vld [vmem:[%s5 + $0x1a8] sm:$0xff]
        %v835 = vld [vmem:[%s5 + $0x1b0] sm:$0xff]
        %v836 = vld [vmem:[%s5 + $0x1b8] sm:$0xff]
        %v837 = vld [vmem:[%s5 + $0x1c0] sm:$0xff]
        %v838 = vld [vmem:[%s5 + $0x1c8] sm:$0xff]
        %v839 = vld [vmem:[%s5 + $0x1d0] sm:$0xff]
        %v840 = vld [vmem:[%s5 + $0x1d8] sm:$0xff]
        %v841 = vld [vmem:[%s5 + $0x1e0] sm:$0xff]
        %v842 = vld [vmem:[%s5 + $0x1e8] sm:$0xff]
        %v843 = vld [vmem:[%s5 + $0x1f0] sm:$0xff]
        %v844 = vld [vmem:[%s5 + $0x1f8] sm:$0xff]
        %v845 = vld [vmem:[%s5 + $0x200] sm:$0xff]
        %v846 = vld [vmem:[%s5 + $0x208] sm:$0xff]
        %v847 = vld [vmem:[%s5 + $0x210] sm:$0xff]
        %v848 = vld [vmem:[%s5 + $0x218] sm:$0xff]
        %v849 = vld [vmem:[%s5 + $0x220] sm:$0xff]
        %v850 = vld [vmem:[%s5 + $0x228] sm:$0xff]
        %v851 = vld [vmem:[%s5 + $0x230] sm:$0xff]
        %v852 = vld [vmem:[%s5 + $0x238] sm:$0xff]
        %v854 = vsel %vm635, %v781, 0
        %v857 = vsel %vm635, %v782, 0
        %v860 = vsel %vm635, %v783, 0
        %v863 = vsel %vm635, %v784, 0
        %v866 = vsel %vm635, %v785, 0
        %v869 = vsel %vm635, %v786, 0
        %v872 = vsel %vm635, %v787, 0
        %v875 = vsel %vm635, %v788, 0
        %v878 = vsel %vm635, %v789, 0
        %v881 = vsel %vm635, %v790, 0
        %v884 = vsel %vm635, %v791, 0
        %v887 = vsel %vm635, %v792, 0
        %v890 = vsel %vm635, %v793, 0
        %v893 = vsel %vm635, %v794, 0
        %v896 = vsel %vm635, %v795, 0
        %v899 = vsel %vm635, %v796, 0
        %v902 = vsel %vm635, %v797, 0
        %v905 = vsel %vm635, %v798, 0
        %v908 = vsel %vm635, %v799, 0
        %v911 = vsel %vm635, %v800, 0
        %v914 = vsel %vm635, %v801, 0
        %v917 = vsel %vm635, %v802, 0
        %v920 = vsel %vm635, %v803, 0
        %v923 = vsel %vm635, %v804, 0
        %v926 = vsel %vm635, %v805, 0
        %v929 = vsel %vm635, %v806, 0
        %v932 = vsel %vm635, %v807, 0
        %v935 = vsel %vm635, %v808, 0
        %v938 = vsel %vm635, %v809, 0
        %v941 = vsel %vm635, %v810, 0
        %v944 = vsel %vm635, %v811, 0
        %v947 = vsel %vm635, %v812, 0
        %v950 = vsel %vm635, %v813, 0
        %v953 = vsel %vm635, %v814, 0
        %v956 = vsel %vm635, %v815, 0
        %v959 = vsel %vm635, %v816, 0
        %v962 = vsel %vm635, %v817, 0
        %v965 = vsel %vm635, %v818, 0
        %v968 = vsel %vm635, %v819, 0
        %v971 = vsel %vm635, %v820, 0
        %v974 = vsel %vm635, %v821, 0
        %v977 = vsel %vm635, %v822, 0
        %v980 = vsel %vm635, %v823, 0
        %v983 = vsel %vm635, %v824, 0
        %v986 = vsel %vm635, %v825, 0
        %v989 = vsel %vm635, %v826, 0
        %v992 = vsel %vm635, %v827, 0
        %v995 = vsel %vm635, %v828, 0
        %v998 = vsel %vm635, %v829, 0
        %v1001 = vsel %vm635, %v830, 0
        %v1004 = vsel %vm635, %v831, 0
        %v1007 = vsel %vm635, %v832, 0
        %v1010 = vsel %vm635, %v833, 0
        %v1013 = vsel %vm635, %v834, 0
        %v1016 = vsel %vm635, %v835, 0
        %v1019 = vsel %vm635, %v836, 0
        %v1022 = vsel %vm635, %v837, 0
        %v1025 = vsel %vm635, %v838, 0
        %v1028 = vsel %vm635, %v839, 0
        %v1031 = vsel %vm635, %v840, 0
        %v1034 = vsel %vm635, %v841, 0
        %v1037 = vsel %vm635, %v842, 0
        %v1040 = vsel %vm635, %v843, 0
        %v1043 = vsel %vm635, %v844, 0
        %v1046 = vsel %vm635, %v845, 0
        %v1049 = vsel %vm635, %v846, 0
        %v1052 = vsel %vm635, %v847, 0
        %v1055 = vsel %vm635, %v848, 0
        %v1058 = vsel %vm635, %v849, 0
        %v1061 = vsel %vm635, %v850, 0
        %v1064 = vsel %vm635, %v851, 0
        %v1067 = vsel %vm635, %v852, 0
        %1069 = vmatprep.subr.mxu0 0.0
        %1070 = vmatpush1.msra.mxu0 0.0
        %1071 = vmatprep.subr.mxu0 0.0
        %1072 = vmatpush1.msra.mxu0 0.0
        %1073 = vmatprep.subr.mxu0 0.0
        %1074 = vmatpush1.msra.mxu0 0.0
        %1075 = vmatprep.subr.mxu0 0.0
        %1076 = vmatpush1.msra.mxu0 0.0
        %1077 = vmatprep.subr.mxu0 0.0
        %1078 = vmatpush1.msra.mxu0 0.0
        %1079 = vmatprep.subr.mxu0 0.0
        %1080 = vmatpush1.msra.mxu0 0.0
        %1081 = vmatprep.subr.mxu0 0.0
        %1082 = vmatpush1.msra.mxu0 0.0
        %1083 = vmatprep.subr.mxu0 0.0
        %1084 = vmatpush1.msra.mxu0 0.0
        %1085 = vmatprep.subr.mxu0 0.0
        %1086 = vmatpush1.msra.mxu0 %v780
        %1087 = vmatprep.subr.mxu0 0.0
        %1088 = vmatpush1.msra.mxu0 %v779
        %1089 = vmatprep.subr.mxu0 0.0
        %1090 = vmatpush1.msra.mxu0 %v778
        %1091 = vmatprep.subr.mxu0 0.0
        %1092 = vmatpush1.msra.mxu0 %v777
        %1093 = vmatprep.subr.mxu0 0.0
        %1094 = vmatpush1.msra.mxu0 %v776
        %1095 = vmatprep.subr.mxu0 0.0
        %1096 = vmatpush1.msra.mxu0 %v775
        %1097 = vmatprep.subr.mxu0 0.0
        %1098 = vmatpush1.msra.mxu0 %v774
        %1099 = vmatprep.subr.mxu0 0.0
        %1100 = vmatpush1.msra.mxu0 %v773
        %1101 = vmatprep.subr.mxu0 0.0
        %1102 = vmatpush2.msra.mxu0 0.0
        %1103 = vmatprep.subr.mxu0 0.0
        %1104 = vmatpush2.msra.mxu0 0.0
        %1105 = vmatprep.subr.mxu0 0.0
        %1106 = vmatpush2.msra.mxu0 0.0
        %1107 = vmatprep.subr.mxu0 0.0
        %1108 = vmatpush2.msra.mxu0 0.0
        %1109 = vmatprep.subr.mxu0 0.0
        %1110 = vmatpush2.msra.mxu0 0.0
        %1111 = vmatprep.subr.mxu0 0.0
        %1112 = vmatpush2.msra.mxu0 0.0
        %1113 = vmatprep.subr.mxu0 0.0
        %1114 = vmatpush2.msra.mxu0 0.0
        %1115 = vmatprep.subr.mxu0 0.0
        %1116 = vmatpush2.msra.mxu0 0.0
        %1117 = vmatprep.subr.mxu0 0.0
        %1118 = vmatpush2.msra.mxu0 0.0
        %1119 = vmatprep.subr.mxu0 0.0
        %1120 = vmatpush2.msra.mxu0 0.0
        %1121 = vmatprep.subr.mxu0 0.0
        %1122 = vmatpush2.msra.mxu0 0.0
        %1123 = vmatprep.subr.mxu0 0.0
        %1124 = vmatpush2.msra.mxu0 0.0
        %1125 = vmatprep.subr.mxu0 0.0
        %1126 = vmatpush2.msra.mxu0 0.0
        %1127 = vmatprep.subr.mxu0 0.0
        %1128 = vmatpush2.msra.mxu0 0.0
        %1129 = vmatprep.subr.mxu0 0.0
        %1130 = vmatpush2.msra.mxu0 0.0
        %1131 = vmatprep.subr.mxu0 0.0
        %1132 = vmatpush2.msra.mxu0 0.0
        %1133 = vmatprep.mubr.f32.mxu0 0.0
        %1134 = vmatmul.mubr.f32.gmra.mxu0 %v854
        %v1135 = vpop.f32.mrf.mxu0
        %v1136 = vadd.f32 0.0, %v1135
        %v1137 = vpop.f32.mrf.mxu0
        %1138 = vmatprep.mubr.f32.mxu0 0.0
        %1139 = vmatmul.mubr.f32.gmra.mxu0 %v857
        %v1140 = vpop.f32.mrf.mxu0
        %v1141 = vadd.f32 0.0, %v1140
        %v1142 = vpop.f32.mrf.mxu0
        %1143 = vmatprep.mubr.f32.mxu0 0.0
        %1144 = vmatmul.mubr.f32.gmra.mxu0 %v860
        %v1145 = vpop.f32.mrf.mxu0
        %v1146 = vadd.f32 0.0, %v1145
        %v1147 = vpop.f32.mrf.mxu0
        %1148 = vmatprep.mubr.f32.mxu0 0.0
        %1149 = vmatmul.mubr.f32.gmra.mxu0 %v863
        %v1150 = vpop.f32.mrf.mxu0
        %v1151 = vadd.f32 0.0, %v1150
        %v1152 = vpop.f32.mrf.mxu0
        %1153 = vmatprep.mubr.f32.mxu0 0.0
        %1154 = vmatmul.mubr.f32.gmra.mxu0 %v866
        %v1155 = vpop.f32.mrf.mxu0
        %v1156 = vadd.f32 0.0, %v1155
        %v1157 = vpop.f32.mrf.mxu0
        %1158 = vmatprep.mubr.f32.mxu0 0.0
        %1159 = vmatmul.mubr.f32.gmra.mxu0 %v869
        %v1160 = vpop.f32.mrf.mxu0
        %v1161 = vadd.f32 0.0, %v1160
        %v1162 = vpop.f32.mrf.mxu0
        %1163 = vmatprep.mubr.f32.mxu0 0.0
        %1164 = vmatmul.mubr.f32.gmra.mxu0 %v872
        %v1165 = vpop.f32.mrf.mxu0
        %v1166 = vadd.f32 0.0, %v1165
        %v1167 = vpop.f32.mrf.mxu0
        %1168 = vmatprep.mubr.f32.mxu0 0.0
        %1169 = vmatmul.mubr.f32.gmra.mxu0 %v875
        %v1170 = vpop.f32.mrf.mxu0
        %v1171 = vadd.f32 0.0, %v1170
        %v1172 = vpop.f32.mrf.mxu0
        %1173 = vmatprep.mubr.f32.mxu0 0.0
        %1174 = vmatmul.mubr.f32.gmra.mxu0 %v878
        %v1175 = vpop.f32.mrf.mxu0
        %v1176 = vadd.f32 0.0, %v1175
        %v1177 = vpop.f32.mrf.mxu0
        %1178 = vmatprep.mubr.f32.mxu0 0.0
        %1179 = vmatmul.mubr.f32.gmra.mxu0 %v881
        %v1180 = vpop.f32.mrf.mxu0
        %v1181 = vadd.f32 0.0, %v1180
        %v1182 = vpop.f32.mrf.mxu0
        %1183 = vmatprep.mubr.f32.mxu0 0.0
        %1184 = vmatmul.mubr.f32.gmra.mxu0 %v884
        %v1185 = vpop.f32.mrf.mxu0
        %v1186 = vadd.f32 0.0, %v1185
        %v1187 = vpop.f32.mrf.mxu0
        %1188 = vmatprep.mubr.f32.mxu0 0.0
        %1189 = vmatmul.mubr.f32.gmra.mxu0 %v887
        %v1190 = vpop.f32.mrf.mxu0
        %v1191 = vadd.f32 0.0, %v1190
        %v1192 = vpop.f32.mrf.mxu0
        %1193 = vmatprep.mubr.f32.mxu0 0.0
        %1194 = vmatmul.mubr.f32.gmra.mxu0 %v890
        %v1195 = vpop.f32.mrf.mxu0
        %v1196 = vadd.f32 0.0, %v1195
        %v1197 = vpop.f32.mrf.mxu0
        %1198 = vmatprep.mubr.f32.mxu0 0.0
        %1199 = vmatmul.mubr.f32.gmra.mxu0 %v893
        %v1200 = vpop.f32.mrf.mxu0
        %v1201 = vadd.f32 0.0, %v1200
        %v1202 = vpop.f32.mrf.mxu0
        %1203 = vmatprep.mubr.f32.mxu0 0.0
        %1204 = vmatmul.mubr.f32.gmra.mxu0 %v896
        %v1205 = vpop.f32.mrf.mxu0
        %v1206 = vadd.f32 0.0, %v1205
        %v1207 = vpop.f32.mrf.mxu0
        %1208 = vmatprep.mubr.f32.mxu0 0.0
        %1209 = vmatmul.mubr.f32.gmra.mxu0 %v899
        %v1210 = vpop.f32.mrf.mxu0
        %v1211 = vadd.f32 0.0, %v1210
        %v1212 = vpop.f32.mrf.mxu0
        %1213 = vmatprep.mubr.f32.mxu0 0.0
        %1214 = vmatmul.mubr.f32.gmra.mxu0 %v902
        %v1215 = vpop.f32.mrf.mxu0
        %v1216 = vadd.f32 0.0, %v1215
        %v1217 = vpop.f32.mrf.mxu0
        %1218 = vmatprep.mubr.f32.mxu0 0.0
        %1219 = vmatmul.mubr.f32.gmra.mxu0 %v905
        %v1220 = vpop.f32.mrf.mxu0
        %v1221 = vadd.f32 0.0, %v1220
        %v1222 = vpop.f32.mrf.mxu0
        %1223 = vmatprep.mubr.f32.mxu0 0.0
        %1224 = vmatmul.mubr.f32.gmra.mxu0 %v908
        %v1225 = vpop.f32.mrf.mxu0
        %v1226 = vadd.f32 0.0, %v1225
        %v1227 = vpop.f32.mrf.mxu0
        %1228 = vmatprep.mubr.f32.mxu0 0.0
        %1229 = vmatmul.mubr.f32.gmra.mxu0 %v911
        %v1230 = vpop.f32.mrf.mxu0
        %v1231 = vadd.f32 0.0, %v1230
        %v1232 = vpop.f32.mrf.mxu0
        %1233 = vmatprep.mubr.f32.mxu0 0.0
        %1234 = vmatmul.mubr.f32.gmra.mxu0 %v914
        %v1235 = vpop.f32.mrf.mxu0
        %v1236 = vadd.f32 0.0, %v1235
        %v1237 = vpop.f32.mrf.mxu0
        %1238 = vmatprep.mubr.f32.mxu0 0.0
        %1239 = vmatmul.mubr.f32.gmra.mxu0 %v917
        %v1240 = vpop.f32.mrf.mxu0
        %v1241 = vadd.f32 0.0, %v1240
        %v1242 = vpop.f32.mrf.mxu0
        %1243 = vmatprep.mubr.f32.mxu0 0.0
        %1244 = vmatmul.mubr.f32.gmra.mxu0 %v920
        %v1245 = vpop.f32.mrf.mxu0
        %v1246 = vadd.f32 0.0, %v1245
        %v1247 = vpop.f32.mrf.mxu0
        %1248 = vmatprep.mubr.f32.mxu0 0.0
        %1249 = vmatmul.mubr.f32.gmra.mxu0 %v923
        %v1250 = vpop.f32.mrf.mxu0
        %v1251 = vadd.f32 0.0, %v1250
        %v1252 = vpop.f32.mrf.mxu0
        %1253 = vmatprep.mubr.f32.mxu0 0.0
        %1254 = vmatmul.mubr.f32.gmra.mxu0 %v926
        %v1255 = vpop.f32.mrf.mxu0
        %v1256 = vadd.f32 0.0, %v1255
        %v1257 = vpop.f32.mrf.mxu0
        %1258 = vmatprep.mubr.f32.mxu0 0.0
        %1259 = vmatmul.mubr.f32.gmra.mxu0 %v929
        %v1260 = vpop.f32.mrf.mxu0
        %v1261 = vadd.f32 0.0, %v1260
        %v1262 = vpop.f32.mrf.mxu0
        %1263 = vmatprep.mubr.f32.mxu0 0.0
        %1264 = vmatmul.mubr.f32.gmra.mxu0 %v932
        %v1265 = vpop.f32.mrf.mxu0
        %v1266 = vadd.f32 0.0, %v1265
        %v1267 = vpop.f32.mrf.mxu0
        %1268 = vmatprep.mubr.f32.mxu0 0.0
        %1269 = vmatmul.mubr.f32.gmra.mxu0 %v935
        %v1270 = vpop.f32.mrf.mxu0
        %v1271 = vadd.f32 0.0, %v1270
        %v1272 = vpop.f32.mrf.mxu0
        %1273 = vmatprep.mubr.f32.mxu0 0.0
        %1274 = vmatmul.mubr.f32.gmra.mxu0 %v938
        %v1275 = vpop.f32.mrf.mxu0
        %v1276 = vadd.f32 0.0, %v1275
        %v1277 = vpop.f32.mrf.mxu0
        %1278 = vmatprep.mubr.f32.mxu0 0.0
        %1279 = vmatmul.mubr.f32.gmra.mxu0 %v941
        %v1280 = vpop.f32.mrf.mxu0
        %v1281 = vadd.f32 0.0, %v1280
        %v1282 = vpop.f32.mrf.mxu0
        %1283 = vmatprep.mubr.f32.mxu0 0.0
        %1284 = vmatmul.mubr.f32.gmra.mxu0 %v944
        %v1285 = vpop.f32.mrf.mxu0
        %v1286 = vadd.f32 0.0, %v1285
        %v1287 = vpop.f32.mrf.mxu0
        %1288 = vmatprep.mubr.f32.mxu0 0.0
        %1289 = vmatmul.mubr.f32.gmra.mxu0 %v947
        %v1290 = vpop.f32.mrf.mxu0
        %v1291 = vadd.f32 0.0, %v1290
        %v1292 = vpop.f32.mrf.mxu0
        %1293 = vmatprep.mubr.f32.mxu0 0.0
        %1294 = vmatmul.mubr.f32.gmra.mxu0 %v950
        %v1295 = vpop.f32.mrf.mxu0
        %v1296 = vadd.f32 0.0, %v1295
        %v1297 = vpop.f32.mrf.mxu0
        %1298 = vmatprep.mubr.f32.mxu0 0.0
        %1299 = vmatmul.mubr.f32.gmra.mxu0 %v953
        %v1300 = vpop.f32.mrf.mxu0
        %v1301 = vadd.f32 0.0, %v1300
        %v1302 = vpop.f32.mrf.mxu0
        %1303 = vmatprep.mubr.f32.mxu0 0.0
        %1304 = vmatmul.mubr.f32.gmra.mxu0 %v956
        %v1305 = vpop.f32.mrf.mxu0
        %v1306 = vadd.f32 0.0, %v1305
        %v1307 = vpop.f32.mrf.mxu0
        %1308 = vmatprep.mubr.f32.mxu0 0.0
        %1309 = vmatmul.mubr.f32.gmra.mxu0 %v959
        %v1310 = vpop.f32.mrf.mxu0
        %v1311 = vadd.f32 0.0, %v1310
        %v1312 = vpop.f32.mrf.mxu0
        %1313 = vmatprep.mubr.f32.mxu0 0.0
        %1314 = vmatmul.mubr.f32.gmra.mxu0 %v962
        %v1315 = vpop.f32.mrf.mxu0
        %v1316 = vadd.f32 0.0, %v1315
        %v1317 = vpop.f32.mrf.mxu0
        %1318 = vmatprep.mubr.f32.mxu0 0.0
        %1319 = vmatmul.mubr.f32.gmra.mxu0 %v965
        %v1320 = vpop.f32.mrf.mxu0
        %v1321 = vadd.f32 0.0, %v1320
        %v1322 = vpop.f32.mrf.mxu0
        %1323 = vmatprep.mubr.f32.mxu0 0.0
        %1324 = vmatmul.mubr.f32.gmra.mxu0 %v968
        %v1325 = vpop.f32.mrf.mxu0
        %v1326 = vadd.f32 0.0, %v1325
        %v1327 = vpop.f32.mrf.mxu0
        %1328 = vmatprep.mubr.f32.mxu0 0.0
        %1329 = vmatmul.mubr.f32.gmra.mxu0 %v971
        %v1330 = vpop.f32.mrf.mxu0
        %v1331 = vadd.f32 0.0, %v1330
        %v1332 = vpop.f32.mrf.mxu0
        %1333 = vmatprep.mubr.f32.mxu0 0.0
        %1334 = vmatmul.mubr.f32.gmra.mxu0 %v974
        %v1335 = vpop.f32.mrf.mxu0
        %v1336 = vadd.f32 0.0, %v1335
        %v1337 = vpop.f32.mrf.mxu0
        %1338 = vmatprep.mubr.f32.mxu0 0.0
        %1339 = vmatmul.mubr.f32.gmra.mxu0 %v977
        %v1340 = vpop.f32.mrf.mxu0
        %v1341 = vadd.f32 0.0, %v1340
        %v1342 = vpop.f32.mrf.mxu0
        %1343 = vmatprep.mubr.f32.mxu0 0.0
        %1344 = vmatmul.mubr.f32.gmra.mxu0 %v980
        %v1345 = vpop.f32.mrf.mxu0
        %v1346 = vadd.f32 0.0, %v1345
        %v1347 = vpop.f32.mrf.mxu0
        %1348 = vmatprep.mubr.f32.mxu0 0.0
        %1349 = vmatmul.mubr.f32.gmra.mxu0 %v983
        %v1350 = vpop.f32.mrf.mxu0
        %v1351 = vadd.f32 0.0, %v1350
        %v1352 = vpop.f32.mrf.mxu0
        %1353 = vmatprep.mubr.f32.mxu0 0.0
        %1354 = vmatmul.mubr.f32.gmra.mxu0 %v986
        %v1355 = vpop.f32.mrf.mxu0
        %v1356 = vadd.f32 0.0, %v1355
        %v1357 = vpop.f32.mrf.mxu0
        %1358 = vmatprep.mubr.f32.mxu0 0.0
        %1359 = vmatmul.mubr.f32.gmra.mxu0 %v989
        %v1360 = vpop.f32.mrf.mxu0
        %v1361 = vadd.f32 0.0, %v1360
        %v1362 = vpop.f32.mrf.mxu0
        %1363 = vmatprep.mubr.f32.mxu0 0.0
        %1364 = vmatmul.mubr.f32.gmra.mxu0 %v992
        %v1365 = vpop.f32.mrf.mxu0
        %v1366 = vadd.f32 0.0, %v1365
        %v1367 = vpop.f32.mrf.mxu0
        %1368 = vmatprep.mubr.f32.mxu0 0.0
        %1369 = vmatmul.mubr.f32.gmra.mxu0 %v995
        %v1370 = vpop.f32.mrf.mxu0
        %v1371 = vadd.f32 0.0, %v1370
        %v1372 = vpop.f32.mrf.mxu0
        %1373 = vmatprep.mubr.f32.mxu0 0.0
        %1374 = vmatmul.mubr.f32.gmra.mxu0 %v998
        %v1375 = vpop.f32.mrf.mxu0
        %v1376 = vadd.f32 0.0, %v1375
        %v1377 = vpop.f32.mrf.mxu0
        %1378 = vmatprep.mubr.f32.mxu0 0.0
        %1379 = vmatmul.mubr.f32.gmra.mxu0 %v1001
        %v1380 = vpop.f32.mrf.mxu0
        %v1381 = vadd.f32 0.0, %v1380
        %v1382 = vpop.f32.mrf.mxu0
        %1383 = vmatprep.mubr.f32.mxu0 0.0
        %1384 = vmatmul.mubr.f32.gmra.mxu0 %v1004
        %v1385 = vpop.f32.mrf.mxu0
        %v1386 = vadd.f32 0.0, %v1385
        %v1387 = vpop.f32.mrf.mxu0
        %1388 = vmatprep.mubr.f32.mxu0 0.0
        %1389 = vmatmul.mubr.f32.gmra.mxu0 %v1007
        %v1390 = vpop.f32.mrf.mxu0
        %v1391 = vadd.f32 0.0, %v1390
        %v1392 = vpop.f32.mrf.mxu0
        %1393 = vmatprep.mubr.f32.mxu0 0.0
        %1394 = vmatmul.mubr.f32.gmra.mxu0 %v1010
        %v1395 = vpop.f32.mrf.mxu0
        %v1396 = vadd.f32 0.0, %v1395
        %v1397 = vpop.f32.mrf.mxu0
        %1398 = vmatprep.mubr.f32.mxu0 0.0
        %1399 = vmatmul.mubr.f32.gmra.mxu0 %v1013
        %v1400 = vpop.f32.mrf.mxu0
        %v1401 = vadd.f32 0.0, %v1400
        %v1402 = vpop.f32.mrf.mxu0
        %1403 = vmatprep.mubr.f32.mxu0 0.0
        %1404 = vmatmul.mubr.f32.gmra.mxu0 %v1016
        %v1405 = vpop.f32.mrf.mxu0
        %v1406 = vadd.f32 0.0, %v1405
        %v1407 = vpop.f32.mrf.mxu0
        %1408 = vmatprep.mubr.f32.mxu0 0.0
        %1409 = vmatmul.mubr.f32.gmra.mxu0 %v1019
        %v1410 = vpop.f32.mrf.mxu0
        %v1411 = vadd.f32 0.0, %v1410
        %v1412 = vpop.f32.mrf.mxu0
        %1413 = vmatprep.mubr.f32.mxu0 0.0
        %1414 = vmatmul.mubr.f32.gmra.mxu0 %v1022
        %v1415 = vpop.f32.mrf.mxu0
        %v1416 = vadd.f32 0.0, %v1415
        %v1417 = vpop.f32.mrf.mxu0
        %1418 = vmatprep.mubr.f32.mxu0 0.0
        %1419 = vmatmul.mubr.f32.gmra.mxu0 %v1025
        %v1420 = vpop.f32.mrf.mxu0
        %v1421 = vadd.f32 0.0, %v1420
        %v1422 = vpop.f32.mrf.mxu0
        %1423 = vmatprep.mubr.f32.mxu0 0.0
        %1424 = vmatmul.mubr.f32.gmra.mxu0 %v1028
        %v1425 = vpop.f32.mrf.mxu0
        %v1426 = vadd.f32 0.0, %v1425
        %v1427 = vpop.f32.mrf.mxu0
        %1428 = vmatprep.mubr.f32.mxu0 0.0
        %1429 = vmatmul.mubr.f32.gmra.mxu0 %v1031
        %v1430 = vpop.f32.mrf.mxu0
        %v1431 = vadd.f32 0.0, %v1430
        %v1432 = vpop.f32.mrf.mxu0
        %1433 = vmatprep.mubr.f32.mxu0 0.0
        %1434 = vmatmul.mubr.f32.gmra.mxu0 %v1034
        %v1435 = vpop.f32.mrf.mxu0
        %v1436 = vadd.f32 0.0, %v1435
        %v1437 = vpop.f32.mrf.mxu0
        %1438 = vmatprep.mubr.f32.mxu0 0.0
        %1439 = vmatmul.mubr.f32.gmra.mxu0 %v1037
        %v1440 = vpop.f32.mrf.mxu0
        %v1441 = vadd.f32 0.0, %v1440
        %v1442 = vpop.f32.mrf.mxu0
        %1443 = vmatprep.mubr.f32.mxu0 0.0
        %1444 = vmatmul.mubr.f32.gmra.mxu0 %v1040
        %v1445 = vpop.f32.mrf.mxu0
        %v1446 = vadd.f32 0.0, %v1445
        %v1447 = vpop.f32.mrf.mxu0
        %1448 = vmatprep.mubr.f32.mxu0 0.0
        %1449 = vmatmul.mubr.f32.gmra.mxu0 %v1043
        %v1450 = vpop.f32.mrf.mxu0
        %v1451 = vadd.f32 0.0, %v1450
        %v1452 = vpop.f32.mrf.mxu0
        %1453 = vmatprep.mubr.f32.mxu0 0.0
        %1454 = vmatmul.mubr.f32.gmra.mxu0 %v1046
        %v1455 = vpop.f32.mrf.mxu0
        %v1456 = vadd.f32 0.0, %v1455
        %v1457 = vpop.f32.mrf.mxu0
        %1458 = vmatprep.mubr.f32.mxu0 0.0
        %1459 = vmatmul.mubr.f32.gmra.mxu0 %v1049
        %v1460 = vpop.f32.mrf.mxu0
        %v1461 = vadd.f32 0.0, %v1460
        %v1462 = vpop.f32.mrf.mxu0
        %1463 = vmatprep.mubr.f32.mxu0 0.0
        %1464 = vmatmul.mubr.f32.gmra.mxu0 %v1052
        %v1465 = vpop.f32.mrf.mxu0
        %v1466 = vadd.f32 0.0, %v1465
        %v1467 = vpop.f32.mrf.mxu0
        %1468 = vmatprep.mubr.f32.mxu0 0.0
        %1469 = vmatmul.mubr.f32.gmra.mxu0 %v1055
        %v1470 = vpop.f32.mrf.mxu0
        %v1471 = vadd.f32 0.0, %v1470
        %v1472 = vpop.f32.mrf.mxu0
        %1473 = vmatprep.mubr.f32.mxu0 0.0
        %1474 = vmatmul.mubr.f32.gmra.mxu0 %v1058
        %v1475 = vpop.f32.mrf.mxu0
        %v1476 = vadd.f32 0.0, %v1475
        %v1477 = vpop.f32.mrf.mxu0
        %1478 = vmatprep.mubr.f32.mxu0 0.0
        %1479 = vmatmul.mubr.f32.gmra.mxu0 %v1061
        %v1480 = vpop.f32.mrf.mxu0
        %v1481 = vadd.f32 0.0, %v1480
        %v1482 = vpop.f32.mrf.mxu0
        %1483 = vmatprep.mubr.f32.mxu0 0.0
        %1484 = vmatmul.mubr.f32.gmra.mxu0 %v1064
        %v1485 = vpop.f32.mrf.mxu0
        %v1486 = vadd.f32 0.0, %v1485
        %v1487 = vpop.f32.mrf.mxu0
        %1488 = vmatprep.mubr.f32.mxu0 0.0
        %1489 = vmatmul.mubr.f32.gmra.mxu0 %v1067
        %v1490 = vpop.f32.mrf.mxu0
        %v1491 = vadd.f32 0.0, %v1490
        %v1492 = vpop.f32.mrf.mxu0
        %1493 = vdwg.mxu0
        %v1494 = vld [vmem:[%s482] sm:$0xff]
        %v1495 = vld [vmem:[%s482 + $0x8] sm:$0xff]
        %v1496 = vld [vmem:[%s482 + $0x10] sm:$0xff]
        %v1497 = vld [vmem:[%s482 + $0x18] sm:$0xff]
        %v1498 = vld [vmem:[%s482 + $0x20] sm:$0xff]
        %v1499 = vld [vmem:[%s482 + $0x28] sm:$0xff]
        %v1500 = vld [vmem:[%s482 + $0x30] sm:$0xff]
        %v1501 = vld [vmem:[%s482 + $0x38] sm:$0xff]
        %v1502 = vld [vmem:[%s489] sm:$0xff]
        %v1503 = vld [vmem:[%s489 + $0x8] sm:$0xff]
        %v1504 = vld [vmem:[%s489 + $0x10] sm:$0xff]
        %v1505 = vld [vmem:[%s489 + $0x18] sm:$0xff]
        %v1506 = vld [vmem:[%s489 + $0x20] sm:$0xff]
        %v1507 = vld [vmem:[%s489 + $0x28] sm:$0xff]
        %v1508 = vld [vmem:[%s489 + $0x30] sm:$0xff]
        %v1509 = vld [vmem:[%s489 + $0x38] sm:$0xff]
        %p1510 = scmp.eq.s32.totalorder %s562, 0
        %s1511 = scalar_select %p1510, 1, 0
        %v1512 = vstv %s1511
        %vm1513 = vcmp.eq.s32.totalorder %v1512, 1
        %v1514 = vsel %vm1513, 0.0, %v1494
        %v1515 = vsel %vm1513, 0.0, %v1495
        %v1516 = vsel %vm1513, 0.0, %v1496
        %v1517 = vsel %vm1513, 0.0, %v1497
        %v1518 = vsel %vm1513, 0.0, %v1498
        %v1519 = vsel %vm1513, 0.0, %v1499
        %v1520 = vsel %vm1513, 0.0, %v1500
        %v1521 = vsel %vm1513, 0.0, %v1501
        %s1522 = sadd.s32 %s562, 16
        %p1523 = scmp.ge.s32.totalorder %s1522, 16
        %s1524 = scalar_select %p1523, 1, 0
        %v1525 = vstv %s1524
        %vm1526 = vcmp.eq.s32.totalorder %v1525, 1
        %v1527 = vsel %vm1526, 0.0, %v1502
        %v1528 = vsel %vm1526, 0.0, %v1503
        %v1529 = vsel %vm1526, 0.0, %v1504
        %v1530 = vsel %vm1526, 0.0, %v1505
        %v1531 = vsel %vm1526, 0.0, %v1506
        %v1532 = vsel %vm1526, 0.0, %v1507
        %v1533 = vsel %vm1526, 0.0, %v1508
        %v1534 = vsel %vm1526, 0.0, %v1509
        %1543 = vrot.lane.b32.xlu0 %v1514, 16
        %v1544 = vpop.permute.xlu0 %1543
        %1545 = vrot.lane.b32.xlu0 %v1515, 16
        %v1546 = vpop.permute.xlu0 %1545
        %1547 = vrot.lane.b32.xlu0 %v1516, 16
        %v1548 = vpop.permute.xlu0 %1547
        %1549 = vrot.lane.b32.xlu0 %v1517, 16
        %v1550 = vpop.permute.xlu0 %1549
        %1551 = vrot.lane.b32.xlu0 %v1518, 16
        %v1552 = vpop.permute.xlu0 %1551
        %1553 = vrot.lane.b32.xlu0 %v1519, 16
        %v1554 = vpop.permute.xlu0 %1553
        %1555 = vrot.lane.b32.xlu0 %v1520, 16
        %v1556 = vpop.permute.xlu0 %1555
        %1557 = vrot.lane.b32.xlu0 %v1521, 16
        %v1558 = vpop.permute.xlu0 %1557
        %vm1567 = vcmask 130048
        %1568 = vst.msk [vmem:[#allocation2] sm:$0xff] %vm1567, %v1544
        %1569 = vst.msk [vmem:[#allocation2 + $0x18] sm:$0xff] %vm1567, %v1546
        %1570 = vst.msk [vmem:[#allocation2 + $0x30] sm:$0xff] %vm1567, %v1548
        %1571 = vst.msk [vmem:[#allocation2 + $0x48] sm:$0xff] %vm1567, %v1550
        %1572 = vst.msk [vmem:[#allocation2 + $0x60] sm:$0xff] %vm1567, %v1552
        %1573 = vst.msk [vmem:[#allocation2 + $0x78] sm:$0xff] %vm1567, %v1554
        %1574 = vst.msk [vmem:[#allocation2 + $0x90] sm:$0xff] %vm1567, %v1556
        %1575 = vst.msk [vmem:[#allocation2 + $0xa8] sm:$0xff] %vm1567, %v1558
        %1592 = vrot.lane.b32.xlu0 %v563, 16
        %v1593 = vpop.permute.xlu0 %1592
        %1594 = vrot.lane.b32.xlu0 %v564, 16
        %v1595 = vpop.permute.xlu0 %1594
        %1596 = vrot.lane.b32.xlu0 %v565, 16
        %v1597 = vpop.permute.xlu0 %1596
        %1598 = vrot.lane.b32.xlu0 %v566, 16
        %v1599 = vpop.permute.xlu0 %1598
        %1600 = vrot.lane.b32.xlu0 %v567, 16
        %v1601 = vpop.permute.xlu0 %1600
        %1602 = vrot.lane.b32.xlu0 %v568, 16
        %v1603 = vpop.permute.xlu0 %1602
        %1604 = vrot.lane.b32.xlu0 %v569, 16
        %v1605 = vpop.permute.xlu0 %1604
        %1606 = vrot.lane.b32.xlu0 %v570, 16
        %v1607 = vpop.permute.xlu0 %1606
        %1608 = vrot.lane.b32.xlu0 %v571, 16
        %v1609 = vpop.permute.xlu0 %1608
        %1610 = vrot.lane.b32.xlu0 %v572, 16
        %v1611 = vpop.permute.xlu0 %1610
        %1612 = vrot.lane.b32.xlu0 %v573, 16
        %v1613 = vpop.permute.xlu0 %1612
        %1614 = vrot.lane.b32.xlu0 %v574, 16
        %v1615 = vpop.permute.xlu0 %1614
        %1616 = vrot.lane.b32.xlu0 %v575, 16
        %v1617 = vpop.permute.xlu0 %1616
        %1618 = vrot.lane.b32.xlu0 %v576, 16
        %v1619 = vpop.permute.xlu0 %1618
        %1620 = vrot.lane.b32.xlu0 %v577, 16
        %v1621 = vpop.permute.xlu0 %1620
        %1622 = vrot.lane.b32.xlu0 %v578, 16
        %v1623 = vpop.permute.xlu0 %1622
        %v1624 = vsel %vm1567, %v1593, %v1595
        %v1625 = vsel %vm1567, %v1597, %v1599
        %v1626 = vsel %vm1567, %v1601, %v1603
        %v1627 = vsel %vm1567, %v1605, %v1607
        %v1628 = vsel %vm1567, %v1609, %v1611
        %v1629 = vsel %vm1567, %v1613, %v1615
        %v1630 = vsel %vm1567, %v1617, %v1619
        %v1631 = vsel %vm1567, %v1621, %v1623
        %vm1656 = vcmask 1047680
        %1657 = vst.msk [vmem:[#allocation2] sm:$0xff] %vm1656, %v1593
        %1658 = vst [vmem:[#allocation2 + $0x8] sm:$0xff] %v1624
        %1659 = vst.msk [vmem:[#allocation2 + $0x10] sm:$0xff] %vm1567, %v1595
        %1660 = vst.msk [vmem:[#allocation2 + $0x18] sm:$0xff] %vm1656, %v1597
        %1661 = vst [vmem:[#allocation2 + $0x20] sm:$0xff] %v1625
        %1662 = vst.msk [vmem:[#allocation2 + $0x28] sm:$0xff] %vm1567, %v1599
        %1663 = vst.msk [vmem:[#allocation2 + $0x30] sm:$0xff] %vm1656, %v1601
        %1664 = vst [vmem:[#allocation2 + $0x38] sm:$0xff] %v1626
        %1665 = vst.msk [vmem:[#allocation2 + $0x40] sm:$0xff] %vm1567, %v1603
        %1666 = vst.msk [vmem:[#allocation2 + $0x48] sm:$0xff] %vm1656, %v1605
        %1667 = vst [vmem:[#allocation2 + $0x50] sm:$0xff] %v1627
        %1668 = vst.msk [vmem:[#allocation2 + $0x58] sm:$0xff] %vm1567, %v1607
        %1669 = vst.msk [vmem:[#allocation2 + $0x60] sm:$0xff] %vm1656, %v1609
        %1670 = vst [vmem:[#allocation2 + $0x68] sm:$0xff] %v1628
        %1671 = vst.msk [vmem:[#allocation2 + $0x70] sm:$0xff] %vm1567, %v1611
        %1672 = vst.msk [vmem:[#allocation2 + $0x78] sm:$0xff] %vm1656, %v1613
        %1673 = vst [vmem:[#allocation2 + $0x80] sm:$0xff] %v1629
        %1674 = vst.msk [vmem:[#allocation2 + $0x88] sm:$0xff] %vm1567, %v1615
        %1675 = vst.msk [vmem:[#allocation2 + $0x90] sm:$0xff] %vm1656, %v1617
        %1676 = vst [vmem:[#allocation2 + $0x98] sm:$0xff] %v1630
        %1677 = vst.msk [vmem:[#allocation2 + $0xa0] sm:$0xff] %vm1567, %v1619
        %1678 = vst.msk [vmem:[#allocation2 + $0xa8] sm:$0xff] %vm1656, %v1621
        %1679 = vst [vmem:[#allocation2 + $0xb0] sm:$0xff] %v1631
        %1680 = vst.msk [vmem:[#allocation2 + $0xb8] sm:$0xff] %vm1567, %v1623
        %1689 = vrot.lane.b32.xlu0 %v1527, 16
        %v1690 = vpop.permute.xlu0 %1689
        %1691 = vrot.lane.b32.xlu0 %v1528, 16
        %v1692 = vpop.permute.xlu0 %1691
        %1693 = vrot.lane.b32.xlu0 %v1529, 16
        %v1694 = vpop.permute.xlu0 %1693
        %1695 = vrot.lane.b32.xlu0 %v1530, 16
        %v1696 = vpop.permute.xlu0 %1695
        %1697 = vrot.lane.b32.xlu0 %v1531, 16
        %v1698 = vpop.permute.xlu0 %1697
        %1699 = vrot.lane.b32.xlu0 %v1532, 16
        %v1700 = vpop.permute.xlu0 %1699
        %1701 = vrot.lane.b32.xlu0 %v1533, 16
        %v1702 = vpop.permute.xlu0 %1701
        %1703 = vrot.lane.b32.xlu0 %v1534, 16
        %v1704 = vpop.permute.xlu0 %1703
        %vm1713 = vcmask 261248
        %1714 = vst.msk [vmem:[#allocation2 + $0x10] sm:$0xff] %vm1713, %v1690
        %1715 = vst.msk [vmem:[#allocation2 + $0x28] sm:$0xff] %vm1713, %v1692
        %1716 = vst.msk [vmem:[#allocation2 + $0x40] sm:$0xff] %vm1713, %v1694
        %1717 = vst.msk [vmem:[#allocation2 + $0x58] sm:$0xff] %vm1713, %v1696
        %1718 = vst.msk [vmem:[#allocation2 + $0x70] sm:$0xff] %vm1713, %v1698
        %1719 = vst.msk [vmem:[#allocation2 + $0x88] sm:$0xff] %vm1713, %v1700
        %1720 = vst.msk [vmem:[#allocation2 + $0xa0] sm:$0xff] %vm1713, %v1702
        %1721 = vst.msk [vmem:[#allocation2 + $0xb8] sm:$0xff] %vm1713, %v1704
        %v1722 = vld [vmem:[#allocation2] sm:$0xff]
        %v1723 = vld [vmem:[#allocation2 + $0x8] sm:$0xff]
        %v1724 = vld [vmem:[#allocation2 + $0x10] sm:$0xff]
        %v1725 = vld [vmem:[#allocation2 + $0x18] sm:$0xff]
        %v1726 = vld [vmem:[#allocation2 + $0x20] sm:$0xff]
        %v1727 = vld [vmem:[#allocation2 + $0x28] sm:$0xff]
        %v1728 = vld [vmem:[#allocation2 + $0x30] sm:$0xff]
        %v1729 = vld [vmem:[#allocation2 + $0x38] sm:$0xff]
        %v1730 = vld [vmem:[#allocation2 + $0x40] sm:$0xff]
        %v1731 = vld [vmem:[#allocation2 + $0x48] sm:$0xff]
        %v1732 = vld [vmem:[#allocation2 + $0x50] sm:$0xff]
        %v1733 = vld [vmem:[#allocation2 + $0x58] sm:$0xff]
        %v1734 = vld [vmem:[#allocation2 + $0x60] sm:$0xff]
        %v1735 = vld [vmem:[#allocation2 + $0x68] sm:$0xff]
        %v1736 = vld [vmem:[#allocation2 + $0x70] sm:$0xff]
        %v1737 = vld [vmem:[#allocation2 + $0x78] sm:$0xff]
        %v1738 = vld [vmem:[#allocation2 + $0x80] sm:$0xff]
        %v1739 = vld [vmem:[#allocation2 + $0x88] sm:$0xff]
        %v1740 = vld [vmem:[#allocation2 + $0x90] sm:$0xff]
        %v1741 = vld [vmem:[#allocation2 + $0x98] sm:$0xff]
        %v1742 = vld [vmem:[#allocation2 + $0xa0] sm:$0xff]
        %v1743 = vld [vmem:[#allocation2 + $0xa8] sm:$0xff]
        %v1744 = vld [vmem:[#allocation2 + $0xb0] sm:$0xff]
        %v1745 = vld [vmem:[#allocation2 + $0xb8] sm:$0xff]
        %v1746 = vlaneseq
        %v1747 = vand.u32 %v1746, 127
        %v1748 = vadd.s32 %v1747, 128
        %vm1749 = vcmp.lt.s32.totalorder %v1747, 0
        %v1750 = vsub.s32 0, %v1747
        %v1751 = vsel %vm1749, %v1750, %v1747
        %v1752 = vshrl.u32 %v1751, 4
        %v1753 = vand.u32 %v1751, 15
        %v1754 = vsub.s32 0, %v1753
        %v1755 = vsel %vm1749, %v1754, %v1753
        %vm1756 = vcmp.lt.s32.totalorder %v1748, 0
        %v1757 = vsub.s32 0, %v1748
        %v1758 = vsel %vm1756, %v1757, %v1748
        %v1759 = vshrl.u32 %v1758, 4
        %v1760 = vand.u32 %v1758, 15
        %v1761 = vsub.s32 0, %v1760
        %v1762 = vsel %vm1756, %v1761, %v1760
        %vm1763 = vcmp.ne.s32.totalorder %v1755, 0
        %vm1764 = vcmp.ne.s32.totalorder %v1762, 0
        %vm1765 = vcmp.lt.s32.totalorder %v1755, 0
        %vm1766 = vcmp.lt.s32.totalorder %v1762, 0
        %vm1767 = vmand %vm1765, %vm1763
        %vm1768 = vmand %vm1766, %vm1764
        %v1769 = vadd.s32 %v1755, 16
        %v1770 = vadd.s32 %v1762, 16
        %v1771 = vsel %vm1767, %v1769, %v1755
        %v1772 = vsel %vm1768, %v1770, %v1762
        %vm1773 = vcmp.ge.s32.totalorder %v1771, 1
        %vm1774 = vcmp.ge.s32.totalorder %v1772, 1
        %vm1775 = vcmp.lt.s32.totalorder %v1771, 15
        %vm1776 = vcmp.lt.s32.totalorder %v1772, 15
        %1778 = vset.pattern.permute.xlu0 0
        %1779 = vperm.xlu0 %1778, %v1296
        %v1780 = vpop.permute.xlu0 %1779
        %1783 = vset.pattern.permute.xlu0 0
        %1784 = vperm.xlu0 %1783, %v1301
        %v1785 = vpop.permute.xlu0 %1784
        %1788 = vset.pattern.permute.xlu0 0
        %1789 = vperm.xlu0 %1788, %v1306
        %v1790 = vpop.permute.xlu0 %1789
        %1793 = vset.pattern.permute.xlu0 0
        %1794 = vperm.xlu0 %1793, %v1311
        %v1795 = vpop.permute.xlu0 %1794
        %1798 = vset.pattern.permute.xlu0 0
        %1799 = vperm.xlu0 %1798, %v1316
        %v1800 = vpop.permute.xlu0 %1799
        %1803 = vset.pattern.permute.xlu0 0
        %1804 = vperm.xlu0 %1803, %v1321
        %v1805 = vpop.permute.xlu0 %1804
        %1808 = vset.pattern.permute.xlu0 0
        %1809 = vperm.xlu0 %1808, %v1326
        %v1810 = vpop.permute.xlu0 %1809
        %1813 = vset.pattern.permute.xlu0 0
        %1814 = vperm.xlu0 %1813, %v1331
        %v1815 = vpop.permute.xlu0 %1814
        %v1817 = vmul.f32 %v563, %v1780
        %v1818 = vmul.f32 %v564, %v1780
        %v1819 = vmul.f32 %v565, %v1785
        %v1820 = vmul.f32 %v566, %v1785
        %v1821 = vmul.f32 %v567, %v1790
        %v1822 = vmul.f32 %v568, %v1790
        %v1823 = vmul.f32 %v569, %v1795
        %v1824 = vmul.f32 %v570, %v1795
        %v1825 = vmul.f32 %v571, %v1800
        %v1826 = vmul.f32 %v572, %v1800
        %v1827 = vmul.f32 %v573, %v1805
        %v1828 = vmul.f32 %v574, %v1805
        %v1829 = vmul.f32 %v575, %v1810
        %v1830 = vmul.f32 %v576, %v1810
        %v1831 = vmul.f32 %v577, %v1815
        %v1832 = vmul.f32 %v578, %v1815
        %1833 = vrot.lane.b32.xlu0 %v1722, 1
        %v1834 = vpop.permute.xlu0 %1833
        %1835 = vrot.lane.b32.xlu0 %v1725, 1
        %v1836 = vpop.permute.xlu0 %1835
        %1837 = vrot.lane.b32.xlu0 %v1728, 1
        %v1838 = vpop.permute.xlu0 %1837
        %1839 = vrot.lane.b32.xlu0 %v1731, 1
        %v1840 = vpop.permute.xlu0 %1839
        %1841 = vrot.lane.b32.xlu0 %v1734, 1
        %v1842 = vpop.permute.xlu0 %1841
        %1843 = vrot.lane.b32.xlu0 %v1737, 1
        %v1844 = vpop.permute.xlu0 %1843
        %1845 = vrot.lane.b32.xlu0 %v1740, 1
        %v1846 = vpop.permute.xlu0 %1845
        %1847 = vrot.lane.b32.xlu0 %v1743, 1
        %v1848 = vpop.permute.xlu0 %1847
        %1849 = vrot.lane.b32.xlu0 %v1723, 1
        %v1850 = vpop.permute.xlu0 %1849
        %1851 = vrot.lane.b32.xlu0 %v1726, 1
        %v1852 = vpop.permute.xlu0 %1851
        %1853 = vrot.lane.b32.xlu0 %v1729, 1
        %v1854 = vpop.permute.xlu0 %1853
        %1855 = vrot.lane.b32.xlu0 %v1732, 1
        %v1856 = vpop.permute.xlu0 %1855
        %1857 = vrot.lane.b32.xlu0 %v1735, 1
        %v1858 = vpop.permute.xlu0 %1857
        %1859 = vrot.lane.b32.xlu0 %v1738, 1
        %v1860 = vpop.permute.xlu0 %1859
        %1861 = vrot.lane.b32.xlu0 %v1741, 1
        %v1862 = vpop.permute.xlu0 %1861
        %1863 = vrot.lane.b32.xlu0 %v1744, 1
        %v1864 = vpop.permute.xlu0 %1863
        %1865 = vrot.lane.b32.xlu0 %v1724, 1
        %v1866 = vpop.permute.xlu0 %1865
        %1867 = vrot.lane.b32.xlu0 %v1727, 1
        %v1868 = vpop.permute.xlu0 %1867
        %1869 = vrot.lane.b32.xlu0 %v1730, 1
        %v1870 = vpop.permute.xlu0 %1869
        %1871 = vrot.lane.b32.xlu0 %v1733, 1
        %v1872 = vpop.permute.xlu0 %1871
        %1873 = vrot.lane.b32.xlu0 %v1736, 1
        %v1874 = vpop.permute.xlu0 %1873
        %1875 = vrot.lane.b32.xlu0 %v1739, 1
        %v1876 = vpop.permute.xlu0 %1875
        %1877 = vrot.lane.b32.xlu0 %v1742, 1
        %v1878 = vpop.permute.xlu0 %1877
        %1879 = vrot.lane.b32.xlu0 %v1745, 1
        %v1880 = vpop.permute.xlu0 %1879
        %vm1881 = vcmp.lt.s32.totalorder %v1747, 1
        %v1882 = vsel %vm1881, %v1834, %v1850
        %v1883 = vsel %vm1881, %v1836, %v1852
        %v1884 = vsel %vm1881, %v1838, %v1854
        %v1885 = vsel %vm1881, %v1840, %v1856
        %v1886 = vsel %vm1881, %v1842, %v1858
        %v1887 = vsel %vm1881, %v1844, %v1860
        %v1888 = vsel %vm1881, %v1846, %v1862
        %v1889 = vsel %vm1881, %v1848, %v1864
        %v1890 = vsel %vm1881, %v1866, %v1834
        %v1891 = vsel %vm1881, %v1868, %v1836
        %v1892 = vsel %vm1881, %v1870, %v1838
        %v1893 = vsel %vm1881, %v1872, %v1840
        %v1894 = vsel %vm1881, %v1874, %v1842
        %v1895 = vsel %vm1881, %v1876, %v1844
        %v1896 = vsel %vm1881, %v1878, %v1846
        %v1897 = vsel %vm1881, %v1880, %v1848
        %v1898 = vsel %vm1773, 1, 0
        %v1899 = vsel %vm1774, 1, 0
        %vm1900 = vcmp.eq.s32.totalorder %v1898, 1
        %vm1901 = vcmp.eq.s32.totalorder %v1899, 1
        %v1902 = vsel %vm1900, %v1890, 0.0
        %v1903 = vsel %vm1901, %v1882, 0.0
        %v1904 = vsel %vm1900, %v1891, 0.0
        %v1905 = vsel %vm1901, %v1883, 0.0
        %v1906 = vsel %vm1900, %v1892, 0.0
        %v1907 = vsel %vm1901, %v1884, 0.0
        %v1908 = vsel %vm1900, %v1893, 0.0
        %v1909 = vsel %vm1901, %v1885, 0.0
        %v1910 = vsel %vm1900, %v1894, 0.0
        %v1911 = vsel %vm1901, %v1886, 0.0
        %v1912 = vsel %vm1900, %v1895, 0.0
        %v1913 = vsel %vm1901, %v1887, 0.0
        %v1914 = vsel %vm1900, %v1896, 0.0
        %v1915 = vsel %vm1901, %v1888, 0.0
        %v1916 = vsel %vm1900, %v1897, 0.0
        %v1917 = vsel %vm1901, %v1889, 0.0
        %1919 = vset.pattern.permute.xlu0 0
        %1920 = vperm.xlu0 %1919, %v1136
        %v1921 = vpop.permute.xlu0 %1920
        %1924 = vset.pattern.permute.xlu0 0
        %1925 = vperm.xlu0 %1924, %v1141
        %v1926 = vpop.permute.xlu0 %1925
        %1929 = vset.pattern.permute.xlu0 0
        %1930 = vperm.xlu0 %1929, %v1146
        %v1931 = vpop.permute.xlu0 %1930
        %1934 = vset.pattern.permute.xlu0 0
        %1935 = vperm.xlu0 %1934, %v1151
        %v1936 = vpop.permute.xlu0 %1935
        %1939 = vset.pattern.permute.xlu0 0
        %1940 = vperm.xlu0 %1939, %v1156
        %v1941 = vpop.permute.xlu0 %1940
        %1944 = vset.pattern.permute.xlu0 0
        %1945 = vperm.xlu0 %1944, %v1161
        %v1946 = vpop.permute.xlu0 %1945
        %1949 = vset.pattern.permute.xlu0 0
        %1950 = vperm.xlu0 %1949, %v1166
        %v1951 = vpop.permute.xlu0 %1950
        %1954 = vset.pattern.permute.xlu0 0
        %1955 = vperm.xlu0 %1954, %v1171
        %v1956 = vpop.permute.xlu0 %1955
        %v1958 = vmul.f32 %v1902, %v1921
        %v1959 = vmul.f32 %v1903, %v1921
        %v1960 = vmul.f32 %v1904, %v1926
        %v1961 = vmul.f32 %v1905, %v1926
        %v1962 = vmul.f32 %v1906, %v1931
        %v1963 = vmul.f32 %v1907, %v1931
        %v1964 = vmul.f32 %v1908, %v1936
        %v1965 = vmul.f32 %v1909, %v1936
        %v1966 = vmul.f32 %v1910, %v1941
        %v1967 = vmul.f32 %v1911, %v1941
        %v1968 = vmul.f32 %v1912, %v1946
        %v1969 = vmul.f32 %v1913, %v1946
        %v1970 = vmul.f32 %v1914, %v1951
        %v1971 = vmul.f32 %v1915, %v1951
        %v1972 = vmul.f32 %v1916, %v1956
        %v1973 = vmul.f32 %v1917, %v1956
        %v1974 = vadd.f32 %v1817, %v1958
        %v1975 = vadd.f32 %v1818, %v1959
        %v1976 = vadd.f32 %v1819, %v1960
        %v1977 = vadd.f32 %v1820, %v1961
        %v1978 = vadd.f32 %v1821, %v1962
        %v1979 = vadd.f32 %v1822, %v1963
        %v1980 = vadd.f32 %v1823, %v1964
        %v1981 = vadd.f32 %v1824, %v1965
        %v1982 = vadd.f32 %v1825, %v1966
        %v1983 = vadd.f32 %v1826, %v1967
        %v1984 = vadd.f32 %v1827, %v1968
        %v1985 = vadd.f32 %v1828, %v1969
        %v1986 = vadd.f32 %v1829, %v1970
        %v1987 = vadd.f32 %v1830, %v1971
        %v1988 = vadd.f32 %v1831, %v1972
        %v1989 = vadd.f32 %v1832, %v1973
        %1991 = vset.pattern.permute.xlu0 0
        %1992 = vperm.xlu0 %1991, %v1176
        %v1993 = vpop.permute.xlu0 %1992
        %1996 = vset.pattern.permute.xlu0 0
        %1997 = vperm.xlu0 %1996, %v1181
        %v1998 = vpop.permute.xlu0 %1997
        %2001 = vset.pattern.permute.xlu0 0
        %2002 = vperm.xlu0 %2001, %v1186
        %v2003 = vpop.permute.xlu0 %2002
        %2006 = vset.pattern.permute.xlu0 0
        %2007 = vperm.xlu0 %2006, %v1191
        %v2008 = vpop.permute.xlu0 %2007
        %2011 = vset.pattern.permute.xlu0 0
        %2012 = vperm.xlu0 %2011, %v1196
        %v2013 = vpop.permute.xlu0 %2012
        %2016 = vset.pattern.permute.xlu0 0
        %2017 = vperm.xlu0 %2016, %v1201
        %v2018 = vpop.permute.xlu0 %2017
        %2021 = vset.pattern.permute.xlu0 0
        %2022 = vperm.xlu0 %2021, %v1206
        %v2023 = vpop.permute.xlu0 %2022
        %2026 = vset.pattern.permute.xlu0 0
        %2027 = vperm.xlu0 %2026, %v1211
        %v2028 = vpop.permute.xlu0 %2027
        %v2030 = vmul.f32 %v1722, %v1993
        %v2031 = vmul.f32 %v1723, %v1993
        %v2032 = vmul.f32 %v1725, %v1998
        %v2033 = vmul.f32 %v1726, %v1998
        %v2034 = vmul.f32 %v1728, %v2003
        %v2035 = vmul.f32 %v1729, %v2003
        %v2036 = vmul.f32 %v1731, %v2008
        %v2037 = vmul.f32 %v1732, %v2008
        %v2038 = vmul.f32 %v1734, %v2013
        %v2039 = vmul.f32 %v1735, %v2013
        %v2040 = vmul.f32 %v1737, %v2018
        %v2041 = vmul.f32 %v1738, %v2018
        %v2042 = vmul.f32 %v1740, %v2023
        %v2043 = vmul.f32 %v1741, %v2023
        %v2044 = vmul.f32 %v1743, %v2028
        %v2045 = vmul.f32 %v1744, %v2028
        %v2046 = vadd.f32 %v1974, %v2030
        %v2047 = vadd.f32 %v1975, %v2031
        %v2048 = vadd.f32 %v1976, %v2032
        %v2049 = vadd.f32 %v1977, %v2033
        %v2050 = vadd.f32 %v1978, %v2034
        %v2051 = vadd.f32 %v1979, %v2035
        %v2052 = vadd.f32 %v1980, %v2036
        %v2053 = vadd.f32 %v1981, %v2037
        %v2054 = vadd.f32 %v1982, %v2038
        %v2055 = vadd.f32 %v1983, %v2039
        %v2056 = vadd.f32 %v1984, %v2040
        %v2057 = vadd.f32 %v1985, %v2041
        %v2058 = vadd.f32 %v1986, %v2042
        %v2059 = vadd.f32 %v1987, %v2043
        %v2060 = vadd.f32 %v1988, %v2044
        %v2061 = vadd.f32 %v1989, %v2045
        %2062 = vrot.lane.b32.xlu0 %v1722, 127
        %v2063 = vpop.permute.xlu0 %2062
        %2064 = vrot.lane.b32.xlu0 %v1725, 127
        %v2065 = vpop.permute.xlu0 %2064
        %2066 = vrot.lane.b32.xlu0 %v1728, 127
        %v2067 = vpop.permute.xlu0 %2066
        %2068 = vrot.lane.b32.xlu0 %v1731, 127
        %v2069 = vpop.permute.xlu0 %2068
        %2070 = vrot.lane.b32.xlu0 %v1734, 127
        %v2071 = vpop.permute.xlu0 %2070
        %2072 = vrot.lane.b32.xlu0 %v1737, 127
        %v2073 = vpop.permute.xlu0 %2072
        %2074 = vrot.lane.b32.xlu0 %v1740, 127
        %v2075 = vpop.permute.xlu0 %2074
        %2076 = vrot.lane.b32.xlu0 %v1743, 127
        %v2077 = vpop.permute.xlu0 %2076
        %2078 = vrot.lane.b32.xlu0 %v1723, 127
        %v2079 = vpop.permute.xlu0 %2078
        %2080 = vrot.lane.b32.xlu0 %v1726, 127
        %v2081 = vpop.permute.xlu0 %2080
        %2082 = vrot.lane.b32.xlu0 %v1729, 127
        %v2083 = vpop.permute.xlu0 %2082
        %2084 = vrot.lane.b32.xlu0 %v1732, 127
        %v2085 = vpop.permute.xlu0 %2084
        %2086 = vrot.lane.b32.xlu0 %v1735, 127
        %v2087 = vpop.permute.xlu0 %2086
        %2088 = vrot.lane.b32.xlu0 %v1738, 127
        %v2089 = vpop.permute.xlu0 %2088
        %2090 = vrot.lane.b32.xlu0 %v1741, 127
        %v2091 = vpop.permute.xlu0 %2090
        %2092 = vrot.lane.b32.xlu0 %v1744, 127
        %v2093 = vpop.permute.xlu0 %2092
        %2094 = vrot.lane.b32.xlu0 %v1724, 127
        %v2095 = vpop.permute.xlu0 %2094
        %2096 = vrot.lane.b32.xlu0 %v1727, 127
        %v2097 = vpop.permute.xlu0 %2096
        %2098 = vrot.lane.b32.xlu0 %v1730, 127
        %v2099 = vpop.permute.xlu0 %2098
        %2100 = vrot.lane.b32.xlu0 %v1733, 127
        %v2101 = vpop.permute.xlu0 %2100
        %2102 = vrot.lane.b32.xlu0 %v1736, 127
        %v2103 = vpop.permute.xlu0 %2102
        %2104 = vrot.lane.b32.xlu0 %v1739, 127
        %v2105 = vpop.permute.xlu0 %2104
        %2106 = vrot.lane.b32.xlu0 %v1742, 127
        %v2107 = vpop.permute.xlu0 %2106
        %2108 = vrot.lane.b32.xlu0 %v1745, 127
        %v2109 = vpop.permute.xlu0 %2108
        %vm2110 = vcmp.lt.s32.totalorder %v1747, 127
        %v2111 = vsel %vm2110, %v2079, %v2095
        %v2112 = vsel %vm2110, %v2081, %v2097
        %v2113 = vsel %vm2110, %v2083, %v2099
        %v2114 = vsel %vm2110, %v2085, %v2101
        %v2115 = vsel %vm2110, %v2087, %v2103
        %v2116 = vsel %vm2110, %v2089, %v2105
        %v2117 = vsel %vm2110, %v2091, %v2107
        %v2118 = vsel %vm2110, %v2093, %v2109
        %v2119 = vsel %vm2110, %v2063, %v2079
        %v2120 = vsel %vm2110, %v2065, %v2081
        %v2121 = vsel %vm2110, %v2067, %v2083
        %v2122 = vsel %vm2110, %v2069, %v2085
        %v2123 = vsel %vm2110, %v2071, %v2087
        %v2124 = vsel %vm2110, %v2073, %v2089
        %v2125 = vsel %vm2110, %v2075, %v2091
        %v2126 = vsel %vm2110, %v2077, %v2093
        %v2127 = vsel %vm1775, 1, 0
        %v2128 = vsel %vm1776, 1, 0
        %vm2129 = vcmp.eq.s32.totalorder %v2127, 1
        %vm2130 = vcmp.eq.s32.totalorder %v2128, 1
        %v2131 = vsel %vm2129, %v2119, 0.0
        %v2132 = vsel %vm2130, %v2111, 0.0
        %v2133 = vsel %vm2129, %v2120, 0.0
        %v2134 = vsel %vm2130, %v2112, 0.0
        %v2135 = vsel %vm2129, %v2121, 0.0
        %v2136 = vsel %vm2130, %v2113, 0.0
        %v2137 = vsel %vm2129, %v2122, 0.0
        %v2138 = vsel %vm2130, %v2114, 0.0
        %v2139 = vsel %vm2129, %v2123, 0.0
        %v2140 = vsel %vm2130, %v2115, 0.0
        %v2141 = vsel %vm2129, %v2124, 0.0
        %v2142 = vsel %vm2130, %v2116, 0.0
        %v2143 = vsel %vm2129, %v2125, 0.0
        %v2144 = vsel %vm2130, %v2117, 0.0
        %v2145 = vsel %vm2129, %v2126, 0.0
        %v2146 = vsel %vm2130, %v2118, 0.0
        %2148 = vset.pattern.permute.xlu0 0
        %2149 = vperm.xlu0 %2148, %v1216
        %v2150 = vpop.permute.xlu0 %2149
        %2153 = vset.pattern.permute.xlu0 0
        %2154 = vperm.xlu0 %2153, %v1221
        %v2155 = vpop.permute.xlu0 %2154
        %2158 = vset.pattern.permute.xlu0 0
        %2159 = vperm.xlu0 %2158, %v1226
        %v2160 = vpop.permute.xlu0 %2159
        %2163 = vset.pattern.permute.xlu0 0
        %2164 = vperm.xlu0 %2163, %v1231
        %v2165 = vpop.permute.xlu0 %2164
        %2168 = vset.pattern.permute.xlu0 0
        %2169 = vperm.xlu0 %2168, %v1236
        %v2170 = vpop.permute.xlu0 %2169
        %2173 = vset.pattern.permute.xlu0 0
        %2174 = vperm.xlu0 %2173, %v1241
        %v2175 = vpop.permute.xlu0 %2174
        %2178 = vset.pattern.permute.xlu0 0
        %2179 = vperm.xlu0 %2178, %v1246
        %v2180 = vpop.permute.xlu0 %2179
        %2183 = vset.pattern.permute.xlu0 0
        %2184 = vperm.xlu0 %2183, %v1251
        %v2185 = vpop.permute.xlu0 %2184
        %v2187 = vmul.f32 %v2131, %v2150
        %v2188 = vmul.f32 %v2132, %v2150
        %v2189 = vmul.f32 %v2133, %v2155
        %v2190 = vmul.f32 %v2134, %v2155
        %v2191 = vmul.f32 %v2135, %v2160
        %v2192 = vmul.f32 %v2136, %v2160
        %v2193 = vmul.f32 %v2137, %v2165
        %v2194 = vmul.f32 %v2138, %v2165
        %v2195 = vmul.f32 %v2139, %v2170
        %v2196 = vmul.f32 %v2140, %v2170
        %v2197 = vmul.f32 %v2141, %v2175
        %v2198 = vmul.f32 %v2142, %v2175
        %v2199 = vmul.f32 %v2143, %v2180
        %v2200 = vmul.f32 %v2144, %v2180
        %v2201 = vmul.f32 %v2145, %v2185
        %v2202 = vmul.f32 %v2146, %v2185
        %v2203 = vadd.f32 %v2046, %v2187
        %v2204 = vadd.f32 %v2047, %v2188
        %v2205 = vadd.f32 %v2048, %v2189
        %v2206 = vadd.f32 %v2049, %v2190
        %v2207 = vadd.f32 %v2050, %v2191
        %v2208 = vadd.f32 %v2051, %v2192
        %v2209 = vadd.f32 %v2052, %v2193
        %v2210 = vadd.f32 %v2053, %v2194
        %v2211 = vadd.f32 %v2054, %v2195
        %v2212 = vadd.f32 %v2055, %v2196
        %v2213 = vadd.f32 %v2056, %v2197
        %v2214 = vadd.f32 %v2057, %v2198
        %v2215 = vadd.f32 %v2058, %v2199
        %v2216 = vadd.f32 %v2059, %v2200
        %v2217 = vadd.f32 %v2060, %v2201
        %v2218 = vadd.f32 %v2061, %v2202
        %2219 = vrot.lane.b32.xlu0 %v1722, 113
        %v2220 = vpop.permute.xlu0 %2219
        %2221 = vrot.lane.b32.xlu0 %v1725, 113
        %v2222 = vpop.permute.xlu0 %2221
        %2223 = vrot.lane.b32.xlu0 %v1728, 113
        %v2224 = vpop.permute.xlu0 %2223
        %2225 = vrot.lane.b32.xlu0 %v1731, 113
        %v2226 = vpop.permute.xlu0 %2225
        %2227 = vrot.lane.b32.xlu0 %v1734, 113
        %v2228 = vpop.permute.xlu0 %2227
        %2229 = vrot.lane.b32.xlu0 %v1737, 113
        %v2230 = vpop.permute.xlu0 %2229
        %2231 = vrot.lane.b32.xlu0 %v1740, 113
        %v2232 = vpop.permute.xlu0 %2231
        %2233 = vrot.lane.b32.xlu0 %v1743, 113
        %v2234 = vpop.permute.xlu0 %2233
        %2235 = vrot.lane.b32.xlu0 %v1723, 113
        %v2236 = vpop.permute.xlu0 %2235
        %2237 = vrot.lane.b32.xlu0 %v1726, 113
        %v2238 = vpop.permute.xlu0 %2237
        %2239 = vrot.lane.b32.xlu0 %v1729, 113
        %v2240 = vpop.permute.xlu0 %2239
        %2241 = vrot.lane.b32.xlu0 %v1732, 113
        %v2242 = vpop.permute.xlu0 %2241
        %2243 = vrot.lane.b32.xlu0 %v1735, 113
        %v2244 = vpop.permute.xlu0 %2243
        %2245 = vrot.lane.b32.xlu0 %v1738, 113
        %v2246 = vpop.permute.xlu0 %2245
        %2247 = vrot.lane.b32.xlu0 %v1741, 113
        %v2248 = vpop.permute.xlu0 %2247
        %2249 = vrot.lane.b32.xlu0 %v1744, 113
        %v2250 = vpop.permute.xlu0 %2249
        %2251 = vrot.lane.b32.xlu0 %v1724, 113
        %v2252 = vpop.permute.xlu0 %2251
        %2253 = vrot.lane.b32.xlu0 %v1727, 113
        %v2254 = vpop.permute.xlu0 %2253
        %2255 = vrot.lane.b32.xlu0 %v1730, 113
        %v2256 = vpop.permute.xlu0 %2255
        %2257 = vrot.lane.b32.xlu0 %v1733, 113
        %v2258 = vpop.permute.xlu0 %2257
        %2259 = vrot.lane.b32.xlu0 %v1736, 113
        %v2260 = vpop.permute.xlu0 %2259
        %2261 = vrot.lane.b32.xlu0 %v1739, 113
        %v2262 = vpop.permute.xlu0 %2261
        %2263 = vrot.lane.b32.xlu0 %v1742, 113
        %v2264 = vpop.permute.xlu0 %2263
        %2265 = vrot.lane.b32.xlu0 %v1745, 113
        %v2266 = vpop.permute.xlu0 %2265
        %vm2267 = vcmp.lt.s32.totalorder %v1747, 113
        %v2268 = vsel %vm2267, %v2236, %v2252
        %v2269 = vsel %vm2267, %v2238, %v2254
        %v2270 = vsel %vm2267, %v2240, %v2256
        %v2271 = vsel %vm2267, %v2242, %v2258
        %v2272 = vsel %vm2267, %v2244, %v2260
        %v2273 = vsel %vm2267, %v2246, %v2262
        %v2274 = vsel %vm2267, %v2248, %v2264
        %v2275 = vsel %vm2267, %v2250, %v2266
        %v2276 = vsel %vm2267, %v2220, %v2236
        %v2277 = vsel %vm2267, %v2222, %v2238
        %v2278 = vsel %vm2267, %v2224, %v2240
        %v2279 = vsel %vm2267, %v2226, %v2242
        %v2280 = vsel %vm2267, %v2228, %v2244
        %v2281 = vsel %vm2267, %v2230, %v2246
        %v2282 = vsel %vm2267, %v2232, %v2248
        %v2283 = vsel %vm2267, %v2234, %v2250
        %v2284 = vsel %vm1900, %v2276, 0.0
        %v2285 = vsel %vm1901, %v2268, 0.0
        %v2286 = vsel %vm1900, %v2277, 0.0
        %v2287 = vsel %vm1901, %v2269, 0.0
        %v2288 = vsel %vm1900, %v2278, 0.0
        %v2289 = vsel %vm1901, %v2270, 0.0
        %v2290 = vsel %vm1900, %v2279, 0.0
        %v2291 = vsel %vm1901, %v2271, 0.0
        %v2292 = vsel %vm1900, %v2280, 0.0
        %v2293 = vsel %vm1901, %v2272, 0.0
        %v2294 = vsel %vm1900, %v2281, 0.0
        %v2295 = vsel %vm1901, %v2273, 0.0
        %v2296 = vsel %vm1900, %v2282, 0.0
        %v2297 = vsel %vm1901, %v2274, 0.0
        %v2298 = vsel %vm1900, %v2283, 0.0
        %v2299 = vsel %vm1901, %v2275, 0.0
        %2301 = vset.pattern.permute.xlu0 0
        %2302 = vperm.xlu0 %2301, %v1256
        %v2303 = vpop.permute.xlu0 %2302
        %2306 = vset.pattern.permute.xlu0 0
        %2307 = vperm.xlu0 %2306, %v1261
        %v2308 = vpop.permute.xlu0 %2307
        %2311 = vset.pattern.permute.xlu0 0
        %2312 = vperm.xlu0 %2311, %v1266
        %v2313 = vpop.permute.xlu0 %2312
        %2316 = vset.pattern.permute.xlu0 0
        %2317 = vperm.xlu0 %2316, %v1271
        %v2318 = vpop.permute.xlu0 %2317
        %2321 = vset.pattern.permute.xlu0 0
        %2322 = vperm.xlu0 %2321, %v1276
        %v2323 = vpop.permute.xlu0 %2322
        %2326 = vset.pattern.permute.xlu0 0
        %2327 = vperm.xlu0 %2326, %v1281
        %v2328 = vpop.permute.xlu0 %2327
        %2331 = vset.pattern.permute.xlu0 0
        %2332 = vperm.xlu0 %2331, %v1286
        %v2333 = vpop.permute.xlu0 %2332
        %2336 = vset.pattern.permute.xlu0 0
        %2337 = vperm.xlu0 %2336, %v1291
        %v2338 = vpop.permute.xlu0 %2337
        %v2340 = vmul.f32 %v2284, %v2303
        %v2341 = vmul.f32 %v2285, %v2303
        %v2342 = vmul.f32 %v2286, %v2308
        %v2343 = vmul.f32 %v2287, %v2308
        %v2344 = vmul.f32 %v2288, %v2313
        %v2345 = vmul.f32 %v2289, %v2313
        %v2346 = vmul.f32 %v2290, %v2318
        %v2347 = vmul.f32 %v2291, %v2318
        %v2348 = vmul.f32 %v2292, %v2323
        %v2349 = vmul.f32 %v2293, %v2323
        %v2350 = vmul.f32 %v2294, %v2328
        %v2351 = vmul.f32 %v2295, %v2328
        %v2352 = vmul.f32 %v2296, %v2333
        %v2353 = vmul.f32 %v2297, %v2333
        %v2354 = vmul.f32 %v2298, %v2338
        %v2355 = vmul.f32 %v2299, %v2338
        %v2356 = vadd.f32 %v2203, %v2340
        %v2357 = vadd.f32 %v2204, %v2341
        %v2358 = vadd.f32 %v2205, %v2342
        %v2359 = vadd.f32 %v2206, %v2343
        %v2360 = vadd.f32 %v2207, %v2344
        %v2361 = vadd.f32 %v2208, %v2345
        %v2362 = vadd.f32 %v2209, %v2346
        %v2363 = vadd.f32 %v2210, %v2347
        %v2364 = vadd.f32 %v2211, %v2348
        %v2365 = vadd.f32 %v2212, %v2349
        %v2366 = vadd.f32 %v2213, %v2350
        %v2367 = vadd.f32 %v2214, %v2351
        %v2368 = vadd.f32 %v2215, %v2352
        %v2369 = vadd.f32 %v2216, %v2353
        %v2370 = vadd.f32 %v2217, %v2354
        %v2371 = vadd.f32 %v2218, %v2355
        %2372 = vrot.lane.b32.xlu0 %v1722, 111
        %v2373 = vpop.permute.xlu0 %2372
        %2374 = vrot.lane.b32.xlu0 %v1725, 111
        %v2375 = vpop.permute.xlu0 %2374
        %2376 = vrot.lane.b32.xlu0 %v1728, 111
        %v2377 = vpop.permute.xlu0 %2376
        %2378 = vrot.lane.b32.xlu0 %v1731, 111
        %v2379 = vpop.permute.xlu0 %2378
        %2380 = vrot.lane.b32.xlu0 %v1734, 111
        %v2381 = vpop.permute.xlu0 %2380
        %2382 = vrot.lane.b32.xlu0 %v1737, 111
        %v2383 = vpop.permute.xlu0 %2382
        %2384 = vrot.lane.b32.xlu0 %v1740, 111
        %v2385 = vpop.permute.xlu0 %2384
        %2386 = vrot.lane.b32.xlu0 %v1743, 111
        %v2387 = vpop.permute.xlu0 %2386
        %2388 = vrot.lane.b32.xlu0 %v1723, 111
        %v2389 = vpop.permute.xlu0 %2388
        %2390 = vrot.lane.b32.xlu0 %v1726, 111
        %v2391 = vpop.permute.xlu0 %2390
        %2392 = vrot.lane.b32.xlu0 %v1729, 111
        %v2393 = vpop.permute.xlu0 %2392
        %2394 = vrot.lane.b32.xlu0 %v1732, 111
        %v2395 = vpop.permute.xlu0 %2394
        %2396 = vrot.lane.b32.xlu0 %v1735, 111
        %v2397 = vpop.permute.xlu0 %2396
        %2398 = vrot.lane.b32.xlu0 %v1738, 111
        %v2399 = vpop.permute.xlu0 %2398
        %2400 = vrot.lane.b32.xlu0 %v1741, 111
        %v2401 = vpop.permute.xlu0 %2400
        %2402 = vrot.lane.b32.xlu0 %v1744, 111
        %v2403 = vpop.permute.xlu0 %2402
        %2404 = vrot.lane.b32.xlu0 %v1724, 111
        %v2405 = vpop.permute.xlu0 %2404
        %2406 = vrot.lane.b32.xlu0 %v1727, 111
        %v2407 = vpop.permute.xlu0 %2406
        %2408 = vrot.lane.b32.xlu0 %v1730, 111
        %v2409 = vpop.permute.xlu0 %2408
        %2410 = vrot.lane.b32.xlu0 %v1733, 111
        %v2411 = vpop.permute.xlu0 %2410
        %2412 = vrot.lane.b32.xlu0 %v1736, 111
        %v2413 = vpop.permute.xlu0 %2412
        %2414 = vrot.lane.b32.xlu0 %v1739, 111
        %v2415 = vpop.permute.xlu0 %2414
        %2416 = vrot.lane.b32.xlu0 %v1742, 111
        %v2417 = vpop.permute.xlu0 %2416
        %2418 = vrot.lane.b32.xlu0 %v1745, 111
        %v2419 = vpop.permute.xlu0 %2418
        %vm2420 = vcmp.lt.s32.totalorder %v1747, 111
        %v2421 = vsel %vm2420, %v2389, %v2405
        %v2422 = vsel %vm2420, %v2391, %v2407
        %v2423 = vsel %vm2420, %v2393, %v2409
        %v2424 = vsel %vm2420, %v2395, %v2411
        %v2425 = vsel %vm2420, %v2397, %v2413
        %v2426 = vsel %vm2420, %v2399, %v2415
        %v2427 = vsel %vm2420, %v2401, %v2417
        %v2428 = vsel %vm2420, %v2403, %v2419
        %v2429 = vsel %vm2420, %v2373, %v2389
        %v2430 = vsel %vm2420, %v2375, %v2391
        %v2431 = vsel %vm2420, %v2377, %v2393
        %v2432 = vsel %vm2420, %v2379, %v2395
        %v2433 = vsel %vm2420, %v2381, %v2397
        %v2434 = vsel %vm2420, %v2383, %v2399
        %v2435 = vsel %vm2420, %v2385, %v2401
        %v2436 = vsel %vm2420, %v2387, %v2403
        %v2437 = vsel %vm2129, %v2429, 0.0
        %v2438 = vsel %vm2130, %v2421, 0.0
        %v2439 = vsel %vm2129, %v2430, 0.0
        %v2440 = vsel %vm2130, %v2422, 0.0
        %v2441 = vsel %vm2129, %v2431, 0.0
        %v2442 = vsel %vm2130, %v2423, 0.0
        %v2443 = vsel %vm2129, %v2432, 0.0
        %v2444 = vsel %vm2130, %v2424, 0.0
        %v2445 = vsel %vm2129, %v2433, 0.0
        %v2446 = vsel %vm2130, %v2425, 0.0
        %v2447 = vsel %vm2129, %v2434, 0.0
        %v2448 = vsel %vm2130, %v2426, 0.0
        %v2449 = vsel %vm2129, %v2435, 0.0
        %v2450 = vsel %vm2130, %v2427, 0.0
        %v2451 = vsel %vm2129, %v2436, 0.0
        %v2452 = vsel %vm2130, %v2428, 0.0
        %2454 = vset.pattern.permute.xlu0 0
        %2455 = vperm.xlu0 %2454, %v1336
        %v2456 = vpop.permute.xlu0 %2455
        %2459 = vset.pattern.permute.xlu0 0
        %2460 = vperm.xlu0 %2459, %v1341
        %v2461 = vpop.permute.xlu0 %2460
        %2464 = vset.pattern.permute.xlu0 0
        %2465 = vperm.xlu0 %2464, %v1346
        %v2466 = vpop.permute.xlu0 %2465
        %2469 = vset.pattern.permute.xlu0 0
        %2470 = vperm.xlu0 %2469, %v1351
        %v2471 = vpop.permute.xlu0 %2470
        %2474 = vset.pattern.permute.xlu0 0
        %2475 = vperm.xlu0 %2474, %v1356
        %v2476 = vpop.permute.xlu0 %2475
        %2479 = vset.pattern.permute.xlu0 0
        %2480 = vperm.xlu0 %2479, %v1361
        %v2481 = vpop.permute.xlu0 %2480
        %2484 = vset.pattern.permute.xlu0 0
        %2485 = vperm.xlu0 %2484, %v1366
        %v2486 = vpop.permute.xlu0 %2485
        %2489 = vset.pattern.permute.xlu0 0
        %2490 = vperm.xlu0 %2489, %v1371
        %v2491 = vpop.permute.xlu0 %2490
        %v2493 = vmul.f32 %v2437, %v2456
        %v2494 = vmul.f32 %v2438, %v2456
        %v2495 = vmul.f32 %v2439, %v2461
        %v2496 = vmul.f32 %v2440, %v2461
        %v2497 = vmul.f32 %v2441, %v2466
        %v2498 = vmul.f32 %v2442, %v2466
        %v2499 = vmul.f32 %v2443, %v2471
        %v2500 = vmul.f32 %v2444, %v2471
        %v2501 = vmul.f32 %v2445, %v2476
        %v2502 = vmul.f32 %v2446, %v2476
        %v2503 = vmul.f32 %v2447, %v2481
        %v2504 = vmul.f32 %v2448, %v2481
        %v2505 = vmul.f32 %v2449, %v2486
        %v2506 = vmul.f32 %v2450, %v2486
        %v2507 = vmul.f32 %v2451, %v2491
        %v2508 = vmul.f32 %v2452, %v2491
        %v2509 = vadd.f32 %v2356, %v2493
        %v2510 = vadd.f32 %v2357, %v2494
        %v2511 = vadd.f32 %v2358, %v2495
        %v2512 = vadd.f32 %v2359, %v2496
        %v2513 = vadd.f32 %v2360, %v2497
        %v2514 = vadd.f32 %v2361, %v2498
        %v2515 = vadd.f32 %v2362, %v2499
        %v2516 = vadd.f32 %v2363, %v2500
        %v2517 = vadd.f32 %v2364, %v2501
        %v2518 = vadd.f32 %v2365, %v2502
        %v2519 = vadd.f32 %v2366, %v2503
        %v2520 = vadd.f32 %v2367, %v2504
        %v2521 = vadd.f32 %v2368, %v2505
        %v2522 = vadd.f32 %v2369, %v2506
        %v2523 = vadd.f32 %v2370, %v2507
        %v2524 = vadd.f32 %v2371, %v2508
        %2525 = vrot.lane.b32.xlu0 %v1722, 97
        %v2526 = vpop.permute.xlu0 %2525
        %2527 = vrot.lane.b32.xlu0 %v1725, 97
        %v2528 = vpop.permute.xlu0 %2527
        %2529 = vrot.lane.b32.xlu0 %v1728, 97
        %v2530 = vpop.permute.xlu0 %2529
        %2531 = vrot.lane.b32.xlu0 %v1731, 97
        %v2532 = vpop.permute.xlu0 %2531
        %2533 = vrot.lane.b32.xlu0 %v1734, 97
        %v2534 = vpop.permute.xlu0 %2533
        %2535 = vrot.lane.b32.xlu0 %v1737, 97
        %v2536 = vpop.permute.xlu0 %2535
        %2537 = vrot.lane.b32.xlu0 %v1740, 97
        %v2538 = vpop.permute.xlu0 %2537
        %2539 = vrot.lane.b32.xlu0 %v1743, 97
        %v2540 = vpop.permute.xlu0 %2539
        %2541 = vrot.lane.b32.xlu0 %v1723, 97
        %v2542 = vpop.permute.xlu0 %2541
        %2543 = vrot.lane.b32.xlu0 %v1726, 97
        %v2544 = vpop.permute.xlu0 %2543
        %2545 = vrot.lane.b32.xlu0 %v1729, 97
        %v2546 = vpop.permute.xlu0 %2545
        %2547 = vrot.lane.b32.xlu0 %v1732, 97
        %v2548 = vpop.permute.xlu0 %2547
        %2549 = vrot.lane.b32.xlu0 %v1735, 97
        %v2550 = vpop.permute.xlu0 %2549
        %2551 = vrot.lane.b32.xlu0 %v1738, 97
        %v2552 = vpop.permute.xlu0 %2551
        %2553 = vrot.lane.b32.xlu0 %v1741, 97
        %v2554 = vpop.permute.xlu0 %2553
        %2555 = vrot.lane.b32.xlu0 %v1744, 97
        %v2556 = vpop.permute.xlu0 %2555
        %2557 = vrot.lane.b32.xlu0 %v1724, 97
        %v2558 = vpop.permute.xlu0 %2557
        %2559 = vrot.lane.b32.xlu0 %v1727, 97
        %v2560 = vpop.permute.xlu0 %2559
        %2561 = vrot.lane.b32.xlu0 %v1730, 97
        %v2562 = vpop.permute.xlu0 %2561
        %2563 = vrot.lane.b32.xlu0 %v1733, 97
        %v2564 = vpop.permute.xlu0 %2563
        %2565 = vrot.lane.b32.xlu0 %v1736, 97
        %v2566 = vpop.permute.xlu0 %2565
        %2567 = vrot.lane.b32.xlu0 %v1739, 97
        %v2568 = vpop.permute.xlu0 %2567
        %2569 = vrot.lane.b32.xlu0 %v1742, 97
        %v2570 = vpop.permute.xlu0 %2569
        %2571 = vrot.lane.b32.xlu0 %v1745, 97
        %v2572 = vpop.permute.xlu0 %2571
        %vm2573 = vcmp.lt.s32.totalorder %v1747, 97
        %v2574 = vsel %vm2573, %v2542, %v2558
        %v2575 = vsel %vm2573, %v2544, %v2560
        %v2576 = vsel %vm2573, %v2546, %v2562
        %v2577 = vsel %vm2573, %v2548, %v2564
        %v2578 = vsel %vm2573, %v2550, %v2566
        %v2579 = vsel %vm2573, %v2552, %v2568
        %v2580 = vsel %vm2573, %v2554, %v2570
        %v2581 = vsel %vm2573, %v2556, %v2572
        %v2582 = vsel %vm2573, %v2526, %v2542
        %v2583 = vsel %vm2573, %v2528, %v2544
        %v2584 = vsel %vm2573, %v2530, %v2546
        %v2585 = vsel %vm2573, %v2532, %v2548
        %v2586 = vsel %vm2573, %v2534, %v2550
        %v2587 = vsel %vm2573, %v2536, %v2552
        %v2588 = vsel %vm2573, %v2538, %v2554
        %v2589 = vsel %vm2573, %v2540, %v2556
        %v2590 = vsel %vm1900, %v2582, 0.0
        %v2591 = vsel %vm1901, %v2574, 0.0
        %v2592 = vsel %vm1900, %v2583, 0.0
        %v2593 = vsel %vm1901, %v2575, 0.0
        %v2594 = vsel %vm1900, %v2584, 0.0
        %v2595 = vsel %vm1901, %v2576, 0.0
        %v2596 = vsel %vm1900, %v2585, 0.0
        %v2597 = vsel %vm1901, %v2577, 0.0
        %v2598 = vsel %vm1900, %v2586, 0.0
        %v2599 = vsel %vm1901, %v2578, 0.0
        %v2600 = vsel %vm1900, %v2587, 0.0
        %v2601 = vsel %vm1901, %v2579, 0.0
        %v2602 = vsel %vm1900, %v2588, 0.0
        %v2603 = vsel %vm1901, %v2580, 0.0
        %v2604 = vsel %vm1900, %v2589, 0.0
        %v2605 = vsel %vm1901, %v2581, 0.0
        %2607 = vset.pattern.permute.xlu0 0
        %2608 = vperm.xlu0 %2607, %v1376
        %v2609 = vpop.permute.xlu0 %2608
        %2612 = vset.pattern.permute.xlu0 0
        %2613 = vperm.xlu0 %2612, %v1381
        %v2614 = vpop.permute.xlu0 %2613
        %2617 = vset.pattern.permute.xlu0 0
        %2618 = vperm.xlu0 %2617, %v1386
        %v2619 = vpop.permute.xlu0 %2618
        %2622 = vset.pattern.permute.xlu0 0
        %2623 = vperm.xlu0 %2622, %v1391
        %v2624 = vpop.permute.xlu0 %2623
        %2627 = vset.pattern.permute.xlu0 0
        %2628 = vperm.xlu0 %2627, %v1396
        %v2629 = vpop.permute.xlu0 %2628
        %2632 = vset.pattern.permute.xlu0 0
        %2633 = vperm.xlu0 %2632, %v1401
        %v2634 = vpop.permute.xlu0 %2633
        %2637 = vset.pattern.permute.xlu0 0
        %2638 = vperm.xlu0 %2637, %v1406
        %v2639 = vpop.permute.xlu0 %2638
        %2642 = vset.pattern.permute.xlu0 0
        %2643 = vperm.xlu0 %2642, %v1411
        %v2644 = vpop.permute.xlu0 %2643
        %v2646 = vmul.f32 %v2590, %v2609
        %v2647 = vmul.f32 %v2591, %v2609
        %v2648 = vmul.f32 %v2592, %v2614
        %v2649 = vmul.f32 %v2593, %v2614
        %v2650 = vmul.f32 %v2594, %v2619
        %v2651 = vmul.f32 %v2595, %v2619
        %v2652 = vmul.f32 %v2596, %v2624
        %v2653 = vmul.f32 %v2597, %v2624
        %v2654 = vmul.f32 %v2598, %v2629
        %v2655 = vmul.f32 %v2599, %v2629
        %v2656 = vmul.f32 %v2600, %v2634
        %v2657 = vmul.f32 %v2601, %v2634
        %v2658 = vmul.f32 %v2602, %v2639
        %v2659 = vmul.f32 %v2603, %v2639
        %v2660 = vmul.f32 %v2604, %v2644
        %v2661 = vmul.f32 %v2605, %v2644
        %v2662 = vadd.f32 %v2509, %v2646
        %v2663 = vadd.f32 %v2510, %v2647
        %v2664 = vadd.f32 %v2511, %v2648
        %v2665 = vadd.f32 %v2512, %v2649
        %v2666 = vadd.f32 %v2513, %v2650
        %v2667 = vadd.f32 %v2514, %v2651
        %v2668 = vadd.f32 %v2515, %v2652
        %v2669 = vadd.f32 %v2516, %v2653
        %v2670 = vadd.f32 %v2517, %v2654
        %v2671 = vadd.f32 %v2518, %v2655
        %v2672 = vadd.f32 %v2519, %v2656
        %v2673 = vadd.f32 %v2520, %v2657
        %v2674 = vadd.f32 %v2521, %v2658
        %v2675 = vadd.f32 %v2522, %v2659
        %v2676 = vadd.f32 %v2523, %v2660
        %v2677 = vadd.f32 %v2524, %v2661
        %2678 = vrot.lane.b32.xlu0 %v1722, 96
        %v2679 = vpop.permute.xlu0 %2678
        %2680 = vrot.lane.b32.xlu0 %v1725, 96
        %v2681 = vpop.permute.xlu0 %2680
        %2682 = vrot.lane.b32.xlu0 %v1728, 96
        %v2683 = vpop.permute.xlu0 %2682
        %2684 = vrot.lane.b32.xlu0 %v1731, 96
        %v2685 = vpop.permute.xlu0 %2684
        %2686 = vrot.lane.b32.xlu0 %v1734, 96
        %v2687 = vpop.permute.xlu0 %2686
        %2688 = vrot.lane.b32.xlu0 %v1737, 96
        %v2689 = vpop.permute.xlu0 %2688
        %2690 = vrot.lane.b32.xlu0 %v1740, 96
        %v2691 = vpop.permute.xlu0 %2690
        %2692 = vrot.lane.b32.xlu0 %v1743, 96
        %v2693 = vpop.permute.xlu0 %2692
        %2694 = vrot.lane.b32.xlu0 %v1723, 96
        %v2695 = vpop.permute.xlu0 %2694
        %2696 = vrot.lane.b32.xlu0 %v1726, 96
        %v2697 = vpop.permute.xlu0 %2696
        %2698 = vrot.lane.b32.xlu0 %v1729, 96
        %v2699 = vpop.permute.xlu0 %2698
        %2700 = vrot.lane.b32.xlu0 %v1732, 96
        %v2701 = vpop.permute.xlu0 %2700
        %2702 = vrot.lane.b32.xlu0 %v1735, 96
        %v2703 = vpop.permute.xlu0 %2702
        %2704 = vrot.lane.b32.xlu0 %v1738, 96
        %v2705 = vpop.permute.xlu0 %2704
        %2706 = vrot.lane.b32.xlu0 %v1741, 96
        %v2707 = vpop.permute.xlu0 %2706
        %2708 = vrot.lane.b32.xlu0 %v1744, 96
        %v2709 = vpop.permute.xlu0 %2708
        %2710 = vrot.lane.b32.xlu0 %v1724, 96
        %v2711 = vpop.permute.xlu0 %2710
        %2712 = vrot.lane.b32.xlu0 %v1727, 96
        %v2713 = vpop.permute.xlu0 %2712
        %2714 = vrot.lane.b32.xlu0 %v1730, 96
        %v2715 = vpop.permute.xlu0 %2714
        %2716 = vrot.lane.b32.xlu0 %v1733, 96
        %v2717 = vpop.permute.xlu0 %2716
        %2718 = vrot.lane.b32.xlu0 %v1736, 96
        %v2719 = vpop.permute.xlu0 %2718
        %2720 = vrot.lane.b32.xlu0 %v1739, 96
        %v2721 = vpop.permute.xlu0 %2720
        %2722 = vrot.lane.b32.xlu0 %v1742, 96
        %v2723 = vpop.permute.xlu0 %2722
        %2724 = vrot.lane.b32.xlu0 %v1745, 96
        %v2725 = vpop.permute.xlu0 %2724
        %vm2726 = vcmp.lt.s32.totalorder %v1747, 96
        %v2727 = vsel %vm2726, %v2695, %v2711
        %v2728 = vsel %vm2726, %v2697, %v2713
        %v2729 = vsel %vm2726, %v2699, %v2715
        %v2730 = vsel %vm2726, %v2701, %v2717
        %v2731 = vsel %vm2726, %v2703, %v2719
        %v2732 = vsel %vm2726, %v2705, %v2721
        %v2733 = vsel %vm2726, %v2707, %v2723
        %v2734 = vsel %vm2726, %v2709, %v2725
        %v2735 = vsel %vm2726, %v2679, %v2695
        %v2736 = vsel %vm2726, %v2681, %v2697
        %v2737 = vsel %vm2726, %v2683, %v2699
        %v2738 = vsel %vm2726, %v2685, %v2701
        %v2739 = vsel %vm2726, %v2687, %v2703
        %v2740 = vsel %vm2726, %v2689, %v2705
        %v2741 = vsel %vm2726, %v2691, %v2707
        %v2742 = vsel %vm2726, %v2693, %v2709
        %2744 = vset.pattern.permute.xlu0 0
        %2745 = vperm.xlu0 %2744, %v1416
        %v2746 = vpop.permute.xlu0 %2745
        %2749 = vset.pattern.permute.xlu0 0
        %2750 = vperm.xlu0 %2749, %v1421
        %v2751 = vpop.permute.xlu0 %2750
        %2754 = vset.pattern.permute.xlu0 0
        %2755 = vperm.xlu0 %2754, %v1426
        %v2756 = vpop.permute.xlu0 %2755
        %2759 = vset.pattern.permute.xlu0 0
        %2760 = vperm.xlu0 %2759, %v1431
        %v2761 = vpop.permute.xlu0 %2760
        %2764 = vset.pattern.permute.xlu0 0
        %2765 = vperm.xlu0 %2764, %v1436
        %v2766 = vpop.permute.xlu0 %2765
        %2769 = vset.pattern.permute.xlu0 0
        %2770 = vperm.xlu0 %2769, %v1441
        %v2771 = vpop.permute.xlu0 %2770
        %2774 = vset.pattern.permute.xlu0 0
        %2775 = vperm.xlu0 %2774, %v1446
        %v2776 = vpop.permute.xlu0 %2775
        %2779 = vset.pattern.permute.xlu0 0
        %2780 = vperm.xlu0 %2779, %v1451
        %v2781 = vpop.permute.xlu0 %2780
        %v2783 = vmul.f32 %v2735, %v2746
        %v2784 = vmul.f32 %v2727, %v2746
        %v2785 = vmul.f32 %v2736, %v2751
        %v2786 = vmul.f32 %v2728, %v2751
        %v2787 = vmul.f32 %v2737, %v2756
        %v2788 = vmul.f32 %v2729, %v2756
        %v2789 = vmul.f32 %v2738, %v2761
        %v2790 = vmul.f32 %v2730, %v2761
        %v2791 = vmul.f32 %v2739, %v2766
        %v2792 = vmul.f32 %v2731, %v2766
        %v2793 = vmul.f32 %v2740, %v2771
        %v2794 = vmul.f32 %v2732, %v2771
        %v2795 = vmul.f32 %v2741, %v2776
        %v2796 = vmul.f32 %v2733, %v2776
        %v2797 = vmul.f32 %v2742, %v2781
        %v2798 = vmul.f32 %v2734, %v2781
        %v2799 = vadd.f32 %v2662, %v2783
        %v2800 = vadd.f32 %v2663, %v2784
        %v2801 = vadd.f32 %v2664, %v2785
        %v2802 = vadd.f32 %v2665, %v2786
        %v2803 = vadd.f32 %v2666, %v2787
        %v2804 = vadd.f32 %v2667, %v2788
        %v2805 = vadd.f32 %v2668, %v2789
        %v2806 = vadd.f32 %v2669, %v2790
        %v2807 = vadd.f32 %v2670, %v2791
        %v2808 = vadd.f32 %v2671, %v2792
        %v2809 = vadd.f32 %v2672, %v2793
        %v2810 = vadd.f32 %v2673, %v2794
        %v2811 = vadd.f32 %v2674, %v2795
        %v2812 = vadd.f32 %v2675, %v2796
        %v2813 = vadd.f32 %v2676, %v2797
        %v2814 = vadd.f32 %v2677, %v2798
        %2815 = vrot.lane.b32.xlu0 %v1722, 95
        %v2816 = vpop.permute.xlu0 %2815
        %2817 = vrot.lane.b32.xlu0 %v1725, 95
        %v2818 = vpop.permute.xlu0 %2817
        %2819 = vrot.lane.b32.xlu0 %v1728, 95
        %v2820 = vpop.permute.xlu0 %2819
        %2821 = vrot.lane.b32.xlu0 %v1731, 95
        %v2822 = vpop.permute.xlu0 %2821
        %2823 = vrot.lane.b32.xlu0 %v1734, 95
        %v2824 = vpop.permute.xlu0 %2823
        %2825 = vrot.lane.b32.xlu0 %v1737, 95
        %v2826 = vpop.permute.xlu0 %2825
        %2827 = vrot.lane.b32.xlu0 %v1740, 95
        %v2828 = vpop.permute.xlu0 %2827
        %2829 = vrot.lane.b32.xlu0 %v1743, 95
        %v2830 = vpop.permute.xlu0 %2829
        %2831 = vrot.lane.b32.xlu0 %v1723, 95
        %v2832 = vpop.permute.xlu0 %2831
        %2833 = vrot.lane.b32.xlu0 %v1726, 95
        %v2834 = vpop.permute.xlu0 %2833
        %2835 = vrot.lane.b32.xlu0 %v1729, 95
        %v2836 = vpop.permute.xlu0 %2835
        %2837 = vrot.lane.b32.xlu0 %v1732, 95
        %v2838 = vpop.permute.xlu0 %2837
        %2839 = vrot.lane.b32.xlu0 %v1735, 95
        %v2840 = vpop.permute.xlu0 %2839
        %2841 = vrot.lane.b32.xlu0 %v1738, 95
        %v2842 = vpop.permute.xlu0 %2841
        %2843 = vrot.lane.b32.xlu0 %v1741, 95
        %v2844 = vpop.permute.xlu0 %2843
        %2845 = vrot.lane.b32.xlu0 %v1744, 95
        %v2846 = vpop.permute.xlu0 %2845
        %2847 = vrot.lane.b32.xlu0 %v1724, 95
        %v2848 = vpop.permute.xlu0 %2847
        %2849 = vrot.lane.b32.xlu0 %v1727, 95
        %v2850 = vpop.permute.xlu0 %2849
        %2851 = vrot.lane.b32.xlu0 %v1730, 95
        %v2852 = vpop.permute.xlu0 %2851
        %2853 = vrot.lane.b32.xlu0 %v1733, 95
        %v2854 = vpop.permute.xlu0 %2853
        %2855 = vrot.lane.b32.xlu0 %v1736, 95
        %v2856 = vpop.permute.xlu0 %2855
        %2857 = vrot.lane.b32.xlu0 %v1739, 95
        %v2858 = vpop.permute.xlu0 %2857
        %2859 = vrot.lane.b32.xlu0 %v1742, 95
        %v2860 = vpop.permute.xlu0 %2859
        %2861 = vrot.lane.b32.xlu0 %v1745, 95
        %v2862 = vpop.permute.xlu0 %2861
        %vm2863 = vcmp.lt.s32.totalorder %v1747, 95
        %v2864 = vsel %vm2863, %v2832, %v2848
        %v2865 = vsel %vm2863, %v2834, %v2850
        %v2866 = vsel %vm2863, %v2836, %v2852
        %v2867 = vsel %vm2863, %v2838, %v2854
        %v2868 = vsel %vm2863, %v2840, %v2856
        %v2869 = vsel %vm2863, %v2842, %v2858
        %v2870 = vsel %vm2863, %v2844, %v2860
        %v2871 = vsel %vm2863, %v2846, %v2862
        %v2872 = vsel %vm2863, %v2816, %v2832
        %v2873 = vsel %vm2863, %v2818, %v2834
        %v2874 = vsel %vm2863, %v2820, %v2836
        %v2875 = vsel %vm2863, %v2822, %v2838
        %v2876 = vsel %vm2863, %v2824, %v2840
        %v2877 = vsel %vm2863, %v2826, %v2842
        %v2878 = vsel %vm2863, %v2828, %v2844
        %v2879 = vsel %vm2863, %v2830, %v2846
        %v2880 = vsel %vm2129, %v2872, 0.0
        %v2881 = vsel %vm2130, %v2864, 0.0
        %v2882 = vsel %vm2129, %v2873, 0.0
        %v2883 = vsel %vm2130, %v2865, 0.0
        %v2884 = vsel %vm2129, %v2874, 0.0
        %v2885 = vsel %vm2130, %v2866, 0.0
        %v2886 = vsel %vm2129, %v2875, 0.0
        %v2887 = vsel %vm2130, %v2867, 0.0
        %v2888 = vsel %vm2129, %v2876, 0.0
        %v2889 = vsel %vm2130, %v2868, 0.0
        %v2890 = vsel %vm2129, %v2877, 0.0
        %v2891 = vsel %vm2130, %v2869, 0.0
        %v2892 = vsel %vm2129, %v2878, 0.0
        %v2893 = vsel %vm2130, %v2870, 0.0
        %v2894 = vsel %vm2129, %v2879, 0.0
        %v2895 = vsel %vm2130, %v2871, 0.0
        %2897 = vset.pattern.permute.xlu0 0
        %2898 = vperm.xlu0 %2897, %v1456
        %v2899 = vpop.permute.xlu0 %2898
        %2902 = vset.pattern.permute.xlu0 0
        %2903 = vperm.xlu0 %2902, %v1461
        %v2904 = vpop.permute.xlu0 %2903
        %2907 = vset.pattern.permute.xlu0 0
        %2908 = vperm.xlu0 %2907, %v1466
        %v2909 = vpop.permute.xlu0 %2908
        %2912 = vset.pattern.permute.xlu0 0
        %2913 = vperm.xlu0 %2912, %v1471
        %v2914 = vpop.permute.xlu0 %2913
        %2917 = vset.pattern.permute.xlu0 0
        %2918 = vperm.xlu0 %2917, %v1476
        %v2919 = vpop.permute.xlu0 %2918
        %2922 = vset.pattern.permute.xlu0 0
        %2923 = vperm.xlu0 %2922, %v1481
        %v2924 = vpop.permute.xlu0 %2923
        %2927 = vset.pattern.permute.xlu0 0
        %2928 = vperm.xlu0 %2927, %v1486
        %v2929 = vpop.permute.xlu0 %2928
        %2932 = vset.pattern.permute.xlu0 0
        %2933 = vperm.xlu0 %2932, %v1491
        %v2934 = vpop.permute.xlu0 %2933
        %v2936 = vmul.f32 %v2880, %v2899
        %v2937 = vmul.f32 %v2881, %v2899
        %v2938 = vmul.f32 %v2882, %v2904
        %v2939 = vmul.f32 %v2883, %v2904
        %v2940 = vmul.f32 %v2884, %v2909
        %v2941 = vmul.f32 %v2885, %v2909
        %v2942 = vmul.f32 %v2886, %v2914
        %v2943 = vmul.f32 %v2887, %v2914
        %v2944 = vmul.f32 %v2888, %v2919
        %v2945 = vmul.f32 %v2889, %v2919
        %v2946 = vmul.f32 %v2890, %v2924
        %v2947 = vmul.f32 %v2891, %v2924
        %v2948 = vmul.f32 %v2892, %v2929
        %v2949 = vmul.f32 %v2893, %v2929
        %v2950 = vmul.f32 %v2894, %v2934
        %v2951 = vmul.f32 %v2895, %v2934
        %v2952 = vadd.f32 %v2799, %v2936
        %v2953 = vadd.f32 %v2800, %v2937
        %v2954 = vadd.f32 %v2801, %v2938
        %v2955 = vadd.f32 %v2802, %v2939
        %v2956 = vadd.f32 %v2803, %v2940
        %v2957 = vadd.f32 %v2804, %v2941
        %v2958 = vadd.f32 %v2805, %v2942
        %v2959 = vadd.f32 %v2806, %v2943
        %v2960 = vadd.f32 %v2807, %v2944
        %v2961 = vadd.f32 %v2808, %v2945
        %v2962 = vadd.f32 %v2809, %v2946
        %v2963 = vadd.f32 %v2810, %v2947
        %v2964 = vadd.f32 %v2811, %v2948
        %v2965 = vadd.f32 %v2812, %v2949
        %v2966 = vadd.f32 %v2813, %v2950
        %v2967 = vadd.f32 %v2814, %v2951
        %v2968 = vmul.f32 %v2952, 0.1
        %v2969 = vmul.f32 %v2953, 0.1
        %v2970 = vmul.f32 %v2954, 0.1
        %v2971 = vmul.f32 %v2955, 0.1
        %v2972 = vmul.f32 %v2956, 0.1
        %v2973 = vmul.f32 %v2957, 0.1
        %v2974 = vmul.f32 %v2958, 0.1
        %v2975 = vmul.f32 %v2959, 0.1
        %v2976 = vmul.f32 %v2960, 0.1
        %v2977 = vmul.f32 %v2961, 0.1
        %v2978 = vmul.f32 %v2962, 0.1
        %v2979 = vmul.f32 %v2963, 0.1
        %v2980 = vmul.f32 %v2964, 0.1
        %v2981 = vmul.f32 %v2965, 0.1
        %v2982 = vmul.f32 %v2966, 0.1
        %v2983 = vmul.f32 %v2967, 0.1
        %v2984 = vmax.f32 %v2952, %v2968
        %v2985 = vmax.f32 %v2953, %v2969
        %v2986 = vmax.f32 %v2954, %v2970
        %v2987 = vmax.f32 %v2955, %v2971
        %v2988 = vmax.f32 %v2956, %v2972
        %v2989 = vmax.f32 %v2957, %v2973
        %v2990 = vmax.f32 %v2958, %v2974
        %v2991 = vmax.f32 %v2959, %v2975
        %v2992 = vmax.f32 %v2960, %v2976
        %v2993 = vmax.f32 %v2961, %v2977
        %v2994 = vmax.f32 %v2962, %v2978
        %v2995 = vmax.f32 %v2963, %v2979
        %v2996 = vmax.f32 %v2964, %v2980
        %v2997 = vmax.f32 %v2965, %v2981
        %v2998 = vmax.f32 %v2966, %v2982
        %v2999 = vmax.f32 %v2967, %v2983
        %v3000 = vld [vmem:[%s6] sm:$0xff]
        %v3001 = vld [vmem:[%s6 + $0x8] sm:$0xff]
        %v3002 = vld [vmem:[%s6 + $0x10] sm:$0xff]
        %v3003 = vld [vmem:[%s6 + $0x18] sm:$0xff]
        %v3004 = vld [vmem:[%s6 + $0x20] sm:$0xff]
        %v3005 = vld [vmem:[%s6 + $0x28] sm:$0xff]
        %v3006 = vld [vmem:[%s6 + $0x30] sm:$0xff]
        %v3007 = vld [vmem:[%s6 + $0x38] sm:$0xff]
        %3009 = vset.pattern.permute.xlu0 0
        %3010 = vperm.xlu0 %3009, %v3000
        %v3011 = vpop.permute.xlu0 %3010
        %3014 = vset.pattern.permute.xlu0 0
        %3015 = vperm.xlu0 %3014, %v3001
        %v3016 = vpop.permute.xlu0 %3015
        %3019 = vset.pattern.permute.xlu0 0
        %3020 = vperm.xlu0 %3019, %v3002
        %v3021 = vpop.permute.xlu0 %3020
        %3024 = vset.pattern.permute.xlu0 0
        %3025 = vperm.xlu0 %3024, %v3003
        %v3026 = vpop.permute.xlu0 %3025
        %3029 = vset.pattern.permute.xlu0 0
        %3030 = vperm.xlu0 %3029, %v3004
        %v3031 = vpop.permute.xlu0 %3030
        %3034 = vset.pattern.permute.xlu0 0
        %3035 = vperm.xlu0 %3034, %v3005
        %v3036 = vpop.permute.xlu0 %3035
        %3039 = vset.pattern.permute.xlu0 0
        %3040 = vperm.xlu0 %3039, %v3006
        %v3041 = vpop.permute.xlu0 %3040
        %3044 = vset.pattern.permute.xlu0 0
        %3045 = vperm.xlu0 %3044, %v3007
        %v3046 = vpop.permute.xlu0 %3045
        %v3048 = vmul.f32 %v563, %v3011
        %v3049 = vmul.f32 %v564, %v3011
        %v3050 = vmul.f32 %v565, %v3016
        %v3051 = vmul.f32 %v566, %v3016
        %v3052 = vmul.f32 %v567, %v3021
        %v3053 = vmul.f32 %v568, %v3021
        %v3054 = vmul.f32 %v569, %v3026
        %v3055 = vmul.f32 %v570, %v3026
        %v3056 = vmul.f32 %v571, %v3031
        %v3057 = vmul.f32 %v572, %v3031
        %v3058 = vmul.f32 %v573, %v3036
        %v3059 = vmul.f32 %v574, %v3036
        %v3060 = vmul.f32 %v575, %v3041
        %v3061 = vmul.f32 %v576, %v3041
        %v3062 = vmul.f32 %v577, %v3046
        %v3063 = vmul.f32 %v578, %v3046
        %v3064 = vadd.f32 %v3048, %v3050
        %v3065 = vadd.f32 %v3064, %v3052
        %v3066 = vadd.f32 %v3065, %v3054
        %v3067 = vadd.f32 %v3066, %v3056
        %v3068 = vadd.f32 %v3067, %v3058
        %v3069 = vadd.f32 %v3068, %v3060
        %v3070 = vadd.f32 %v3069, %v3062
        %v3071 = vrot.slane %v3070, 4
        %v3072 = vadd.f32 %v3070, %v3071
        %v3073 = vrot.slane %v3072, 2
        %v3074 = vadd.f32 %v3072, %v3073
        %v3075 = vrot.slane %v3074, 1
        %v3076 = vadd.f32 %v3074, %v3075
        %v3077 = vadd.f32 %v3049, %v3051
        %v3078 = vadd.f32 %v3077, %v3053
        %v3079 = vadd.f32 %v3078, %v3055
        %v3080 = vadd.f32 %v3079, %v3057
        %v3081 = vadd.f32 %v3080, %v3059
        %v3082 = vadd.f32 %v3081, %v3061
        %v3083 = vadd.f32 %v3082, %v3063
        %v3084 = vrot.slane %v3083, 4
        %v3085 = vadd.f32 %v3083, %v3084
        %v3086 = vrot.slane %v3085, 2
        %v3087 = vadd.f32 %v3085, %v3086
        %v3088 = vrot.slane %v3087, 1
        %v3089 = vadd.f32 %v3087, %v3088
        %s3090 = sld [smem:[#allocation3]]
        %v3091 = vstv %s3090
        %v3092 = vadd.f32 %v3076, %v3091
        %v3093 = vadd.f32 %v3089, %v3091
        %v3094 = vxor.u32 %v3092, 2147483648
        %v3095 = vxor.u32 %v3093, 2147483648
        %v3096 = vmul.f32 %v3094, 1.442695
        %v3097 = vpow.pop %v3096
        %v3098 = vmul.f32 %v3095, 1.442695
        %v3099 = vpow.pop %v3098
        %v3100 = vadd.f32 %v3097, 1.0
        %v3101 = vadd.f32 %v3099, 1.0
        %v3102 = vrcp.pop %v3100
        %v3103 = vmul.f32 1.0, %v3102
        %v3104 = vrcp.pop %v3101
        %v3105 = vmul.f32 1.0, %v3104
        %v3106 = vmul.f32 %v2984, %v3103
        %v3107 = vmul.f32 %v2985, %v3105
        %v3108 = vmul.f32 %v2986, %v3103
        %v3109 = vmul.f32 %v2987, %v3105
        %v3110 = vmul.f32 %v2988, %v3103
        %v3111 = vmul.f32 %v2989, %v3105
        %v3112 = vmul.f32 %v2990, %v3103
        %v3113 = vmul.f32 %v2991, %v3105
        %v3114 = vmul.f32 %v2992, %v3103
        %v3115 = vmul.f32 %v2993, %v3105
        %v3116 = vmul.f32 %v2994, %v3103
        %v3117 = vmul.f32 %v2995, %v3105
        %v3118 = vmul.f32 %v2996, %v3103
        %v3119 = vmul.f32 %v2997, %v3105
        %v3120 = vmul.f32 %v2998, %v3103
        %v3121 = vmul.f32 %v2999, %v3105
        %v3122 = vadd.f32 %v3106, %v563
        %v3123 = vadd.f32 %v3107, %v564
        %v3124 = vadd.f32 %v3108, %v565
        %v3125 = vadd.f32 %v3109, %v566
        %v3126 = vadd.f32 %v3110, %v567
        %v3127 = vadd.f32 %v3111, %v568
        %v3128 = vadd.f32 %v3112, %v569
        %v3129 = vadd.f32 %v3113, %v570
        %v3130 = vadd.f32 %v3114, %v571
        %v3131 = vadd.f32 %v3115, %v572
        %v3132 = vadd.f32 %v3116, %v573
        %v3133 = vadd.f32 %v3117, %v574
        %v3134 = vadd.f32 %v3118, %v575
        %v3135 = vadd.f32 %v3119, %v576
        %v3136 = vadd.f32 %v3120, %v577
        %v3137 = vadd.f32 %v3121, %v578
        %3138 = vst [vmem:[%s537] sm:$0xff] %v3122
        %3139 = vst [vmem:[%s537 + $0x8] sm:$0xff] %v3123
        %3140 = vst [vmem:[%s537 + $0x10] sm:$0xff] %v3124
        %3141 = vst [vmem:[%s537 + $0x18] sm:$0xff] %v3125
        %3142 = vst [vmem:[%s537 + $0x20] sm:$0xff] %v3126
        %3143 = vst [vmem:[%s537 + $0x28] sm:$0xff] %v3127
        %3144 = vst [vmem:[%s537 + $0x30] sm:$0xff] %v3128
        %3145 = vst [vmem:[%s537 + $0x38] sm:$0xff] %v3129
        %3146 = vst [vmem:[%s537 + $0x40] sm:$0xff] %v3130
        %3147 = vst [vmem:[%s537 + $0x48] sm:$0xff] %v3131
        %3148 = vst [vmem:[%s537 + $0x50] sm:$0xff] %v3132
        %3149 = vst [vmem:[%s537 + $0x58] sm:$0xff] %v3133
        %3150 = vst [vmem:[%s537 + $0x60] sm:$0xff] %v3134
        %3151 = vst [vmem:[%s537 + $0x68] sm:$0xff] %v3135
        %3152 = vst [vmem:[%s537 + $0x70] sm:$0xff] %v3136
        %3153 = vst [vmem:[%s537 + $0x78] sm:$0xff] %v3137
        %s3154 = sand.u32 %s255, 1
        %s3155 = scalar_lea.sflag [#allocation7], %s3154
        %s3156 = sand.u32 %s255, 1
        %s3157 = smul.addr %s3156, 128
        %s3158 = scalar_lea.vmem [#allocation6], %s3157
        // Predicated region
        $region129: #{tpu_custom_call.1} parent=119 // pred_check
          %p3159 = pneg %p265
        $region130: #{tpu_custom_call.1} parent=119 // pred_check_branch
          %3161 = sbr.rel (%p3159) target = $region132
        $region131: #{tpu_custom_call.1} parent=119 // pred_region
          %s3162 = smul.u32 2, %s28
          %s3164 = ssub.s32 2048, 2048
          %3165 = vsyncadd %s3155, %s3164
          %s3166 = smul.addr %s27, 16
          %s3167 = sadd.s32 %s3162, %s3166
          %s3168 = smul.addr %s3167, 128
          %s3169 = scalar_lea.hbm %s8, %s3168
          %s3170 = sshll.u32 %s3158, 4
          %s3171 = int_to_ptr.vmem [resolvable:$true] %s3170
          %3176 = dma.vmem_to_hbm [thread:$0]  %s3171, 2048, %s3169, %s3155, 256, 256, 16
        $region132: #{tpu_custom_call.1} parent=119 // pred_fallthru
          _
      $region120: #{tpu_custom_call.1} parent=5 // pred_fallthru
        _
      %p3177 = scmp.le.s32.totalorder 2, %s18
      // Predicated region
      $region133: #{tpu_custom_call.1} parent=5 // pred_check
        %p3178 = pneg %p3177
      $region134: #{tpu_custom_call.1} parent=5 // pred_check_branch
        %3180 = sbr.rel (%p3178) target = $region136
      $region135: #{tpu_custom_call.1} parent=5 // pred_region
        %s3181 = ssub.s32 %s18, 2
        // Predicated region
        $region137: #{tpu_custom_call.1} parent=135 // pred_check
          %p3182 = pneg %p271
        $region138: #{tpu_custom_call.1} parent=135 // pred_check_branch
          %3184 = sbr.rel (%p3182) target = $region140
        $region139: #{tpu_custom_call.1} parent=135 // pred_region
          %s3185 = sand.u32 %s256, 1
          %s3186 = scalar_lea.sflag [#allocation7], %s3185
          %s3187 = sand.u32 %s256, 1
          %s3188 = smul.addr %s3187, 128
          %s3189 = scalar_lea.vmem [#allocation6], %s3188
          %3190 = dma.done %s3186, 2048
        $region140: #{tpu_custom_call.1} parent=135 // pred_fallthru
          _
      $region136: #{tpu_custom_call.1} parent=5 // pred_fallthru
        _
    $region6: #{tpu_custom_call.1} parent=1 // loop_footer
      %s22 = sadd.s32 1, %s18
    $region7: #{tpu_custom_call.1} parent=1 // loop_footer_branch
      %17 = sbr.rel target = $region3
    $region8: #{tpu_custom_call.1} parent=1 // loop_exit
      _
    %3191 = vsyncpa [#allocation7], 1
    %s3192 = scalar_lea.sflag [#allocation7], 1
    %3193 = vsyncpa %s3192, 1

</llo_original>
